<compile_context>
chip_gen: v5e
topology: v5e:2x2
jax: 0.10.0
libtpu: 0.0.40
codegen_flags: <defaults>
</compile_context>

<pallas_src>
import math

import jax
import jax.numpy as jnp
import numpy as np
from jax.experimental import pallas as pl
from jax.experimental.pallas import tpu as pltpu


def _make_diffusion_kernel(T, C, N):
    inv_count = 1.0 / float(C * N)

    def kernel(sqrt_ab_ref, sqrt_omab_ref,      # SMEM (T,), (T,)
               w_ref, b_ref, temb_ref,          # SMEM (C,C), (C,), (T,C)
               x0_ref, noise_ref,               # VMEM (C,N), (T,C,N)
               loss_ref):                       # VMEM out (T, 8, 128)
        x0 = x0_ref[...]                        # (C, N), lane-dense

        # Unrolled over the T timesteps (reference `for t in t_list` loop).
        for t in range(T):
            a = sqrt_ab_ref[t]                  # sqrt(alphas_bar[t])
            b = sqrt_omab_ref[t]                # sqrt(1 - alphas_bar[t])
            noise_t = noise_ref[t]              # (C, N)

            # q-sample: x_t = a * x_0 + b * noise     (elementwise, VPU)
            x_t = a * x0 + b * noise_t

            # Surrogate model(x_t, t): 1x1 conv as a 4x4 unrolled channel mix on
            # the VPU (scalars from SMEM) + bias + time embedding, fused with
            # F.mse_loss(model(x_t, t), noise, reduction='mean').
            sq_acc = None
            for c_out in range(C):
                acc = w_ref[0, c_out] * x_t[0:1, :]
                for c_in in range(1, C):
                    acc = acc + w_ref[c_in, c_out] * x_t[c_in:c_in + 1, :]
                acc = acc + (b_ref[c_out] + temb_ref[t, c_out])
                d = acc - noise_t[c_out:c_out + 1, :]
                sq = d * d
                sq_acc = sq if sq_acc is None else sq_acc + sq
            mse = jnp.sum(sq_acc) * inv_count

            # One full lane-dense (8,128) tile per timestep (unmasked stores).
            loss_ref[t] = jnp.full((8, 128), mse, dtype=loss_ref.dtype)

    return kernel


def gaussian_diffusion_logger(x_0_nchw, *, beta_1=1e-4, beta_T=0.02, T=8, seed=0):
    """Returns (t_list, loss_list) mirroring GaussianDiffusionLogger.forward."""
    B, C, H, W = x_0_nchw.shape
    N = B * H * W

    # Buffers computed in double precision (like the torch .double() buffers),
    # then used as float32 (matching extract(...).float()).
    betas = np.linspace(beta_1, beta_T, T, dtype=np.float64)
    alphas = 1.0 - betas
    alphas_bar = np.cumprod(alphas)
    sqrt_ab = jnp.asarray(np.sqrt(alphas_bar), dtype=jnp.float32)           # (T,)
    sqrt_omab = jnp.asarray(np.sqrt(1.0 - alphas_bar), dtype=jnp.float32)   # (T,)

    key = jax.random.PRNGKey(seed)
    k_noise, k_w, k_b, k_temb = jax.random.split(key, 4)

    # NCHW -> channels-first flattened (C, N): the large dim N goes on lanes.
    x0_cn = jnp.transpose(x_0_nchw, (1, 0, 2, 3)).reshape(C, N).astype(jnp.float32)

    # torch.randn_like(x_0) drawn once per timestep (pre-generated iid normal).
    noise = jax.random.normal(k_noise, (T, C, N), dtype=jnp.float32)

    # Deterministic surrogate-model parameters (small -> SMEM scalars).
    w = jax.random.normal(k_w, (C, C), dtype=jnp.float32) / math.sqrt(C)    # 1x1 conv weight
    bias = jax.random.normal(k_b, (C,), dtype=jnp.float32) * 0.01           # conv bias
    temb = jax.random.normal(k_temb, (T, C), dtype=jnp.float32) * 0.01      # time embedding

    smem = pltpu.MemorySpace.SMEM
    vmem = pltpu.MemorySpace.VMEM

    out = pl.pallas_call(
        _make_diffusion_kernel(T, C, N),
        out_shape=jax.ShapeDtypeStruct((T, 8, 128), jnp.float32),
        in_specs=[
            pl.BlockSpec(memory_space=smem),   # sqrt_alphas_bar            (T,)
            pl.BlockSpec(memory_space=smem),   # sqrt_one_minus_alphas_bar  (T,)
            pl.BlockSpec(memory_space=smem),   # w                          (C, C)
            pl.BlockSpec(memory_space=smem),   # bias                       (C,)
            pl.BlockSpec(memory_space=smem),   # temb                       (T, C)
            pl.BlockSpec(memory_space=vmem),   # x0                         (C, N)
            pl.BlockSpec(memory_space=vmem),   # noise                      (T, C, N)
        ],
        out_specs=pl.BlockSpec(memory_space=vmem),
    )(sqrt_ab, sqrt_omab, w, bias, temb, x0_cn, noise)

    t_list = np.arange(T, dtype=np.int64)      # torch.linspace(0, T-1, T, int64)
    loss_list = out[:, 0, 0]                   # one scalar loss per timestep
    return t_list, loss_list


if __name__ == "__main__":
    key = jax.random.PRNGKey(0)
    B, C, H, W = 2, 4, 16, 16
    T = 8
    x_0 = jax.random.normal(key, (B, C, H, W), dtype=jnp.float32)

    t_list, loss_list = gaussian_diffusion_logger(x_0, beta_1=1e-4, beta_T=0.02, T=T)
    loss_list = jax.block_until_ready(loss_list)

    assert t_list.shape == (T,)
    assert loss_list.shape == (T,)
    assert bool(jnp.all(jnp.isfinite(loss_list)))
    print("KERNEL_OK")
</pallas_src>

<mosaic_0001>
module attributes {stable_mosaic.version = 11 : i64} {
  func.func @kernel(%arg0: memref<8xf32, #tpu.memory_space<smem>>, %arg1: memref<8xf32, #tpu.memory_space<smem>>, %arg2: memref<4x4xf32, #tpu.memory_space<smem>>, %arg3: memref<4xf32, #tpu.memory_space<smem>>, %arg4: memref<8x4xf32, #tpu.memory_space<smem>>, %arg5: memref<4x512xf32, #tpu.memory_space<vmem>>, %arg6: memref<8x4x512xf32, #tpu.memory_space<vmem>>, %arg7: memref<8x8x128xf32, #tpu.memory_space<vmem>>) attributes {dimension_semantics = [], scalar_prefetch = 0 : i64, scratch_operands = 0 : i64, tpu.core_type = #tpu.core_type<tc>} {
    %c0 = arith.constant 0 : index
    %c0_0 = arith.constant 0 : index
    %0 = vector.load %arg5[%c0, %c0_0] : memref<4x512xf32, #tpu.memory_space<vmem>>, vector<4x512xf32>
    %c0_1 = arith.constant 0 : index
    %1 = memref.load %arg0[%c0_1] : memref<8xf32, #tpu.memory_space<smem>>
    %c0_2 = arith.constant 0 : index
    %2 = memref.load %arg1[%c0_2] : memref<8xf32, #tpu.memory_space<smem>>
    %c0_3 = arith.constant 0 : index
    %c0_4 = arith.constant 0 : index
    %c0_5 = arith.constant 0 : index
    %3 = vector.load %arg6[%c0_3, %c0_4, %c0_5] : memref<8x4x512xf32, #tpu.memory_space<vmem>>, vector<1x4x512xf32>
    %4 = vector.shape_cast %3 : vector<1x4x512xf32> to vector<4x512xf32>
    %5 = vector.broadcast %1 : f32 to vector<4x512xf32>
    %6 = arith.mulf %5, %0 : vector<4x512xf32>
    %7 = vector.broadcast %2 : f32 to vector<4x512xf32>
    %8 = arith.mulf %7, %4 : vector<4x512xf32>
    %9 = arith.addf %6, %8 : vector<4x512xf32>
    %c0_6 = arith.constant 0 : index
    %c0_7 = arith.constant 0 : index
    %10 = memref.load %arg2[%c0_6, %c0_7] : memref<4x4xf32, #tpu.memory_space<smem>>
    %11 = vector.extract_strided_slice %9 {offsets = [0, 0], sizes = [1, 512], strides = [1, 1]} : vector<4x512xf32> to vector<1x512xf32>
    %12 = vector.broadcast %10 : f32 to vector<1x512xf32>
    %13 = arith.mulf %12, %11 : vector<1x512xf32>
    %c1 = arith.constant 1 : index
    %c0_8 = arith.constant 0 : index
    %14 = memref.load %arg2[%c1, %c0_8] : memref<4x4xf32, #tpu.memory_space<smem>>
    %15 = vector.extract_strided_slice %9 {offsets = [1, 0], sizes = [1, 512], strides = [1, 1]} : vector<4x512xf32> to vector<1x512xf32>
    %16 = vector.broadcast %14 : f32 to vector<1x512xf32>
    %17 = arith.mulf %16, %15 : vector<1x512xf32>
    %18 = arith.addf %13, %17 : vector<1x512xf32>
    %c2 = arith.constant 2 : index
    %c0_9 = arith.constant 0 : index
    %19 = memref.load %arg2[%c2, %c0_9] : memref<4x4xf32, #tpu.memory_space<smem>>
    %20 = vector.extract_strided_slice %9 {offsets = [2, 0], sizes = [1, 512], strides = [1, 1]} : vector<4x512xf32> to vector<1x512xf32>
    %21 = vector.broadcast %19 : f32 to vector<1x512xf32>
    %22 = arith.mulf %21, %20 : vector<1x512xf32>
    %23 = arith.addf %18, %22 : vector<1x512xf32>
    %c3 = arith.constant 3 : index
    %c0_10 = arith.constant 0 : index
    %24 = memref.load %arg2[%c3, %c0_10] : memref<4x4xf32, #tpu.memory_space<smem>>
    %25 = vector.extract_strided_slice %9 {offsets = [3, 0], sizes = [1, 512], strides = [1, 1]} : vector<4x512xf32> to vector<1x512xf32>
    %26 = vector.broadcast %24 : f32 to vector<1x512xf32>
    %27 = arith.mulf %26, %25 : vector<1x512xf32>
    %28 = arith.addf %23, %27 : vector<1x512xf32>
    %c0_11 = arith.constant 0 : index
    %29 = memref.load %arg3[%c0_11] : memref<4xf32, #tpu.memory_space<smem>>
    %c0_12 = arith.constant 0 : index
    %c0_13 = arith.constant 0 : index
    %30 = memref.load %arg4[%c0_12, %c0_13] : memref<8x4xf32, #tpu.memory_space<smem>>
    %31 = arith.addf %29, %30 : f32
    %32 = vector.broadcast %31 : f32 to vector<1x512xf32>
    %33 = arith.addf %28, %32 : vector<1x512xf32>
    %34 = vector.extract_strided_slice %4 {offsets = [0, 0], sizes = [1, 512], strides = [1, 1]} : vector<4x512xf32> to vector<1x512xf32>
    %35 = arith.subf %33, %34 : vector<1x512xf32>
    %36 = arith.mulf %35, %35 : vector<1x512xf32>
    %c0_14 = arith.constant 0 : index
    %c1_15 = arith.constant 1 : index
    %37 = memref.load %arg2[%c0_14, %c1_15] : memref<4x4xf32, #tpu.memory_space<smem>>
    %38 = vector.extract_strided_slice %9 {offsets = [0, 0], sizes = [1, 512], strides = [1, 1]} : vector<4x512xf32> to vector<1x512xf32>
    %39 = vector.broadcast %37 : f32 to vector<1x512xf32>
    %40 = arith.mulf %39, %38 : vector<1x512xf32>
    %c1_16 = arith.constant 1 : index
    %c1_17 = arith.constant 1 : index
    %41 = memref.load %arg2[%c1_16, %c1_17] : memref<4x4xf32, #tpu.memory_space<smem>>
    %42 = vector.extract_strided_slice %9 {offsets = [1, 0], sizes = [1, 512], strides = [1, 1]} : vector<4x512xf32> to vector<1x512xf32>
    %43 = vector.broadcast %41 : f32 to vector<1x512xf32>
    %44 = arith.mulf %43, %42 : vector<1x512xf32>
    %45 = arith.addf %40, %44 : vector<1x512xf32>
    %c2_18 = arith.constant 2 : index
    %c1_19 = arith.constant 1 : index
    %46 = memref.load %arg2[%c2_18, %c1_19] : memref<4x4xf32, #tpu.memory_space<smem>>
    %47 = vector.extract_strided_slice %9 {offsets = [2, 0], sizes = [1, 512], strides = [1, 1]} : vector<4x512xf32> to vector<1x512xf32>
    %48 = vector.broadcast %46 : f32 to vector<1x512xf32>
    %49 = arith.mulf %48, %47 : vector<1x512xf32>
    %50 = arith.addf %45, %49 : vector<1x512xf32>
    %c3_20 = arith.constant 3 : index
    %c1_21 = arith.constant 1 : index
    %51 = memref.load %arg2[%c3_20, %c1_21] : memref<4x4xf32, #tpu.memory_space<smem>>
    %52 = vector.extract_strided_slice %9 {offsets = [3, 0], sizes = [1, 512], strides = [1, 1]} : vector<4x512xf32> to vector<1x512xf32>
    %53 = vector.broadcast %51 : f32 to vector<1x512xf32>
    %54 = arith.mulf %53, %52 : vector<1x512xf32>
    %55 = arith.addf %50, %54 : vector<1x512xf32>
    %c1_22 = arith.constant 1 : index
    %56 = memref.load %arg3[%c1_22] : memref<4xf32, #tpu.memory_space<smem>>
    %c0_23 = arith.constant 0 : index
    %c1_24 = arith.constant 1 : index
    %57 = memref.load %arg4[%c0_23, %c1_24] : memref<8x4xf32, #tpu.memory_space<smem>>
    %58 = arith.addf %56, %57 : f32
    %59 = vector.broadcast %58 : f32 to vector<1x512xf32>
    %60 = arith.addf %55, %59 : vector<1x512xf32>
    %61 = vector.extract_strided_slice %4 {offsets = [1, 0], sizes = [1, 512], strides = [1, 1]} : vector<4x512xf32> to vector<1x512xf32>
    %62 = arith.subf %60, %61 : vector<1x512xf32>
    %63 = arith.mulf %62, %62 : vector<1x512xf32>
    %64 = arith.addf %36, %63 : vector<1x512xf32>
    %c0_25 = arith.constant 0 : index
    %c2_26 = arith.constant 2 : index
    %65 = memref.load %arg2[%c0_25, %c2_26] : memref<4x4xf32, #tpu.memory_space<smem>>
    %66 = vector.extract_strided_slice %9 {offsets = [0, 0], sizes = [1, 512], strides = [1, 1]} : vector<4x512xf32> to vector<1x512xf32>
    %67 = vector.broadcast %65 : f32 to vector<1x512xf32>
    %68 = arith.mulf %67, %66 : vector<1x512xf32>
    %c1_27 = arith.constant 1 : index
    %c2_28 = arith.constant 2 : index
    %69 = memref.load %arg2[%c1_27, %c2_28] : memref<4x4xf32, #tpu.memory_space<smem>>
    %70 = vector.extract_strided_slice %9 {offsets = [1, 0], sizes = [1, 512], strides = [1, 1]} : vector<4x512xf32> to vector<1x512xf32>
    %71 = vector.broadcast %69 : f32 to vector<1x512xf32>
    %72 = arith.mulf %71, %70 : vector<1x512xf32>
    %73 = arith.addf %68, %72 : vector<1x512xf32>
    %c2_29 = arith.constant 2 : index
    %c2_30 = arith.constant 2 : index
    %74 = memref.load %arg2[%c2_29, %c2_30] : memref<4x4xf32, #tpu.memory_space<smem>>
    %75 = vector.extract_strided_slice %9 {offsets = [2, 0], sizes = [1, 512], strides = [1, 1]} : vector<4x512xf32> to vector<1x512xf32>
    %76 = vector.broadcast %74 : f32 to vector<1x512xf32>
    %77 = arith.mulf %76, %75 : vector<1x512xf32>
    %78 = arith.addf %73, %77 : vector<1x512xf32>
    %c3_31 = arith.constant 3 : index
    %c2_32 = arith.constant 2 : index
    %79 = memref.load %arg2[%c3_31, %c2_32] : memref<4x4xf32, #tpu.memory_space<smem>>
    %80 = vector.extract_strided_slice %9 {offsets = [3, 0], sizes = [1, 512], strides = [1, 1]} : vector<4x512xf32> to vector<1x512xf32>
    %81 = vector.broadcast %79 : f32 to vector<1x512xf32>
    %82 = arith.mulf %81, %80 : vector<1x512xf32>
    %83 = arith.addf %78, %82 : vector<1x512xf32>
    %c2_33 = arith.constant 2 : index
    %84 = memref.load %arg3[%c2_33] : memref<4xf32, #tpu.memory_space<smem>>
    %c0_34 = arith.constant 0 : index
    %c2_35 = arith.constant 2 : index
    %85 = memref.load %arg4[%c0_34, %c2_35] : memref<8x4xf32, #tpu.memory_space<smem>>
    %86 = arith.addf %84, %85 : f32
    %87 = vector.broadcast %86 : f32 to vector<1x512xf32>
    %88 = arith.addf %83, %87 : vector<1x512xf32>
    %89 = vector.extract_strided_slice %4 {offsets = [2, 0], sizes = [1, 512], strides = [1, 1]} : vector<4x512xf32> to vector<1x512xf32>
    %90 = arith.subf %88, %89 : vector<1x512xf32>
    %91 = arith.mulf %90, %90 : vector<1x512xf32>
    %92 = arith.addf %64, %91 : vector<1x512xf32>
    %c0_36 = arith.constant 0 : index
    %c3_37 = arith.constant 3 : index
    %93 = memref.load %arg2[%c0_36, %c3_37] : memref<4x4xf32, #tpu.memory_space<smem>>
    %94 = vector.extract_strided_slice %9 {offsets = [0, 0], sizes = [1, 512], strides = [1, 1]} : vector<4x512xf32> to vector<1x512xf32>
    %95 = vector.broadcast %93 : f32 to vector<1x512xf32>
    %96 = arith.mulf %95, %94 : vector<1x512xf32>
    %c1_38 = arith.constant 1 : index
    %c3_39 = arith.constant 3 : index
    %97 = memref.load %arg2[%c1_38, %c3_39] : memref<4x4xf32, #tpu.memory_space<smem>>
    %98 = vector.extract_strided_slice %9 {offsets = [1, 0], sizes = [1, 512], strides = [1, 1]} : vector<4x512xf32> to vector<1x512xf32>
    %99 = vector.broadcast %97 : f32 to vector<1x512xf32>
    %100 = arith.mulf %99, %98 : vector<1x512xf32>
    %101 = arith.addf %96, %100 : vector<1x512xf32>
    %c2_40 = arith.constant 2 : index
    %c3_41 = arith.constant 3 : index
    %102 = memref.load %arg2[%c2_40, %c3_41] : memref<4x4xf32, #tpu.memory_space<smem>>
    %103 = vector.extract_strided_slice %9 {offsets = [2, 0], sizes = [1, 512], strides = [1, 1]} : vector<4x512xf32> to vector<1x512xf32>
    %104 = vector.broadcast %102 : f32 to vector<1x512xf32>
    %105 = arith.mulf %104, %103 : vector<1x512xf32>
    %106 = arith.addf %101, %105 : vector<1x512xf32>
    %c3_42 = arith.constant 3 : index
    %c3_43 = arith.constant 3 : index
    %107 = memref.load %arg2[%c3_42, %c3_43] : memref<4x4xf32, #tpu.memory_space<smem>>
    %108 = vector.extract_strided_slice %9 {offsets = [3, 0], sizes = [1, 512], strides = [1, 1]} : vector<4x512xf32> to vector<1x512xf32>
    %109 = vector.broadcast %107 : f32 to vector<1x512xf32>
    %110 = arith.mulf %109, %108 : vector<1x512xf32>
    %111 = arith.addf %106, %110 : vector<1x512xf32>
    %c3_44 = arith.constant 3 : index
    %112 = memref.load %arg3[%c3_44] : memref<4xf32, #tpu.memory_space<smem>>
    %c0_45 = arith.constant 0 : index
    %c3_46 = arith.constant 3 : index
    %113 = memref.load %arg4[%c0_45, %c3_46] : memref<8x4xf32, #tpu.memory_space<smem>>
    %114 = arith.addf %112, %113 : f32
    %115 = vector.broadcast %114 : f32 to vector<1x512xf32>
    %116 = arith.addf %111, %115 : vector<1x512xf32>
    %117 = vector.extract_strided_slice %4 {offsets = [3, 0], sizes = [1, 512], strides = [1, 1]} : vector<4x512xf32> to vector<1x512xf32>
    %118 = arith.subf %116, %117 : vector<1x512xf32>
    %119 = arith.mulf %118, %118 : vector<1x512xf32>
    %120 = arith.addf %92, %119 : vector<1x512xf32>
    %121 = vector.shape_cast %120 : vector<1x512xf32> to vector<1x1x512xf32>
    %cst = arith.constant dense<0.000000e+00> : vector<1xf32>
    %122 = vector.multi_reduction <add>, %121, %cst [1, 2] : vector<1x1x512xf32> to vector<1xf32>
    %123 = vector.shape_cast %122 : vector<1xf32> to vector<1x1x1xf32>
    %124 = vector.extract %123[0, 0, 0] : f32 from vector<1x1x1xf32>
    %cst_47 = arith.constant 4.8828125E-4 : f32
    %125 = arith.mulf %124, %cst_47 : f32
    %126 = vector.broadcast %125 : f32 to vector<8x128xf32>
    %c0_48 = arith.constant 0 : index
    %c0_49 = arith.constant 0 : index
    %c0_50 = arith.constant 0 : index
    %127 = vector.load %arg7[%c0_48, %c0_49, %c0_50] : memref<8x8x128xf32, #tpu.memory_space<vmem>>, vector<1x8x128xf32>
    %128 = vector.shape_cast %127 : vector<1x8x128xf32> to vector<8x128xf32>
    %129 = vector.shape_cast %126 : vector<8x128xf32> to vector<1x8x128xf32>
    tpu.vector_store %arg7[%c0_48, %c0_49, %c0_50], %129 {strides = array<i32>} : memref<8x8x128xf32, #tpu.memory_space<vmem>>, vector<1x8x128xf32>,
    %c1_51 = arith.constant 1 : index
    %130 = memref.load %arg0[%c1_51] : memref<8xf32, #tpu.memory_space<smem>>
    %c1_52 = arith.constant 1 : index
    %131 = memref.load %arg1[%c1_52] : memref<8xf32, #tpu.memory_space<smem>>
    %c1_53 = arith.constant 1 : index
    %c0_54 = arith.constant 0 : index
    %c0_55 = arith.constant 0 : index
    %132 = vector.load %arg6[%c1_53, %c0_54, %c0_55] : memref<8x4x512xf32, #tpu.memory_space<vmem>>, vector<1x4x512xf32>
    %133 = vector.shape_cast %132 : vector<1x4x512xf32> to vector<4x512xf32>
    %134 = vector.broadcast %130 : f32 to vector<4x512xf32>
    %135 = arith.mulf %134, %0 : vector<4x512xf32>
    %136 = vector.broadcast %131 : f32 to vector<4x512xf32>
    %137 = arith.mulf %136, %133 : vector<4x512xf32>
    %138 = arith.addf %135, %137 : vector<4x512xf32>
    %c0_56 = arith.constant 0 : index
    %c0_57 = arith.constant 0 : index
    %139 = memref.load %arg2[%c0_56, %c0_57] : memref<4x4xf32, #tpu.memory_space<smem>>
    %140 = vector.extract_strided_slice %138 {offsets = [0, 0], sizes = [1, 512], strides = [1, 1]} : vector<4x512xf32> to vector<1x512xf32>
    %141 = vector.broadcast %139 : f32 to vector<1x512xf32>
    %142 = arith.mulf %141, %140 : vector<1x512xf32>
    %c1_58 = arith.constant 1 : index
    %c0_59 = arith.constant 0 : index
    %143 = memref.load %arg2[%c1_58, %c0_59] : memref<4x4xf32, #tpu.memory_space<smem>>
    %144 = vector.extract_strided_slice %138 {offsets = [1, 0], sizes = [1, 512], strides = [1, 1]} : vector<4x512xf32> to vector<1x512xf32>
    %145 = vector.broadcast %143 : f32 to vector<1x512xf32>
    %146 = arith.mulf %145, %144 : vector<1x512xf32>
    %147 = arith.addf %142, %146 : vector<1x512xf32>
    %c2_60 = arith.constant 2 : index
    %c0_61 = arith.constant 0 : index
    %148 = memref.load %arg2[%c2_60, %c0_61] : memref<4x4xf32, #tpu.memory_space<smem>>
    %149 = vector.extract_strided_slice %138 {offsets = [2, 0], sizes = [1, 512], strides = [1, 1]} : vector<4x512xf32> to vector<1x512xf32>
    %150 = vector.broadcast %148 : f32 to vector<1x512xf32>
    %151 = arith.mulf %150, %149 : vector<1x512xf32>
    %152 = arith.addf %147, %151 : vector<1x512xf32>
    %c3_62 = arith.constant 3 : index
    %c0_63 = arith.constant 0 : index
    %153 = memref.load %arg2[%c3_62, %c0_63] : memref<4x4xf32, #tpu.memory_space<smem>>
    %154 = vector.extract_strided_slice %138 {offsets = [3, 0], sizes = [1, 512], strides = [1, 1]} : vector<4x512xf32> to vector<1x512xf32>
    %155 = vector.broadcast %153 : f32 to vector<1x512xf32>
    %156 = arith.mulf %155, %154 : vector<1x512xf32>
    %157 = arith.addf %152, %156 : vector<1x512xf32>
    %c0_64 = arith.constant 0 : index
    %158 = memref.load %arg3[%c0_64] : memref<4xf32, #tpu.memory_space<smem>>
    %c1_65 = arith.constant 1 : index
    %c0_66 = arith.constant 0 : index
    %159 = memref.load %arg4[%c1_65, %c0_66] : memref<8x4xf32, #tpu.memory_space<smem>>
    %160 = arith.addf %158, %159 : f32
    %161 = vector.broadcast %160 : f32 to vector<1x512xf32>
    %162 = arith.addf %157, %161 : vector<1x512xf32>
    %163 = vector.extract_strided_slice %133 {offsets = [0, 0], sizes = [1, 512], strides = [1, 1]} : vector<4x512xf32> to vector<1x512xf32>
    %164 = arith.subf %162, %163 : vector<1x512xf32>
    %165 = arith.mulf %164, %164 : vector<1x512xf32>
    %c0_67 = arith.constant 0 : index
    %c1_68 = arith.constant 1 : index
    %166 = memref.load %arg2[%c0_67, %c1_68] : memref<4x4xf32, #tpu.memory_space<smem>>
    %167 = vector.extract_strided_slice %138 {offsets = [0, 0], sizes = [1, 512], strides = [1, 1]} : vector<4x512xf32> to vector<1x512xf32>
    %168 = vector.broadcast %166 : f32 to vector<1x512xf32>
    %169 = arith.mulf %168, %167 : vector<1x512xf32>
    %c1_69 = arith.constant 1 : index
    %c1_70 = arith.constant 1 : index
    %170 = memref.load %arg2[%c1_69, %c1_70] : memref<4x4xf32, #tpu.memory_space<smem>>
    %171 = vector.extract_strided_slice %138 {offsets = [1, 0], sizes = [1, 512], strides = [1, 1]} : vector<4x512xf32> to vector<1x512xf32>
    %172 = vector.broadcast %170 : f32 to vector<1x512xf32>
    %173 = arith.mulf %172, %171 : vector<1x512xf32>
    %174 = arith.addf %169, %173 : vector<1x512xf32>
    %c2_71 = arith.constant 2 : index
    %c1_72 = arith.constant 1 : index
    %175 = memref.load %arg2[%c2_71, %c1_72] : memref<4x4xf32, #tpu.memory_space<smem>>
    %176 = vector.extract_strided_slice %138 {offsets = [2, 0], sizes = [1, 512], strides = [1, 1]} : vector<4x512xf32> to vector<1x512xf32>
    %177 = vector.broadcast %175 : f32 to vector<1x512xf32>
    %178 = arith.mulf %177, %176 : vector<1x512xf32>
    %179 = arith.addf %174, %178 : vector<1x512xf32>
    %c3_73 = arith.constant 3 : index
    %c1_74 = arith.constant 1 : index
    %180 = memref.load %arg2[%c3_73, %c1_74] : memref<4x4xf32, #tpu.memory_space<smem>>
    %181 = vector.extract_strided_slice %138 {offsets = [3, 0], sizes = [1, 512], strides = [1, 1]} : vector<4x512xf32> to vector<1x512xf32>
    %182 = vector.broadcast %180 : f32 to vector<1x512xf32>
    %183 = arith.mulf %182, %181 : vector<1x512xf32>
    %184 = arith.addf %179, %183 : vector<1x512xf32>
    %c1_75 = arith.constant 1 : index
    %185 = memref.load %arg3[%c1_75] : memref<4xf32, #tpu.memory_space<smem>>
    %c1_76 = arith.constant 1 : index
    %c1_77 = arith.constant 1 : index
    %186 = memref.load %arg4[%c1_76, %c1_77] : memref<8x4xf32, #tpu.memory_space<smem>>
    %187 = arith.addf %185, %186 : f32
    %188 = vector.broadcast %187 : f32 to vector<1x512xf32>
    %189 = arith.addf %184, %188 : vector<1x512xf32>
    %190 = vector.extract_strided_slice %133 {offsets = [1, 0], sizes = [1, 512], strides = [1, 1]} : vector<4x512xf32> to vector<1x512xf32>
    %191 = arith.subf %189, %190 : vector<1x512xf32>
    %192 = arith.mulf %191, %191 : vector<1x512xf32>
    %193 = arith.addf %165, %192 : vector<1x512xf32>
    %c0_78 = arith.constant 0 : index
    %c2_79 = arith.constant 2 : index
    %194 = memref.load %arg2[%c0_78, %c2_79] : memref<4x4xf32, #tpu.memory_space<smem>>
    %195 = vector.extract_strided_slice %138 {offsets = [0, 0], sizes = [1, 512], strides = [1, 1]} : vector<4x512xf32> to vector<1x512xf32>
    %196 = vector.broadcast %194 : f32 to vector<1x512xf32>
    %197 = arith.mulf %196, %195 : vector<1x512xf32>
    %c1_80 = arith.constant 1 : index
    %c2_81 = arith.constant 2 : index
    %198 = memref.load %arg2[%c1_80, %c2_81] : memref<4x4xf32, #tpu.memory_space<smem>>
    %199 = vector.extract_strided_slice %138 {offsets = [1, 0], sizes = [1, 512], strides = [1, 1]} : vector<4x512xf32> to vector<1x512xf32>
    %200 = vector.broadcast %198 : f32 to vector<1x512xf32>
    %201 = arith.mulf %200, %199 : vector<1x512xf32>
    %202 = arith.addf %197, %201 : vector<1x512xf32>
    %c2_82 = arith.constant 2 : index
    %c2_83 = arith.constant 2 : index
    %203 = memref.load %arg2[%c2_82, %c2_83] : memref<4x4xf32, #tpu.memory_space<smem>>
    %204 = vector.extract_strided_slice %138 {offsets = [2, 0], sizes = [1, 512], strides = [1, 1]} : vector<4x512xf32> to vector<1x512xf32>
    %205 = vector.broadcast %203 : f32 to vector<1x512xf32>
    %206 = arith.mulf %205, %204 : vector<1x512xf32>
    %207 = arith.addf %202, %206 : vector<1x512xf32>
    %c3_84 = arith.constant 3 : index
    %c2_85 = arith.constant 2 : index
    %208 = memref.load %arg2[%c3_84, %c2_85] : memref<4x4xf32, #tpu.memory_space<smem>>
    %209 = vector.extract_strided_slice %138 {offsets = [3, 0], sizes = [1, 512], strides = [1, 1]} : vector<4x512xf32> to vector<1x512xf32>
    %210 = vector.broadcast %208 : f32 to vector<1x512xf32>
    %211 = arith.mulf %210, %209 : vector<1x512xf32>
    %212 = arith.addf %207, %211 : vector<1x512xf32>
    %c2_86 = arith.constant 2 : index
    %213 = memref.load %arg3[%c2_86] : memref<4xf32, #tpu.memory_space<smem>>
    %c1_87 = arith.constant 1 : index
    %c2_88 = arith.constant 2 : index
    %214 = memref.load %arg4[%c1_87, %c2_88] : memref<8x4xf32, #tpu.memory_space<smem>>
    %215 = arith.addf %213, %214 : f32
    %216 = vector.broadcast %215 : f32 to vector<1x512xf32>
    %217 = arith.addf %212, %216 : vector<1x512xf32>
    %218 = vector.extract_strided_slice %133 {offsets = [2, 0], sizes = [1, 512], strides = [1, 1]} : vector<4x512xf32> to vector<1x512xf32>
    %219 = arith.subf %217, %218 : vector<1x512xf32>
    %220 = arith.mulf %219, %219 : vector<1x512xf32>
    %221 = arith.addf %193, %220 : vector<1x512xf32>
    %c0_89 = arith.constant 0 : index
    %c3_90 = arith.constant 3 : index
    %222 = memref.load %arg2[%c0_89, %c3_90] : memref<4x4xf32, #tpu.memory_space<smem>>
    %223 = vector.extract_strided_slice %138 {offsets = [0, 0], sizes = [1, 512], strides = [1, 1]} : vector<4x512xf32> to vector<1x512xf32>
    %224 = vector.broadcast %222 : f32 to vector<1x512xf32>
    %225 = arith.mulf %224, %223 : vector<1x512xf32>
    %c1_91 = arith.constant 1 : index
    %c3_92 = arith.constant 3 : index
    %226 = memref.load %arg2[%c1_91, %c3_92] : memref<4x4xf32, #tpu.memory_space<smem>>
    %227 = vector.extract_strided_slice %138 {offsets = [1, 0], sizes = [1, 512], strides = [1, 1]} : vector<4x512xf32> to vector<1x512xf32>
    %228 = vector.broadcast %226 : f32 to vector<1x512xf32>
    %229 = arith.mulf %228, %227 : vector<1x512xf32>
    %230 = arith.addf %225, %229 : vector<1x512xf32>
    %c2_93 = arith.constant 2 : index
    %c3_94 = arith.constant 3 : index
    %231 = memref.load %arg2[%c2_93, %c3_94] : memref<4x4xf32, #tpu.memory_space<smem>>
    %232 = vector.extract_strided_slice %138 {offsets = [2, 0], sizes = [1, 512], strides = [1, 1]} : vector<4x512xf32> to vector<1x512xf32>
    %233 = vector.broadcast %231 : f32 to vector<1x512xf32>
    %234 = arith.mulf %233, %232 : vector<1x512xf32>
    %235 = arith.addf %230, %234 : vector<1x512xf32>
    %c3_95 = arith.constant 3 : index
    %c3_96 = arith.constant 3 : index
    %236 = memref.load %arg2[%c3_95, %c3_96] : memref<4x4xf32, #tpu.memory_space<smem>>
    %237 = vector.extract_strided_slice %138 {offsets = [3, 0], sizes = [1, 512], strides = [1, 1]} : vector<4x512xf32> to vector<1x512xf32>
    %238 = vector.broadcast %236 : f32 to vector<1x512xf32>
    %239 = arith.mulf %238, %237 : vector<1x512xf32>
    %240 = arith.addf %235, %239 : vector<1x512xf32>
    %c3_97 = arith.constant 3 : index
    %241 = memref.load %arg3[%c3_97] : memref<4xf32, #tpu.memory_space<smem>>
    %c1_98 = arith.constant 1 : index
    %c3_99 = arith.constant 3 : index
    %242 = memref.load %arg4[%c1_98, %c3_99] : memref<8x4xf32, #tpu.memory_space<smem>>
    %243 = arith.addf %241, %242 : f32
    %244 = vector.broadcast %243 : f32 to vector<1x512xf32>
    %245 = arith.addf %240, %244 : vector<1x512xf32>
    %246 = vector.extract_strided_slice %133 {offsets = [3, 0], sizes = [1, 512], strides = [1, 1]} : vector<4x512xf32> to vector<1x512xf32>
    %247 = arith.subf %245, %246 : vector<1x512xf32>
    %248 = arith.mulf %247, %247 : vector<1x512xf32>
    %249 = arith.addf %221, %248 : vector<1x512xf32>
    %250 = vector.shape_cast %249 : vector<1x512xf32> to vector<1x1x512xf32>
    %cst_100 = arith.constant dense<0.000000e+00> : vector<1xf32>
    %251 = vector.multi_reduction <add>, %250, %cst_100 [1, 2] : vector<1x1x512xf32> to vector<1xf32>
    %252 = vector.shape_cast %251 : vector<1xf32> to vector<1x1x1xf32>
    %253 = vector.extract %252[0, 0, 0] : f32 from vector<1x1x1xf32>
    %cst_101 = arith.constant 4.8828125E-4 : f32
    %254 = arith.mulf %253, %cst_101 : f32
    %255 = vector.broadcast %254 : f32 to vector<8x128xf32>
    %c1_102 = arith.constant 1 : index
    %c0_103 = arith.constant 0 : index
    %c0_104 = arith.constant 0 : index
    %256 = vector.load %arg7[%c1_102, %c0_103, %c0_104] : memref<8x8x128xf32, #tpu.memory_space<vmem>>, vector<1x8x128xf32>
    %257 = vector.shape_cast %256 : vector<1x8x128xf32> to vector<8x128xf32>
    %258 = vector.shape_cast %255 : vector<8x128xf32> to vector<1x8x128xf32>
    tpu.vector_store %arg7[%c1_102, %c0_103, %c0_104], %258 {strides = array<i32>} : memref<8x8x128xf32, #tpu.memory_space<vmem>>, vector<1x8x128xf32>,
    %c2_105 = arith.constant 2 : index
    %259 = memref.load %arg0[%c2_105] : memref<8xf32, #tpu.memory_space<smem>>
    %c2_106 = arith.constant 2 : index
    %260 = memref.load %arg1[%c2_106] : memref<8xf32, #tpu.memory_space<smem>>
    %c2_107 = arith.constant 2 : index
    %c0_108 = arith.constant 0 : index
    %c0_109 = arith.constant 0 : index
    %261 = vector.load %arg6[%c2_107, %c0_108, %c0_109] : memref<8x4x512xf32, #tpu.memory_space<vmem>>, vector<1x4x512xf32>
    %262 = vector.shape_cast %261 : vector<1x4x512xf32> to vector<4x512xf32>
    %263 = vector.broadcast %259 : f32 to vector<4x512xf32>
    %264 = arith.mulf %263, %0 : vector<4x512xf32>
    %265 = vector.broadcast %260 : f32 to vector<4x512xf32>
    %266 = arith.mulf %265, %262 : vector<4x512xf32>
    %267 = arith.addf %264, %266 : vector<4x512xf32>
    %c0_110 = arith.constant 0 : index
    %c0_111 = arith.constant 0 : index
    %268 = memref.load %arg2[%c0_110, %c0_111] : memref<4x4xf32, #tpu.memory_space<smem>>
    %269 = vector.extract_strided_slice %267 {offsets = [0, 0], sizes = [1, 512], strides = [1, 1]} : vector<4x512xf32> to vector<1x512xf32>
    %270 = vector.broadcast %268 : f32 to vector<1x512xf32>
    %271 = arith.mulf %270, %269 : vector<1x512xf32>
    %c1_112 = arith.constant 1 : index
    %c0_113 = arith.constant 0 : index
    %272 = memref.load %arg2[%c1_112, %c0_113] : memref<4x4xf32, #tpu.memory_space<smem>>
    %273 = vector.extract_strided_slice %267 {offsets = [1, 0], sizes = [1, 512], strides = [1, 1]} : vector<4x512xf32> to vector<1x512xf32>
    %274 = vector.broadcast %272 : f32 to vector<1x512xf32>
    %275 = arith.mulf %274, %273 : vector<1x512xf32>
    %276 = arith.addf %271, %275 : vector<1x512xf32>
    %c2_114 = arith.constant 2 : index
    %c0_115 = arith.constant 0 : index
    %277 = memref.load %arg2[%c2_114, %c0_115] : memref<4x4xf32, #tpu.memory_space<smem>>
    %278 = vector.extract_strided_slice %267 {offsets = [2, 0], sizes = [1, 512], strides = [1, 1]} : vector<4x512xf32> to vector<1x512xf32>
    %279 = vector.broadcast %277 : f32 to vector<1x512xf32>
    %280 = arith.mulf %279, %278 : vector<1x512xf32>
    %281 = arith.addf %276, %280 : vector<1x512xf32>
    %c3_116 = arith.constant 3 : index
    %c0_117 = arith.constant 0 : index
    %282 = memref.load %arg2[%c3_116, %c0_117] : memref<4x4xf32, #tpu.memory_space<smem>>
    %283 = vector.extract_strided_slice %267 {offsets = [3, 0], sizes = [1, 512], strides = [1, 1]} : vector<4x512xf32> to vector<1x512xf32>
    %284 = vector.broadcast %282 : f32 to vector<1x512xf32>
    %285 = arith.mulf %284, %283 : vector<1x512xf32>
    %286 = arith.addf %281, %285 : vector<1x512xf32>
    %c0_118 = arith.constant 0 : index
    %287 = memref.load %arg3[%c0_118] : memref<4xf32, #tpu.memory_space<smem>>
    %c2_119 = arith.constant 2 : index
    %c0_120 = arith.constant 0 : index
    %288 = memref.load %arg4[%c2_119, %c0_120] : memref<8x4xf32, #tpu.memory_space<smem>>
    %289 = arith.addf %287, %288 : f32
    %290 = vector.broadcast %289 : f32 to vector<1x512xf32>
    %291 = arith.addf %286, %290 : vector<1x512xf32>
    %292 = vector.extract_strided_slice %262 {offsets = [0, 0], sizes = [1, 512], strides = [1, 1]} : vector<4x512xf32> to vector<1x512xf32>
    %293 = arith.subf %291, %292 : vector<1x512xf32>
    %294 = arith.mulf %293, %293 : vector<1x512xf32>
    %c0_121 = arith.constant 0 : index
    %c1_122 = arith.constant 1 : index
    %295 = memref.load %arg2[%c0_121, %c1_122] : memref<4x4xf32, #tpu.memory_space<smem>>
    %296 = vector.extract_strided_slice %267 {offsets = [0, 0], sizes = [1, 512], strides = [1, 1]} : vector<4x512xf32> to vector<1x512xf32>
    %297 = vector.broadcast %295 : f32 to vector<1x512xf32>
    %298 = arith.mulf %297, %296 : vector<1x512xf32>
    %c1_123 = arith.constant 1 : index
    %c1_124 = arith.constant 1 : index
    %299 = memref.load %arg2[%c1_123, %c1_124] : memref<4x4xf32, #tpu.memory_space<smem>>
    %300 = vector.extract_strided_slice %267 {offsets = [1, 0], sizes = [1, 512], strides = [1, 1]} : vector<4x512xf32> to vector<1x512xf32>
    %301 = vector.broadcast %299 : f32 to vector<1x512xf32>
    %302 = arith.mulf %301, %300 : vector<1x512xf32>
    %303 = arith.addf %298, %302 : vector<1x512xf32>
    %c2_125 = arith.constant 2 : index
    %c1_126 = arith.constant 1 : index
    %304 = memref.load %arg2[%c2_125, %c1_126] : memref<4x4xf32, #tpu.memory_space<smem>>
    %305 = vector.extract_strided_slice %267 {offsets = [2, 0], sizes = [1, 512], strides = [1, 1]} : vector<4x512xf32> to vector<1x512xf32>
    %306 = vector.broadcast %304 : f32 to vector<1x512xf32>
    %307 = arith.mulf %306, %305 : vector<1x512xf32>
    %308 = arith.addf %303, %307 : vector<1x512xf32>
    %c3_127 = arith.constant 3 : index
    %c1_128 = arith.constant 1 : index
    %309 = memref.load %arg2[%c3_127, %c1_128] : memref<4x4xf32, #tpu.memory_space<smem>>
    %310 = vector.extract_strided_slice %267 {offsets = [3, 0], sizes = [1, 512], strides = [1, 1]} : vector<4x512xf32> to vector<1x512xf32>
    %311 = vector.broadcast %309 : f32 to vector<1x512xf32>
    %312 = arith.mulf %311, %310 : vector<1x512xf32>
    %313 = arith.addf %308, %312 : vector<1x512xf32>
    %c1_129 = arith.constant 1 : index
    %314 = memref.load %arg3[%c1_129] : memref<4xf32, #tpu.memory_space<smem>>
    %c2_130 = arith.constant 2 : index
    %c1_131 = arith.constant 1 : index
    %315 = memref.load %arg4[%c2_130, %c1_131] : memref<8x4xf32, #tpu.memory_space<smem>>
    %316 = arith.addf %314, %315 : f32
    %317 = vector.broadcast %316 : f32 to vector<1x512xf32>
    %318 = arith.addf %313, %317 : vector<1x512xf32>
    %319 = vector.extract_strided_slice %262 {offsets = [1, 0], sizes = [1, 512], strides = [1, 1]} : vector<4x512xf32> to vector<1x512xf32>
    %320 = arith.subf %318, %319 : vector<1x512xf32>
    %321 = arith.mulf %320, %320 : vector<1x512xf32>
    %322 = arith.addf %294, %321 : vector<1x512xf32>
    %c0_132 = arith.constant 0 : index
    %c2_133 = arith.constant 2 : index
    %323 = memref.load %arg2[%c0_132, %c2_133] : memref<4x4xf32, #tpu.memory_space<smem>>
    %324 = vector.extract_strided_slice %267 {offsets = [0, 0], sizes = [1, 512], strides = [1, 1]} : vector<4x512xf32> to vector<1x512xf32>
    %325 = vector.broadcast %323 : f32 to vector<1x512xf32>
    %326 = arith.mulf %325, %324 : vector<1x512xf32>
    %c1_134 = arith.constant 1 : index
    %c2_135 = arith.constant 2 : index
    %327 = memref.load %arg2[%c1_134, %c2_135] : memref<4x4xf32, #tpu.memory_space<smem>>
    %328 = vector.extract_strided_slice %267 {offsets = [1, 0], sizes = [1, 512], strides = [1, 1]} : vector<4x512xf32> to vector<1x512xf32>
    %329 = vector.broadcast %327 : f32 to vector<1x512xf32>
    %330 = arith.mulf %329, %328 : vector<1x512xf32>
    %331 = arith.addf %326, %330 : vector<1x512xf32>
    %c2_136 = arith.constant 2 : index
    %c2_137 = arith.constant 2 : index
    %332 = memref.load %arg2[%c2_136, %c2_137] : memref<4x4xf32, #tpu.memory_space<smem>>
    %333 = vector.extract_strided_slice %267 {offsets = [2, 0], sizes = [1, 512], strides = [1, 1]} : vector<4x512xf32> to vector<1x512xf32>
    %334 = vector.broadcast %332 : f32 to vector<1x512xf32>
    %335 = arith.mulf %334, %333 : vector<1x512xf32>
    %336 = arith.addf %331, %335 : vector<1x512xf32>
    %c3_138 = arith.constant 3 : index
    %c2_139 = arith.constant 2 : index
    %337 = memref.load %arg2[%c3_138, %c2_139] : memref<4x4xf32, #tpu.memory_space<smem>>
    %338 = vector.extract_strided_slice %267 {offsets = [3, 0], sizes = [1, 512], strides = [1, 1]} : vector<4x512xf32> to vector<1x512xf32>
    %339 = vector.broadcast %337 : f32 to vector<1x512xf32>
    %340 = arith.mulf %339, %338 : vector<1x512xf32>
    %341 = arith.addf %336, %340 : vector<1x512xf32>
    %c2_140 = arith.constant 2 : index
    %342 = memref.load %arg3[%c2_140] : memref<4xf32, #tpu.memory_space<smem>>
    %c2_141 = arith.constant 2 : index
    %c2_142 = arith.constant 2 : index
    %343 = memref.load %arg4[%c2_141, %c2_142] : memref<8x4xf32, #tpu.memory_space<smem>>
    %344 = arith.addf %342, %343 : f32
    %345 = vector.broadcast %344 : f32 to vector<1x512xf32>
    %346 = arith.addf %341, %345 : vector<1x512xf32>
    %347 = vector.extract_strided_slice %262 {offsets = [2, 0], sizes = [1, 512], strides = [1, 1]} : vector<4x512xf32> to vector<1x512xf32>
    %348 = arith.subf %346, %347 : vector<1x512xf32>
    %349 = arith.mulf %348, %348 : vector<1x512xf32>
    %350 = arith.addf %322, %349 : vector<1x512xf32>
    %c0_143 = arith.constant 0 : index
    %c3_144 = arith.constant 3 : index
    %351 = memref.load %arg2[%c0_143, %c3_144] : memref<4x4xf32, #tpu.memory_space<smem>>
    %352 = vector.extract_strided_slice %267 {offsets = [0, 0], sizes = [1, 512], strides = [1, 1]} : vector<4x512xf32> to vector<1x512xf32>
    %353 = vector.broadcast %351 : f32 to vector<1x512xf32>
    %354 = arith.mulf %353, %352 : vector<1x512xf32>
    %c1_145 = arith.constant 1 : index
    %c3_146 = arith.constant 3 : index
    %355 = memref.load %arg2[%c1_145, %c3_146] : memref<4x4xf32, #tpu.memory_space<smem>>
    %356 = vector.extract_strided_slice %267 {offsets = [1, 0], sizes = [1, 512], strides = [1, 1]} : vector<4x512xf32> to vector<1x512xf32>
    %357 = vector.broadcast %355 : f32 to vector<1x512xf32>
    %358 = arith.mulf %357, %356 : vector<1x512xf32>
    %359 = arith.addf %354, %358 : vector<1x512xf32>
    %c2_147 = arith.constant 2 : index
    %c3_148 = arith.constant 3 : index
    %360 = memref.load %arg2[%c2_147, %c3_148] : memref<4x4xf32, #tpu.memory_space<smem>>
    %361 = vector.extract_strided_slice %267 {offsets = [2, 0], sizes = [1, 512], strides = [1, 1]} : vector<4x512xf32> to vector<1x512xf32>
    %362 = vector.broadcast %360 : f32 to vector<1x512xf32>
    %363 = arith.mulf %362, %361 : vector<1x512xf32>
    %364 = arith.addf %359, %363 : vector<1x512xf32>
    %c3_149 = arith.constant 3 : index
    %c3_150 = arith.constant 3 : index
    %365 = memref.load %arg2[%c3_149, %c3_150] : memref<4x4xf32, #tpu.memory_space<smem>>
    %366 = vector.extract_strided_slice %267 {offsets = [3, 0], sizes = [1, 512], strides = [1, 1]} : vector<4x512xf32> to vector<1x512xf32>
    %367 = vector.broadcast %365 : f32 to vector<1x512xf32>
    %368 = arith.mulf %367, %366 : vector<1x512xf32>
    %369 = arith.addf %364, %368 : vector<1x512xf32>
    %c3_151 = arith.constant 3 : index
    %370 = memref.load %arg3[%c3_151] : memref<4xf32, #tpu.memory_space<smem>>
    %c2_152 = arith.constant 2 : index
    %c3_153 = arith.constant 3 : index
    %371 = memref.load %arg4[%c2_152, %c3_153] : memref<8x4xf32, #tpu.memory_space<smem>>
    %372 = arith.addf %370, %371 : f32
    %373 = vector.broadcast %372 : f32 to vector<1x512xf32>
    %374 = arith.addf %369, %373 : vector<1x512xf32>
    %375 = vector.extract_strided_slice %262 {offsets = [3, 0], sizes = [1, 512], strides = [1, 1]} : vector<4x512xf32> to vector<1x512xf32>
    %376 = arith.subf %374, %375 : vector<1x512xf32>
    %377 = arith.mulf %376, %376 : vector<1x512xf32>
    %378 = arith.addf %350, %377 : vector<1x512xf32>
    %379 = vector.shape_cast %378 : vector<1x512xf32> to vector<1x1x512xf32>
    %cst_154 = arith.constant dense<0.000000e+00> : vector<1xf32>
    %380 = vector.multi_reduction <add>, %379, %cst_154 [1, 2] : vector<1x1x512xf32> to vector<1xf32>
    %381 = vector.shape_cast %380 : vector<1xf32> to vector<1x1x1xf32>
    %382 = vector.extract %381[0, 0, 0] : f32 from vector<1x1x1xf32>
    %cst_155 = arith.constant 4.8828125E-4 : f32
    %383 = arith.mulf %382, %cst_155 : f32
    %384 = vector.broadcast %383 : f32 to vector<8x128xf32>
    %c2_156 = arith.constant 2 : index
    %c0_157 = arith.constant 0 : index
    %c0_158 = arith.constant 0 : index
    %385 = vector.load %arg7[%c2_156, %c0_157, %c0_158] : memref<8x8x128xf32, #tpu.memory_space<vmem>>, vector<1x8x128xf32>
    %386 = vector.shape_cast %385 : vector<1x8x128xf32> to vector<8x128xf32>
    %387 = vector.shape_cast %384 : vector<8x128xf32> to vector<1x8x128xf32>
    tpu.vector_store %arg7[%c2_156, %c0_157, %c0_158], %387 {strides = array<i32>} : memref<8x8x128xf32, #tpu.memory_space<vmem>>, vector<1x8x128xf32>,
    %c3_159 = arith.constant 3 : index
    %388 = memref.load %arg0[%c3_159] : memref<8xf32, #tpu.memory_space<smem>>
    %c3_160 = arith.constant 3 : index
    %389 = memref.load %arg1[%c3_160] : memref<8xf32, #tpu.memory_space<smem>>
    %c3_161 = arith.constant 3 : index
    %c0_162 = arith.constant 0 : index
    %c0_163 = arith.constant 0 : index
    %390 = vector.load %arg6[%c3_161, %c0_162, %c0_163] : memref<8x4x512xf32, #tpu.memory_space<vmem>>, vector<1x4x512xf32>
    %391 = vector.shape_cast %390 : vector<1x4x512xf32> to vector<4x512xf32>
    %392 = vector.broadcast %388 : f32 to vector<4x512xf32>
    %393 = arith.mulf %392, %0 : vector<4x512xf32>
    %394 = vector.broadcast %389 : f32 to vector<4x512xf32>
    %395 = arith.mulf %394, %391 : vector<4x512xf32>
    %396 = arith.addf %393, %395 : vector<4x512xf32>
    %c0_164 = arith.constant 0 : index
    %c0_165 = arith.constant 0 : index
    %397 = memref.load %arg2[%c0_164, %c0_165] : memref<4x4xf32, #tpu.memory_space<smem>>
    %398 = vector.extract_strided_slice %396 {offsets = [0, 0], sizes = [1, 512], strides = [1, 1]} : vector<4x512xf32> to vector<1x512xf32>
    %399 = vector.broadcast %397 : f32 to vector<1x512xf32>
    %400 = arith.mulf %399, %398 : vector<1x512xf32>
    %c1_166 = arith.constant 1 : index
    %c0_167 = arith.constant 0 : index
    %401 = memref.load %arg2[%c1_166, %c0_167] : memref<4x4xf32, #tpu.memory_space<smem>>
    %402 = vector.extract_strided_slice %396 {offsets = [1, 0], sizes = [1, 512], strides = [1, 1]} : vector<4x512xf32> to vector<1x512xf32>
    %403 = vector.broadcast %401 : f32 to vector<1x512xf32>
    %404 = arith.mulf %403, %402 : vector<1x512xf32>
    %405 = arith.addf %400, %404 : vector<1x512xf32>
    %c2_168 = arith.constant 2 : index
    %c0_169 = arith.constant 0 : index
    %406 = memref.load %arg2[%c2_168, %c0_169] : memref<4x4xf32, #tpu.memory_space<smem>>
    %407 = vector.extract_strided_slice %396 {offsets = [2, 0], sizes = [1, 512], strides = [1, 1]} : vector<4x512xf32> to vector<1x512xf32>
    %408 = vector.broadcast %406 : f32 to vector<1x512xf32>
    %409 = arith.mulf %408, %407 : vector<1x512xf32>
    %410 = arith.addf %405, %409 : vector<1x512xf32>
    %c3_170 = arith.constant 3 : index
    %c0_171 = arith.constant 0 : index
    %411 = memref.load %arg2[%c3_170, %c0_171] : memref<4x4xf32, #tpu.memory_space<smem>>
    %412 = vector.extract_strided_slice %396 {offsets = [3, 0], sizes = [1, 512], strides = [1, 1]} : vector<4x512xf32> to vector<1x512xf32>
    %413 = vector.broadcast %411 : f32 to vector<1x512xf32>
    %414 = arith.mulf %413, %412 : vector<1x512xf32>
    %415 = arith.addf %410, %414 : vector<1x512xf32>
    %c0_172 = arith.constant 0 : index
    %416 = memref.load %arg3[%c0_172] : memref<4xf32, #tpu.memory_space<smem>>
    %c3_173 = arith.constant 3 : index
    %c0_174 = arith.constant 0 : index
    %417 = memref.load %arg4[%c3_173, %c0_174] : memref<8x4xf32, #tpu.memory_space<smem>>
    %418 = arith.addf %416, %417 : f32
    %419 = vector.broadcast %418 : f32 to vector<1x512xf32>
    %420 = arith.addf %415, %419 : vector<1x512xf32>
    %421 = vector.extract_strided_slice %391 {offsets = [0, 0], sizes = [1, 512], strides = [1, 1]} : vector<4x512xf32> to vector<1x512xf32>
    %422 = arith.subf %420, %421 : vector<1x512xf32>
    %423 = arith.mulf %422, %422 : vector<1x512xf32>
    %c0_175 = arith.constant 0 : index
    %c1_176 = arith.constant 1 : index
    %424 = memref.load %arg2[%c0_175, %c1_176] : memref<4x4xf32, #tpu.memory_space<smem>>
    %425 = vector.extract_strided_slice %396 {offsets = [0, 0], sizes = [1, 512], strides = [1, 1]} : vector<4x512xf32> to vector<1x512xf32>
    %426 = vector.broadcast %424 : f32 to vector<1x512xf32>
    %427 = arith.mulf %426, %425 : vector<1x512xf32>
    %c1_177 = arith.constant 1 : index
    %c1_178 = arith.constant 1 : index
    %428 = memref.load %arg2[%c1_177, %c1_178] : memref<4x4xf32, #tpu.memory_space<smem>>
    %429 = vector.extract_strided_slice %396 {offsets = [1, 0], sizes = [1, 512], strides = [1, 1]} : vector<4x512xf32> to vector<1x512xf32>
    %430 = vector.broadcast %428 : f32 to vector<1x512xf32>
    %431 = arith.mulf %430, %429 : vector<1x512xf32>
    %432 = arith.addf %427, %431 : vector<1x512xf32>
    %c2_179 = arith.constant 2 : index
    %c1_180 = arith.constant 1 : index
    %433 = memref.load %arg2[%c2_179, %c1_180] : memref<4x4xf32, #tpu.memory_space<smem>>
    %434 = vector.extract_strided_slice %396 {offsets = [2, 0], sizes = [1, 512], strides = [1, 1]} : vector<4x512xf32> to vector<1x512xf32>
    %435 = vector.broadcast %433 : f32 to vector<1x512xf32>
    %436 = arith.mulf %435, %434 : vector<1x512xf32>
    %437 = arith.addf %432, %436 : vector<1x512xf32>
    %c3_181 = arith.constant 3 : index
    %c1_182 = arith.constant 1 : index
    %438 = memref.load %arg2[%c3_181, %c1_182] : memref<4x4xf32, #tpu.memory_space<smem>>
    %439 = vector.extract_strided_slice %396 {offsets = [3, 0], sizes = [1, 512], strides = [1, 1]} : vector<4x512xf32> to vector<1x512xf32>
    %440 = vector.broadcast %438 : f32 to vector<1x512xf32>
    %441 = arith.mulf %440, %439 : vector<1x512xf32>
    %442 = arith.addf %437, %441 : vector<1x512xf32>
    %c1_183 = arith.constant 1 : index
    %443 = memref.load %arg3[%c1_183] : memref<4xf32, #tpu.memory_space<smem>>
    %c3_184 = arith.constant 3 : index
    %c1_185 = arith.constant 1 : index
    %444 = memref.load %arg4[%c3_184, %c1_185] : memref<8x4xf32, #tpu.memory_space<smem>>
    %445 = arith.addf %443, %444 : f32
    %446 = vector.broadcast %445 : f32 to vector<1x512xf32>
    %447 = arith.addf %442, %446 : vector<1x512xf32>
    %448 = vector.extract_strided_slice %391 {offsets = [1, 0], sizes = [1, 512], strides = [1, 1]} : vector<4x512xf32> to vector<1x512xf32>
    %449 = arith.subf %447, %448 : vector<1x512xf32>
    %450 = arith.mulf %449, %449 : vector<1x512xf32>
    %451 = arith.addf %423, %450 : vector<1x512xf32>
    %c0_186 = arith.constant 0 : index
    %c2_187 = arith.constant 2 : index
    %452 = memref.load %arg2[%c0_186, %c2_187] : memref<4x4xf32, #tpu.memory_space<smem>>
    %453 = vector.extract_strided_slice %396 {offsets = [0, 0], sizes = [1, 512], strides = [1, 1]} : vector<4x512xf32> to vector<1x512xf32>
    %454 = vector.broadcast %452 : f32 to vector<1x512xf32>
    %455 = arith.mulf %454, %453 : vector<1x512xf32>
    %c1_188 = arith.constant 1 : index
    %c2_189 = arith.constant 2 : index
    %456 = memref.load %arg2[%c1_188, %c2_189] : memref<4x4xf32, #tpu.memory_space<smem>>
    %457 = vector.extract_strided_slice %396 {offsets = [1, 0], sizes = [1, 512], strides = [1, 1]} : vector<4x512xf32> to vector<1x512xf32>
    %458 = vector.broadcast %456 : f32 to vector<1x512xf32>
    %459 = arith.mulf %458, %457 : vector<1x512xf32>
    %460 = arith.addf %455, %459 : vector<1x512xf32>
    %c2_190 = arith.constant 2 : index
    %c2_191 = arith.constant 2 : index
    %461 = memref.load %arg2[%c2_190, %c2_191] : memref<4x4xf32, #tpu.memory_space<smem>>
    %462 = vector.extract_strided_slice %396 {offsets = [2, 0], sizes = [1, 512], strides = [1, 1]} : vector<4x512xf32> to vector<1x512xf32>
    %463 = vector.broadcast %461 : f32 to vector<1x512xf32>
    %464 = arith.mulf %463, %462 : vector<1x512xf32>
    %465 = arith.addf %460, %464 : vector<1x512xf32>
    %c3_192 = arith.constant 3 : index
    %c2_193 = arith.constant 2 : index
    %466 = memref.load %arg2[%c3_192, %c2_193] : memref<4x4xf32, #tpu.memory_space<smem>>
    %467 = vector.extract_strided_slice %396 {offsets = [3, 0], sizes = [1, 512], strides = [1, 1]} : vector<4x512xf32> to vector<1x512xf32>
    %468 = vector.broadcast %466 : f32 to vector<1x512xf32>
    %469 = arith.mulf %468, %467 : vector<1x512xf32>
    %470 = arith.addf %465, %469 : vector<1x512xf32>
    %c2_194 = arith.constant 2 : index
    %471 = memref.load %arg3[%c2_194] : memref<4xf32, #tpu.memory_space<smem>>
    %c3_195 = arith.constant 3 : index
    %c2_196 = arith.constant 2 : index
    %472 = memref.load %arg4[%c3_195, %c2_196] : memref<8x4xf32, #tpu.memory_space<smem>>
    %473 = arith.addf %471, %472 : f32
    %474 = vector.broadcast %473 : f32 to vector<1x512xf32>
    %475 = arith.addf %470, %474 : vector<1x512xf32>
    %476 = vector.extract_strided_slice %391 {offsets = [2, 0], sizes = [1, 512], strides = [1, 1]} : vector<4x512xf32> to vector<1x512xf32>
    %477 = arith.subf %475, %476 : vector<1x512xf32>
    %478 = arith.mulf %477, %477 : vector<1x512xf32>
    %479 = arith.addf %451, %478 : vector<1x512xf32>
    %c0_197 = arith.constant 0 : index
    %c3_198 = arith.constant 3 : index
    %480 = memref.load %arg2[%c0_197, %c3_198] : memref<4x4xf32, #tpu.memory_space<smem>>
    %481 = vector.extract_strided_slice %396 {offsets = [0, 0], sizes = [1, 512], strides = [1, 1]} : vector<4x512xf32> to vector<1x512xf32>
    %482 = vector.broadcast %480 : f32 to vector<1x512xf32>
    %483 = arith.mulf %482, %481 : vector<1x512xf32>
    %c1_199 = arith.constant 1 : index
    %c3_200 = arith.constant 3 : index
    %484 = memref.load %arg2[%c1_199, %c3_200] : memref<4x4xf32, #tpu.memory_space<smem>>
    %485 = vector.extract_strided_slice %396 {offsets = [1, 0], sizes = [1, 512], strides = [1, 1]} : vector<4x512xf32> to vector<1x512xf32>
    %486 = vector.broadcast %484 : f32 to vector<1x512xf32>
    %487 = arith.mulf %486, %485 : vector<1x512xf32>
    %488 = arith.addf %483, %487 : vector<1x512xf32>
    %c2_201 = arith.constant 2 : index
    %c3_202 = arith.constant 3 : index
    %489 = memref.load %arg2[%c2_201, %c3_202] : memref<4x4xf32, #tpu.memory_space<smem>>
    %490 = vector.extract_strided_slice %396 {offsets = [2, 0], sizes = [1, 512], strides = [1, 1]} : vector<4x512xf32> to vector<1x512xf32>
    %491 = vector.broadcast %489 : f32 to vector<1x512xf32>
    %492 = arith.mulf %491, %490 : vector<1x512xf32>
    %493 = arith.addf %488, %492 : vector<1x512xf32>
    %c3_203 = arith.constant 3 : index
    %c3_204 = arith.constant 3 : index
    %494 = memref.load %arg2[%c3_203, %c3_204] : memref<4x4xf32, #tpu.memory_space<smem>>
    %495 = vector.extract_strided_slice %396 {offsets = [3, 0], sizes = [1, 512], strides = [1, 1]} : vector<4x512xf32> to vector<1x512xf32>
    %496 = vector.broadcast %494 : f32 to vector<1x512xf32>
    %497 = arith.mulf %496, %495 : vector<1x512xf32>
    %498 = arith.addf %493, %497 : vector<1x512xf32>
    %c3_205 = arith.constant 3 : index
    %499 = memref.load %arg3[%c3_205] : memref<4xf32, #tpu.memory_space<smem>>
    %c3_206 = arith.constant 3 : index
    %c3_207 = arith.constant 3 : index
    %500 = memref.load %arg4[%c3_206, %c3_207] : memref<8x4xf32, #tpu.memory_space<smem>>
    %501 = arith.addf %499, %500 : f32
    %502 = vector.broadcast %501 : f32 to vector<1x512xf32>
    %503 = arith.addf %498, %502 : vector<1x512xf32>
    %504 = vector.extract_strided_slice %391 {offsets = [3, 0], sizes = [1, 512], strides = [1, 1]} : vector<4x512xf32> to vector<1x512xf32>
    %505 = arith.subf %503, %504 : vector<1x512xf32>
    %506 = arith.mulf %505, %505 : vector<1x512xf32>
    %507 = arith.addf %479, %506 : vector<1x512xf32>
    %508 = vector.shape_cast %507 : vector<1x512xf32> to vector<1x1x512xf32>
    %cst_208 = arith.constant dense<0.000000e+00> : vector<1xf32>
    %509 = vector.multi_reduction <add>, %508, %cst_208 [1, 2] : vector<1x1x512xf32> to vector<1xf32>
    %510 = vector.shape_cast %509 : vector<1xf32> to vector<1x1x1xf32>
    %511 = vector.extract %510[0, 0, 0] : f32 from vector<1x1x1xf32>
    %cst_209 = arith.constant 4.8828125E-4 : f32
    %512 = arith.mulf %511, %cst_209 : f32
    %513 = vector.broadcast %512 : f32 to vector<8x128xf32>
    %c3_210 = arith.constant 3 : index
    %c0_211 = arith.constant 0 : index
    %c0_212 = arith.constant 0 : index
    %514 = vector.load %arg7[%c3_210, %c0_211, %c0_212] : memref<8x8x128xf32, #tpu.memory_space<vmem>>, vector<1x8x128xf32>
    %515 = vector.shape_cast %514 : vector<1x8x128xf32> to vector<8x128xf32>
    %516 = vector.shape_cast %513 : vector<8x128xf32> to vector<1x8x128xf32>
    tpu.vector_store %arg7[%c3_210, %c0_211, %c0_212], %516 {strides = array<i32>} : memref<8x8x128xf32, #tpu.memory_space<vmem>>, vector<1x8x128xf32>,
    %c4 = arith.constant 4 : index
    %517 = memref.load %arg0[%c4] : memref<8xf32, #tpu.memory_space<smem>>
    %c4_213 = arith.constant 4 : index
    %518 = memref.load %arg1[%c4_213] : memref<8xf32, #tpu.memory_space<smem>>
    %c4_214 = arith.constant 4 : index
    %c0_215 = arith.constant 0 : index
    %c0_216 = arith.constant 0 : index
    %519 = vector.load %arg6[%c4_214, %c0_215, %c0_216] : memref<8x4x512xf32, #tpu.memory_space<vmem>>, vector<1x4x512xf32>
    %520 = vector.shape_cast %519 : vector<1x4x512xf32> to vector<4x512xf32>
    %521 = vector.broadcast %517 : f32 to vector<4x512xf32>
    %522 = arith.mulf %521, %0 : vector<4x512xf32>
    %523 = vector.broadcast %518 : f32 to vector<4x512xf32>
    %524 = arith.mulf %523, %520 : vector<4x512xf32>
    %525 = arith.addf %522, %524 : vector<4x512xf32>
    %c0_217 = arith.constant 0 : index
    %c0_218 = arith.constant 0 : index
    %526 = memref.load %arg2[%c0_217, %c0_218] : memref<4x4xf32, #tpu.memory_space<smem>>
    %527 = vector.extract_strided_slice %525 {offsets = [0, 0], sizes = [1, 512], strides = [1, 1]} : vector<4x512xf32> to vector<1x512xf32>
    %528 = vector.broadcast %526 : f32 to vector<1x512xf32>
    %529 = arith.mulf %528, %527 : vector<1x512xf32>
    %c1_219 = arith.constant 1 : index
    %c0_220 = arith.constant 0 : index
    %530 = memref.load %arg2[%c1_219, %c0_220] : memref<4x4xf32, #tpu.memory_space<smem>>
    %531 = vector.extract_strided_slice %525 {offsets = [1, 0], sizes = [1, 512], strides = [1, 1]} : vector<4x512xf32> to vector<1x512xf32>
    %532 = vector.broadcast %530 : f32 to vector<1x512xf32>
    %533 = arith.mulf %532, %531 : vector<1x512xf32>
    %534 = arith.addf %529, %533 : vector<1x512xf32>
    %c2_221 = arith.constant 2 : index
    %c0_222 = arith.constant 0 : index
    %535 = memref.load %arg2[%c2_221, %c0_222] : memref<4x4xf32, #tpu.memory_space<smem>>
    %536 = vector.extract_strided_slice %525 {offsets = [2, 0], sizes = [1, 512], strides = [1, 1]} : vector<4x512xf32> to vector<1x512xf32>
    %537 = vector.broadcast %535 : f32 to vector<1x512xf32>
    %538 = arith.mulf %537, %536 : vector<1x512xf32>
    %539 = arith.addf %534, %538 : vector<1x512xf32>
    %c3_223 = arith.constant 3 : index
    %c0_224 = arith.constant 0 : index
    %540 = memref.load %arg2[%c3_223, %c0_224] : memref<4x4xf32, #tpu.memory_space<smem>>
    %541 = vector.extract_strided_slice %525 {offsets = [3, 0], sizes = [1, 512], strides = [1, 1]} : vector<4x512xf32> to vector<1x512xf32>
    %542 = vector.broadcast %540 : f32 to vector<1x512xf32>
    %543 = arith.mulf %542, %541 : vector<1x512xf32>
    %544 = arith.addf %539, %543 : vector<1x512xf32>
    %c0_225 = arith.constant 0 : index
    %545 = memref.load %arg3[%c0_225] : memref<4xf32, #tpu.memory_space<smem>>
    %c4_226 = arith.constant 4 : index
    %c0_227 = arith.constant 0 : index
    %546 = memref.load %arg4[%c4_226, %c0_227] : memref<8x4xf32, #tpu.memory_space<smem>>
    %547 = arith.addf %545, %546 : f32
    %548 = vector.broadcast %547 : f32 to vector<1x512xf32>
    %549 = arith.addf %544, %548 : vector<1x512xf32>
    %550 = vector.extract_strided_slice %520 {offsets = [0, 0], sizes = [1, 512], strides = [1, 1]} : vector<4x512xf32> to vector<1x512xf32>
    %551 = arith.subf %549, %550 : vector<1x512xf32>
    %552 = arith.mulf %551, %551 : vector<1x512xf32>
    %c0_228 = arith.constant 0 : index
    %c1_229 = arith.constant 1 : index
    %553 = memref.load %arg2[%c0_228, %c1_229] : memref<4x4xf32, #tpu.memory_space<smem>>
    %554 = vector.extract_strided_slice %525 {offsets = [0, 0], sizes = [1, 512], strides = [1, 1]} : vector<4x512xf32> to vector<1x512xf32>
    %555 = vector.broadcast %553 : f32 to vector<1x512xf32>
    %556 = arith.mulf %555, %554 : vector<1x512xf32>
    %c1_230 = arith.constant 1 : index
    %c1_231 = arith.constant 1 : index
    %557 = memref.load %arg2[%c1_230, %c1_231] : memref<4x4xf32, #tpu.memory_space<smem>>
    %558 = vector.extract_strided_slice %525 {offsets = [1, 0], sizes = [1, 512], strides = [1, 1]} : vector<4x512xf32> to vector<1x512xf32>
    %559 = vector.broadcast %557 : f32 to vector<1x512xf32>
    %560 = arith.mulf %559, %558 : vector<1x512xf32>
    %561 = arith.addf %556, %560 : vector<1x512xf32>
    %c2_232 = arith.constant 2 : index
    %c1_233 = arith.constant 1 : index
    %562 = memref.load %arg2[%c2_232, %c1_233] : memref<4x4xf32, #tpu.memory_space<smem>>
    %563 = vector.extract_strided_slice %525 {offsets = [2, 0], sizes = [1, 512], strides = [1, 1]} : vector<4x512xf32> to vector<1x512xf32>
    %564 = vector.broadcast %562 : f32 to vector<1x512xf32>
    %565 = arith.mulf %564, %563 : vector<1x512xf32>
    %566 = arith.addf %561, %565 : vector<1x512xf32>
    %c3_234 = arith.constant 3 : index
    %c1_235 = arith.constant 1 : index
    %567 = memref.load %arg2[%c3_234, %c1_235] : memref<4x4xf32, #tpu.memory_space<smem>>
    %568 = vector.extract_strided_slice %525 {offsets = [3, 0], sizes = [1, 512], strides = [1, 1]} : vector<4x512xf32> to vector<1x512xf32>
    %569 = vector.broadcast %567 : f32 to vector<1x512xf32>
    %570 = arith.mulf %569, %568 : vector<1x512xf32>
    %571 = arith.addf %566, %570 : vector<1x512xf32>
    %c1_236 = arith.constant 1 : index
    %572 = memref.load %arg3[%c1_236] : memref<4xf32, #tpu.memory_space<smem>>
    %c4_237 = arith.constant 4 : index
    %c1_238 = arith.constant 1 : index
    %573 = memref.load %arg4[%c4_237, %c1_238] : memref<8x4xf32, #tpu.memory_space<smem>>
    %574 = arith.addf %572, %573 : f32
    %575 = vector.broadcast %574 : f32 to vector<1x512xf32>
    %576 = arith.addf %571, %575 : vector<1x512xf32>
    %577 = vector.extract_strided_slice %520 {offsets = [1, 0], sizes = [1, 512], strides = [1, 1]} : vector<4x512xf32> to vector<1x512xf32>
    %578 = arith.subf %576, %577 : vector<1x512xf32>
    %579 = arith.mulf %578, %578 : vector<1x512xf32>
    %580 = arith.addf %552, %579 : vector<1x512xf32>
    %c0_239 = arith.constant 0 : index
    %c2_240 = arith.constant 2 : index
    %581 = memref.load %arg2[%c0_239, %c2_240] : memref<4x4xf32, #tpu.memory_space<smem>>
    %582 = vector.extract_strided_slice %525 {offsets = [0, 0], sizes = [1, 512], strides = [1, 1]} : vector<4x512xf32> to vector<1x512xf32>
    %583 = vector.broadcast %581 : f32 to vector<1x512xf32>
    %584 = arith.mulf %583, %582 : vector<1x512xf32>
    %c1_241 = arith.constant 1 : index
    %c2_242 = arith.constant 2 : index
    %585 = memref.load %arg2[%c1_241, %c2_242] : memref<4x4xf32, #tpu.memory_space<smem>>
    %586 = vector.extract_strided_slice %525 {offsets = [1, 0], sizes = [1, 512], strides = [1, 1]} : vector<4x512xf32> to vector<1x512xf32>
    %587 = vector.broadcast %585 : f32 to vector<1x512xf32>
    %588 = arith.mulf %587, %586 : vector<1x512xf32>
    %589 = arith.addf %584, %588 : vector<1x512xf32>
    %c2_243 = arith.constant 2 : index
    %c2_244 = arith.constant 2 : index
    %590 = memref.load %arg2[%c2_243, %c2_244] : memref<4x4xf32, #tpu.memory_space<smem>>
    %591 = vector.extract_strided_slice %525 {offsets = [2, 0], sizes = [1, 512], strides = [1, 1]} : vector<4x512xf32> to vector<1x512xf32>
    %592 = vector.broadcast %590 : f32 to vector<1x512xf32>
    %593 = arith.mulf %592, %591 : vector<1x512xf32>
    %594 = arith.addf %589, %593 : vector<1x512xf32>
    %c3_245 = arith.constant 3 : index
    %c2_246 = arith.constant 2 : index
    %595 = memref.load %arg2[%c3_245, %c2_246] : memref<4x4xf32, #tpu.memory_space<smem>>
    %596 = vector.extract_strided_slice %525 {offsets = [3, 0], sizes = [1, 512], strides = [1, 1]} : vector<4x512xf32> to vector<1x512xf32>
    %597 = vector.broadcast %595 : f32 to vector<1x512xf32>
    %598 = arith.mulf %597, %596 : vector<1x512xf32>
    %599 = arith.addf %594, %598 : vector<1x512xf32>
    %c2_247 = arith.constant 2 : index
    %600 = memref.load %arg3[%c2_247] : memref<4xf32, #tpu.memory_space<smem>>
    %c4_248 = arith.constant 4 : index
    %c2_249 = arith.constant 2 : index
    %601 = memref.load %arg4[%c4_248, %c2_249] : memref<8x4xf32, #tpu.memory_space<smem>>
    %602 = arith.addf %600, %601 : f32
    %603 = vector.broadcast %602 : f32 to vector<1x512xf32>
    %604 = arith.addf %599, %603 : vector<1x512xf32>
    %605 = vector.extract_strided_slice %520 {offsets = [2, 0], sizes = [1, 512], strides = [1, 1]} : vector<4x512xf32> to vector<1x512xf32>
    %606 = arith.subf %604, %605 : vector<1x512xf32>
    %607 = arith.mulf %606, %606 : vector<1x512xf32>
    %608 = arith.addf %580, %607 : vector<1x512xf32>
    %c0_250 = arith.constant 0 : index
    %c3_251 = arith.constant 3 : index
    %609 = memref.load %arg2[%c0_250, %c3_251] : memref<4x4xf32, #tpu.memory_space<smem>>
    %610 = vector.extract_strided_slice %525 {offsets = [0, 0], sizes = [1, 512], strides = [1, 1]} : vector<4x512xf32> to vector<1x512xf32>
    %611 = vector.broadcast %609 : f32 to vector<1x512xf32>
    %612 = arith.mulf %611, %610 : vector<1x512xf32>
    %c1_252 = arith.constant 1 : index
    %c3_253 = arith.constant 3 : index
    %613 = memref.load %arg2[%c1_252, %c3_253] : memref<4x4xf32, #tpu.memory_space<smem>>
    %614 = vector.extract_strided_slice %525 {offsets = [1, 0], sizes = [1, 512], strides = [1, 1]} : vector<4x512xf32> to vector<1x512xf32>
    %615 = vector.broadcast %613 : f32 to vector<1x512xf32>
    %616 = arith.mulf %615, %614 : vector<1x512xf32>
    %617 = arith.addf %612, %616 : vector<1x512xf32>
    %c2_254 = arith.constant 2 : index
    %c3_255 = arith.constant 3 : index
    %618 = memref.load %arg2[%c2_254, %c3_255] : memref<4x4xf32, #tpu.memory_space<smem>>
    %619 = vector.extract_strided_slice %525 {offsets = [2, 0], sizes = [1, 512], strides = [1, 1]} : vector<4x512xf32> to vector<1x512xf32>
    %620 = vector.broadcast %618 : f32 to vector<1x512xf32>
    %621 = arith.mulf %620, %619 : vector<1x512xf32>
    %622 = arith.addf %617, %621 : vector<1x512xf32>
    %c3_256 = arith.constant 3 : index
    %c3_257 = arith.constant 3 : index
    %623 = memref.load %arg2[%c3_256, %c3_257] : memref<4x4xf32, #tpu.memory_space<smem>>
    %624 = vector.extract_strided_slice %525 {offsets = [3, 0], sizes = [1, 512], strides = [1, 1]} : vector<4x512xf32> to vector<1x512xf32>
    %625 = vector.broadcast %623 : f32 to vector<1x512xf32>
    %626 = arith.mulf %625, %624 : vector<1x512xf32>
    %627 = arith.addf %622, %626 : vector<1x512xf32>
    %c3_258 = arith.constant 3 : index
    %628 = memref.load %arg3[%c3_258] : memref<4xf32, #tpu.memory_space<smem>>
    %c4_259 = arith.constant 4 : index
    %c3_260 = arith.constant 3 : index
    %629 = memref.load %arg4[%c4_259, %c3_260] : memref<8x4xf32, #tpu.memory_space<smem>>
    %630 = arith.addf %628, %629 : f32
    %631 = vector.broadcast %630 : f32 to vector<1x512xf32>
    %632 = arith.addf %627, %631 : vector<1x512xf32>
    %633 = vector.extract_strided_slice %520 {offsets = [3, 0], sizes = [1, 512], strides = [1, 1]} : vector<4x512xf32> to vector<1x512xf32>
    %634 = arith.subf %632, %633 : vector<1x512xf32>
    %635 = arith.mulf %634, %634 : vector<1x512xf32>
    %636 = arith.addf %608, %635 : vector<1x512xf32>
    %637 = vector.shape_cast %636 : vector<1x512xf32> to vector<1x1x512xf32>
    %cst_261 = arith.constant dense<0.000000e+00> : vector<1xf32>
    %638 = vector.multi_reduction <add>, %637, %cst_261 [1, 2] : vector<1x1x512xf32> to vector<1xf32>
    %639 = vector.shape_cast %638 : vector<1xf32> to vector<1x1x1xf32>
    %640 = vector.extract %639[0, 0, 0] : f32 from vector<1x1x1xf32>
    %cst_262 = arith.constant 4.8828125E-4 : f32
    %641 = arith.mulf %640, %cst_262 : f32
    %642 = vector.broadcast %641 : f32 to vector<8x128xf32>
    %c4_263 = arith.constant 4 : index
    %c0_264 = arith.constant 0 : index
    %c0_265 = arith.constant 0 : index
    %643 = vector.load %arg7[%c4_263, %c0_264, %c0_265] : memref<8x8x128xf32, #tpu.memory_space<vmem>>, vector<1x8x128xf32>
    %644 = vector.shape_cast %643 : vector<1x8x128xf32> to vector<8x128xf32>
    %645 = vector.shape_cast %642 : vector<8x128xf32> to vector<1x8x128xf32>
    tpu.vector_store %arg7[%c4_263, %c0_264, %c0_265], %645 {strides = array<i32>} : memref<8x8x128xf32, #tpu.memory_space<vmem>>, vector<1x8x128xf32>,
    %c5 = arith.constant 5 : index
    %646 = memref.load %arg0[%c5] : memref<8xf32, #tpu.memory_space<smem>>
    %c5_266 = arith.constant 5 : index
    %647 = memref.load %arg1[%c5_266] : memref<8xf32, #tpu.memory_space<smem>>
    %c5_267 = arith.constant 5 : index
    %c0_268 = arith.constant 0 : index
    %c0_269 = arith.constant 0 : index
    %648 = vector.load %arg6[%c5_267, %c0_268, %c0_269] : memref<8x4x512xf32, #tpu.memory_space<vmem>>, vector<1x4x512xf32>
    %649 = vector.shape_cast %648 : vector<1x4x512xf32> to vector<4x512xf32>
    %650 = vector.broadcast %646 : f32 to vector<4x512xf32>
    %651 = arith.mulf %650, %0 : vector<4x512xf32>
    %652 = vector.broadcast %647 : f32 to vector<4x512xf32>
    %653 = arith.mulf %652, %649 : vector<4x512xf32>
    %654 = arith.addf %651, %653 : vector<4x512xf32>
    %c0_270 = arith.constant 0 : index
    %c0_271 = arith.constant 0 : index
    %655 = memref.load %arg2[%c0_270, %c0_271] : memref<4x4xf32, #tpu.memory_space<smem>>
    %656 = vector.extract_strided_slice %654 {offsets = [0, 0], sizes = [1, 512], strides = [1, 1]} : vector<4x512xf32> to vector<1x512xf32>
    %657 = vector.broadcast %655 : f32 to vector<1x512xf32>
    %658 = arith.mulf %657, %656 : vector<1x512xf32>
    %c1_272 = arith.constant 1 : index
    %c0_273 = arith.constant 0 : index
    %659 = memref.load %arg2[%c1_272, %c0_273] : memref<4x4xf32, #tpu.memory_space<smem>>
    %660 = vector.extract_strided_slice %654 {offsets = [1, 0], sizes = [1, 512], strides = [1, 1]} : vector<4x512xf32> to vector<1x512xf32>
    %661 = vector.broadcast %659 : f32 to vector<1x512xf32>
    %662 = arith.mulf %661, %660 : vector<1x512xf32>
    %663 = arith.addf %658, %662 : vector<1x512xf32>
    %c2_274 = arith.constant 2 : index
    %c0_275 = arith.constant 0 : index
    %664 = memref.load %arg2[%c2_274, %c0_275] : memref<4x4xf32, #tpu.memory_space<smem>>
    %665 = vector.extract_strided_slice %654 {offsets = [2, 0], sizes = [1, 512], strides = [1, 1]} : vector<4x512xf32> to vector<1x512xf32>
    %666 = vector.broadcast %664 : f32 to vector<1x512xf32>
    %667 = arith.mulf %666, %665 : vector<1x512xf32>
    %668 = arith.addf %663, %667 : vector<1x512xf32>
    %c3_276 = arith.constant 3 : index
    %c0_277 = arith.constant 0 : index
    %669 = memref.load %arg2[%c3_276, %c0_277] : memref<4x4xf32, #tpu.memory_space<smem>>
    %670 = vector.extract_strided_slice %654 {offsets = [3, 0], sizes = [1, 512], strides = [1, 1]} : vector<4x512xf32> to vector<1x512xf32>
    %671 = vector.broadcast %669 : f32 to vector<1x512xf32>
    %672 = arith.mulf %671, %670 : vector<1x512xf32>
    %673 = arith.addf %668, %672 : vector<1x512xf32>
    %c0_278 = arith.constant 0 : index
    %674 = memref.load %arg3[%c0_278] : memref<4xf32, #tpu.memory_space<smem>>
    %c5_279 = arith.constant 5 : index
    %c0_280 = arith.constant 0 : index
    %675 = memref.load %arg4[%c5_279, %c0_280] : memref<8x4xf32, #tpu.memory_space<smem>>
    %676 = arith.addf %674, %675 : f32
    %677 = vector.broadcast %676 : f32 to vector<1x512xf32>
    %678 = arith.addf %673, %677 : vector<1x512xf32>
    %679 = vector.extract_strided_slice %649 {offsets = [0, 0], sizes = [1, 512], strides = [1, 1]} : vector<4x512xf32> to vector<1x512xf32>
    %680 = arith.subf %678, %679 : vector<1x512xf32>
    %681 = arith.mulf %680, %680 : vector<1x512xf32>
    %c0_281 = arith.constant 0 : index
    %c1_282 = arith.constant 1 : index
    %682 = memref.load %arg2[%c0_281, %c1_282] : memref<4x4xf32, #tpu.memory_space<smem>>
    %683 = vector.extract_strided_slice %654 {offsets = [0, 0], sizes = [1, 512], strides = [1, 1]} : vector<4x512xf32> to vector<1x512xf32>
    %684 = vector.broadcast %682 : f32 to vector<1x512xf32>
    %685 = arith.mulf %684, %683 : vector<1x512xf32>
    %c1_283 = arith.constant 1 : index
    %c1_284 = arith.constant 1 : index
    %686 = memref.load %arg2[%c1_283, %c1_284] : memref<4x4xf32, #tpu.memory_space<smem>>
    %687 = vector.extract_strided_slice %654 {offsets = [1, 0], sizes = [1, 512], strides = [1, 1]} : vector<4x512xf32> to vector<1x512xf32>
    %688 = vector.broadcast %686 : f32 to vector<1x512xf32>
    %689 = arith.mulf %688, %687 : vector<1x512xf32>
    %690 = arith.addf %685, %689 : vector<1x512xf32>
    %c2_285 = arith.constant 2 : index
    %c1_286 = arith.constant 1 : index
    %691 = memref.load %arg2[%c2_285, %c1_286] : memref<4x4xf32, #tpu.memory_space<smem>>
    %692 = vector.extract_strided_slice %654 {offsets = [2, 0], sizes = [1, 512], strides = [1, 1]} : vector<4x512xf32> to vector<1x512xf32>
    %693 = vector.broadcast %691 : f32 to vector<1x512xf32>
    %694 = arith.mulf %693, %692 : vector<1x512xf32>
    %695 = arith.addf %690, %694 : vector<1x512xf32>
    %c3_287 = arith.constant 3 : index
    %c1_288 = arith.constant 1 : index
    %696 = memref.load %arg2[%c3_287, %c1_288] : memref<4x4xf32, #tpu.memory_space<smem>>
    %697 = vector.extract_strided_slice %654 {offsets = [3, 0], sizes = [1, 512], strides = [1, 1]} : vector<4x512xf32> to vector<1x512xf32>
    %698 = vector.broadcast %696 : f32 to vector<1x512xf32>
    %699 = arith.mulf %698, %697 : vector<1x512xf32>
    %700 = arith.addf %695, %699 : vector<1x512xf32>
    %c1_289 = arith.constant 1 : index
    %701 = memref.load %arg3[%c1_289] : memref<4xf32, #tpu.memory_space<smem>>
    %c5_290 = arith.constant 5 : index
    %c1_291 = arith.constant 1 : index
    %702 = memref.load %arg4[%c5_290, %c1_291] : memref<8x4xf32, #tpu.memory_space<smem>>
    %703 = arith.addf %701, %702 : f32
    %704 = vector.broadcast %703 : f32 to vector<1x512xf32>
    %705 = arith.addf %700, %704 : vector<1x512xf32>
    %706 = vector.extract_strided_slice %649 {offsets = [1, 0], sizes = [1, 512], strides = [1, 1]} : vector<4x512xf32> to vector<1x512xf32>
    %707 = arith.subf %705, %706 : vector<1x512xf32>
    %708 = arith.mulf %707, %707 : vector<1x512xf32>
    %709 = arith.addf %681, %708 : vector<1x512xf32>
    %c0_292 = arith.constant 0 : index
    %c2_293 = arith.constant 2 : index
    %710 = memref.load %arg2[%c0_292, %c2_293] : memref<4x4xf32, #tpu.memory_space<smem>>
    %711 = vector.extract_strided_slice %654 {offsets = [0, 0], sizes = [1, 512], strides = [1, 1]} : vector<4x512xf32> to vector<1x512xf32>
    %712 = vector.broadcast %710 : f32 to vector<1x512xf32>
    %713 = arith.mulf %712, %711 : vector<1x512xf32>
    %c1_294 = arith.constant 1 : index
    %c2_295 = arith.constant 2 : index
    %714 = memref.load %arg2[%c1_294, %c2_295] : memref<4x4xf32, #tpu.memory_space<smem>>
    %715 = vector.extract_strided_slice %654 {offsets = [1, 0], sizes = [1, 512], strides = [1, 1]} : vector<4x512xf32> to vector<1x512xf32>
    %716 = vector.broadcast %714 : f32 to vector<1x512xf32>
    %717 = arith.mulf %716, %715 : vector<1x512xf32>
    %718 = arith.addf %713, %717 : vector<1x512xf32>
    %c2_296 = arith.constant 2 : index
    %c2_297 = arith.constant 2 : index
    %719 = memref.load %arg2[%c2_296, %c2_297] : memref<4x4xf32, #tpu.memory_space<smem>>
    %720 = vector.extract_strided_slice %654 {offsets = [2, 0], sizes = [1, 512], strides = [1, 1]} : vector<4x512xf32> to vector<1x512xf32>
    %721 = vector.broadcast %719 : f32 to vector<1x512xf32>
    %722 = arith.mulf %721, %720 : vector<1x512xf32>
    %723 = arith.addf %718, %722 : vector<1x512xf32>
    %c3_298 = arith.constant 3 : index
    %c2_299 = arith.constant 2 : index
    %724 = memref.load %arg2[%c3_298, %c2_299] : memref<4x4xf32, #tpu.memory_space<smem>>
    %725 = vector.extract_strided_slice %654 {offsets = [3, 0], sizes = [1, 512], strides = [1, 1]} : vector<4x512xf32> to vector<1x512xf32>
    %726 = vector.broadcast %724 : f32 to vector<1x512xf32>
    %727 = arith.mulf %726, %725 : vector<1x512xf32>
    %728 = arith.addf %723, %727 : vector<1x512xf32>
    %c2_300 = arith.constant 2 : index
    %729 = memref.load %arg3[%c2_300] : memref<4xf32, #tpu.memory_space<smem>>
    %c5_301 = arith.constant 5 : index
    %c2_302 = arith.constant 2 : index
    %730 = memref.load %arg4[%c5_301, %c2_302] : memref<8x4xf32, #tpu.memory_space<smem>>
    %731 = arith.addf %729, %730 : f32
    %732 = vector.broadcast %731 : f32 to vector<1x512xf32>
    %733 = arith.addf %728, %732 : vector<1x512xf32>
    %734 = vector.extract_strided_slice %649 {offsets = [2, 0], sizes = [1, 512], strides = [1, 1]} : vector<4x512xf32> to vector<1x512xf32>
    %735 = arith.subf %733, %734 : vector<1x512xf32>
    %736 = arith.mulf %735, %735 : vector<1x512xf32>
    %737 = arith.addf %709, %736 : vector<1x512xf32>
    %c0_303 = arith.constant 0 : index
    %c3_304 = arith.constant 3 : index
    %738 = memref.load %arg2[%c0_303, %c3_304] : memref<4x4xf32, #tpu.memory_space<smem>>
    %739 = vector.extract_strided_slice %654 {offsets = [0, 0], sizes = [1, 512], strides = [1, 1]} : vector<4x512xf32> to vector<1x512xf32>
    %740 = vector.broadcast %738 : f32 to vector<1x512xf32>
    %741 = arith.mulf %740, %739 : vector<1x512xf32>
    %c1_305 = arith.constant 1 : index
    %c3_306 = arith.constant 3 : index
    %742 = memref.load %arg2[%c1_305, %c3_306] : memref<4x4xf32, #tpu.memory_space<smem>>
    %743 = vector.extract_strided_slice %654 {offsets = [1, 0], sizes = [1, 512], strides = [1, 1]} : vector<4x512xf32> to vector<1x512xf32>
    %744 = vector.broadcast %742 : f32 to vector<1x512xf32>
    %745 = arith.mulf %744, %743 : vector<1x512xf32>
    %746 = arith.addf %741, %745 : vector<1x512xf32>
    %c2_307 = arith.constant 2 : index
    %c3_308 = arith.constant 3 : index
    %747 = memref.load %arg2[%c2_307, %c3_308] : memref<4x4xf32, #tpu.memory_space<smem>>
    %748 = vector.extract_strided_slice %654 {offsets = [2, 0], sizes = [1, 512], strides = [1, 1]} : vector<4x512xf32> to vector<1x512xf32>
    %749 = vector.broadcast %747 : f32 to vector<1x512xf32>
    %750 = arith.mulf %749, %748 : vector<1x512xf32>
    %751 = arith.addf %746, %750 : vector<1x512xf32>
    %c3_309 = arith.constant 3 : index
    %c3_310 = arith.constant 3 : index
    %752 = memref.load %arg2[%c3_309, %c3_310] : memref<4x4xf32, #tpu.memory_space<smem>>
    %753 = vector.extract_strided_slice %654 {offsets = [3, 0], sizes = [1, 512], strides = [1, 1]} : vector<4x512xf32> to vector<1x512xf32>
    %754 = vector.broadcast %752 : f32 to vector<1x512xf32>
    %755 = arith.mulf %754, %753 : vector<1x512xf32>
    %756 = arith.addf %751, %755 : vector<1x512xf32>
    %c3_311 = arith.constant 3 : index
    %757 = memref.load %arg3[%c3_311] : memref<4xf32, #tpu.memory_space<smem>>
    %c5_312 = arith.constant 5 : index
    %c3_313 = arith.constant 3 : index
    %758 = memref.load %arg4[%c5_312, %c3_313] : memref<8x4xf32, #tpu.memory_space<smem>>
    %759 = arith.addf %757, %758 : f32
    %760 = vector.broadcast %759 : f32 to vector<1x512xf32>
    %761 = arith.addf %756, %760 : vector<1x512xf32>
    %762 = vector.extract_strided_slice %649 {offsets = [3, 0], sizes = [1, 512], strides = [1, 1]} : vector<4x512xf32> to vector<1x512xf32>
    %763 = arith.subf %761, %762 : vector<1x512xf32>
    %764 = arith.mulf %763, %763 : vector<1x512xf32>
    %765 = arith.addf %737, %764 : vector<1x512xf32>
    %766 = vector.shape_cast %765 : vector<1x512xf32> to vector<1x1x512xf32>
    %cst_314 = arith.constant dense<0.000000e+00> : vector<1xf32>
    %767 = vector.multi_reduction <add>, %766, %cst_314 [1, 2] : vector<1x1x512xf32> to vector<1xf32>
    %768 = vector.shape_cast %767 : vector<1xf32> to vector<1x1x1xf32>
    %769 = vector.extract %768[0, 0, 0] : f32 from vector<1x1x1xf32>
    %cst_315 = arith.constant 4.8828125E-4 : f32
    %770 = arith.mulf %769, %cst_315 : f32
    %771 = vector.broadcast %770 : f32 to vector<8x128xf32>
    %c5_316 = arith.constant 5 : index
    %c0_317 = arith.constant 0 : index
    %c0_318 = arith.constant 0 : index
    %772 = vector.load %arg7[%c5_316, %c0_317, %c0_318] : memref<8x8x128xf32, #tpu.memory_space<vmem>>, vector<1x8x128xf32>
    %773 = vector.shape_cast %772 : vector<1x8x128xf32> to vector<8x128xf32>
    %774 = vector.shape_cast %771 : vector<8x128xf32> to vector<1x8x128xf32>
    tpu.vector_store %arg7[%c5_316, %c0_317, %c0_318], %774 {strides = array<i32>} : memref<8x8x128xf32, #tpu.memory_space<vmem>>, vector<1x8x128xf32>,
    %c6 = arith.constant 6 : index
    %775 = memref.load %arg0[%c6] : memref<8xf32, #tpu.memory_space<smem>>
    %c6_319 = arith.constant 6 : index
    %776 = memref.load %arg1[%c6_319] : memref<8xf32, #tpu.memory_space<smem>>
    %c6_320 = arith.constant 6 : index
    %c0_321 = arith.constant 0 : index
    %c0_322 = arith.constant 0 : index
    %777 = vector.load %arg6[%c6_320, %c0_321, %c0_322] : memref<8x4x512xf32, #tpu.memory_space<vmem>>, vector<1x4x512xf32>
    %778 = vector.shape_cast %777 : vector<1x4x512xf32> to vector<4x512xf32>
    %779 = vector.broadcast %775 : f32 to vector<4x512xf32>
    %780 = arith.mulf %779, %0 : vector<4x512xf32>
    %781 = vector.broadcast %776 : f32 to vector<4x512xf32>
    %782 = arith.mulf %781, %778 : vector<4x512xf32>
    %783 = arith.addf %780, %782 : vector<4x512xf32>
    %c0_323 = arith.constant 0 : index
    %c0_324 = arith.constant 0 : index
    %784 = memref.load %arg2[%c0_323, %c0_324] : memref<4x4xf32, #tpu.memory_space<smem>>
    %785 = vector.extract_strided_slice %783 {offsets = [0, 0], sizes = [1, 512], strides = [1, 1]} : vector<4x512xf32> to vector<1x512xf32>
    %786 = vector.broadcast %784 : f32 to vector<1x512xf32>
    %787 = arith.mulf %786, %785 : vector<1x512xf32>
    %c1_325 = arith.constant 1 : index
    %c0_326 = arith.constant 0 : index
    %788 = memref.load %arg2[%c1_325, %c0_326] : memref<4x4xf32, #tpu.memory_space<smem>>
    %789 = vector.extract_strided_slice %783 {offsets = [1, 0], sizes = [1, 512], strides = [1, 1]} : vector<4x512xf32> to vector<1x512xf32>
    %790 = vector.broadcast %788 : f32 to vector<1x512xf32>
    %791 = arith.mulf %790, %789 : vector<1x512xf32>
    %792 = arith.addf %787, %791 : vector<1x512xf32>
    %c2_327 = arith.constant 2 : index
    %c0_328 = arith.constant 0 : index
    %793 = memref.load %arg2[%c2_327, %c0_328] : memref<4x4xf32, #tpu.memory_space<smem>>
    %794 = vector.extract_strided_slice %783 {offsets = [2, 0], sizes = [1, 512], strides = [1, 1]} : vector<4x512xf32> to vector<1x512xf32>
    %795 = vector.broadcast %793 : f32 to vector<1x512xf32>
    %796 = arith.mulf %795, %794 : vector<1x512xf32>
    %797 = arith.addf %792, %796 : vector<1x512xf32>
    %c3_329 = arith.constant 3 : index
    %c0_330 = arith.constant 0 : index
    %798 = memref.load %arg2[%c3_329, %c0_330] : memref<4x4xf32, #tpu.memory_space<smem>>
    %799 = vector.extract_strided_slice %783 {offsets = [3, 0], sizes = [1, 512], strides = [1, 1]} : vector<4x512xf32> to vector<1x512xf32>
    %800 = vector.broadcast %798 : f32 to vector<1x512xf32>
    %801 = arith.mulf %800, %799 : vector<1x512xf32>
    %802 = arith.addf %797, %801 : vector<1x512xf32>
    %c0_331 = arith.constant 0 : index
    %803 = memref.load %arg3[%c0_331] : memref<4xf32, #tpu.memory_space<smem>>
    %c6_332 = arith.constant 6 : index
    %c0_333 = arith.constant 0 : index
    %804 = memref.load %arg4[%c6_332, %c0_333] : memref<8x4xf32, #tpu.memory_space<smem>>
    %805 = arith.addf %803, %804 : f32
    %806 = vector.broadcast %805 : f32 to vector<1x512xf32>
    %807 = arith.addf %802, %806 : vector<1x512xf32>
    %808 = vector.extract_strided_slice %778 {offsets = [0, 0], sizes = [1, 512], strides = [1, 1]} : vector<4x512xf32> to vector<1x512xf32>
    %809 = arith.subf %807, %808 : vector<1x512xf32>
    %810 = arith.mulf %809, %809 : vector<1x512xf32>
    %c0_334 = arith.constant 0 : index
    %c1_335 = arith.constant 1 : index
    %811 = memref.load %arg2[%c0_334, %c1_335] : memref<4x4xf32, #tpu.memory_space<smem>>
    %812 = vector.extract_strided_slice %783 {offsets = [0, 0], sizes = [1, 512], strides = [1, 1]} : vector<4x512xf32> to vector<1x512xf32>
    %813 = vector.broadcast %811 : f32 to vector<1x512xf32>
    %814 = arith.mulf %813, %812 : vector<1x512xf32>
    %c1_336 = arith.constant 1 : index
    %c1_337 = arith.constant 1 : index
    %815 = memref.load %arg2[%c1_336, %c1_337] : memref<4x4xf32, #tpu.memory_space<smem>>
    %816 = vector.extract_strided_slice %783 {offsets = [1, 0], sizes = [1, 512], strides = [1, 1]} : vector<4x512xf32> to vector<1x512xf32>
    %817 = vector.broadcast %815 : f32 to vector<1x512xf32>
    %818 = arith.mulf %817, %816 : vector<1x512xf32>
    %819 = arith.addf %814, %818 : vector<1x512xf32>
    %c2_338 = arith.constant 2 : index
    %c1_339 = arith.constant 1 : index
    %820 = memref.load %arg2[%c2_338, %c1_339] : memref<4x4xf32, #tpu.memory_space<smem>>
    %821 = vector.extract_strided_slice %783 {offsets = [2, 0], sizes = [1, 512], strides = [1, 1]} : vector<4x512xf32> to vector<1x512xf32>
    %822 = vector.broadcast %820 : f32 to vector<1x512xf32>
    %823 = arith.mulf %822, %821 : vector<1x512xf32>
    %824 = arith.addf %819, %823 : vector<1x512xf32>
    %c3_340 = arith.constant 3 : index
    %c1_341 = arith.constant 1 : index
    %825 = memref.load %arg2[%c3_340, %c1_341] : memref<4x4xf32, #tpu.memory_space<smem>>
    %826 = vector.extract_strided_slice %783 {offsets = [3, 0], sizes = [1, 512], strides = [1, 1]} : vector<4x512xf32> to vector<1x512xf32>
    %827 = vector.broadcast %825 : f32 to vector<1x512xf32>
    %828 = arith.mulf %827, %826 : vector<1x512xf32>
    %829 = arith.addf %824, %828 : vector<1x512xf32>
    %c1_342 = arith.constant 1 : index
    %830 = memref.load %arg3[%c1_342] : memref<4xf32, #tpu.memory_space<smem>>
    %c6_343 = arith.constant 6 : index
    %c1_344 = arith.constant 1 : index
    %831 = memref.load %arg4[%c6_343, %c1_344] : memref<8x4xf32, #tpu.memory_space<smem>>
    %832 = arith.addf %830, %831 : f32
    %833 = vector.broadcast %832 : f32 to vector<1x512xf32>
    %834 = arith.addf %829, %833 : vector<1x512xf32>
    %835 = vector.extract_strided_slice %778 {offsets = [1, 0], sizes = [1, 512], strides = [1, 1]} : vector<4x512xf32> to vector<1x512xf32>
    %836 = arith.subf %834, %835 : vector<1x512xf32>
    %837 = arith.mulf %836, %836 : vector<1x512xf32>
    %838 = arith.addf %810, %837 : vector<1x512xf32>
    %c0_345 = arith.constant 0 : index
    %c2_346 = arith.constant 2 : index
    %839 = memref.load %arg2[%c0_345, %c2_346] : memref<4x4xf32, #tpu.memory_space<smem>>
    %840 = vector.extract_strided_slice %783 {offsets = [0, 0], sizes = [1, 512], strides = [1, 1]} : vector<4x512xf32> to vector<1x512xf32>
    %841 = vector.broadcast %839 : f32 to vector<1x512xf32>
    %842 = arith.mulf %841, %840 : vector<1x512xf32>
    %c1_347 = arith.constant 1 : index
    %c2_348 = arith.constant 2 : index
    %843 = memref.load %arg2[%c1_347, %c2_348] : memref<4x4xf32, #tpu.memory_space<smem>>
    %844 = vector.extract_strided_slice %783 {offsets = [1, 0], sizes = [1, 512], strides = [1, 1]} : vector<4x512xf32> to vector<1x512xf32>
    %845 = vector.broadcast %843 : f32 to vector<1x512xf32>
    %846 = arith.mulf %845, %844 : vector<1x512xf32>
    %847 = arith.addf %842, %846 : vector<1x512xf32>
    %c2_349 = arith.constant 2 : index
    %c2_350 = arith.constant 2 : index
    %848 = memref.load %arg2[%c2_349, %c2_350] : memref<4x4xf32, #tpu.memory_space<smem>>
    %849 = vector.extract_strided_slice %783 {offsets = [2, 0], sizes = [1, 512], strides = [1, 1]} : vector<4x512xf32> to vector<1x512xf32>
    %850 = vector.broadcast %848 : f32 to vector<1x512xf32>
    %851 = arith.mulf %850, %849 : vector<1x512xf32>
    %852 = arith.addf %847, %851 : vector<1x512xf32>
    %c3_351 = arith.constant 3 : index
    %c2_352 = arith.constant 2 : index
    %853 = memref.load %arg2[%c3_351, %c2_352] : memref<4x4xf32, #tpu.memory_space<smem>>
    %854 = vector.extract_strided_slice %783 {offsets = [3, 0], sizes = [1, 512], strides = [1, 1]} : vector<4x512xf32> to vector<1x512xf32>
    %855 = vector.broadcast %853 : f32 to vector<1x512xf32>
    %856 = arith.mulf %855, %854 : vector<1x512xf32>
    %857 = arith.addf %852, %856 : vector<1x512xf32>
    %c2_353 = arith.constant 2 : index
    %858 = memref.load %arg3[%c2_353] : memref<4xf32, #tpu.memory_space<smem>>
    %c6_354 = arith.constant 6 : index
    %c2_355 = arith.constant 2 : index
    %859 = memref.load %arg4[%c6_354, %c2_355] : memref<8x4xf32, #tpu.memory_space<smem>>
    %860 = arith.addf %858, %859 : f32
    %861 = vector.broadcast %860 : f32 to vector<1x512xf32>
    %862 = arith.addf %857, %861 : vector<1x512xf32>
    %863 = vector.extract_strided_slice %778 {offsets = [2, 0], sizes = [1, 512], strides = [1, 1]} : vector<4x512xf32> to vector<1x512xf32>
    %864 = arith.subf %862, %863 : vector<1x512xf32>
    %865 = arith.mulf %864, %864 : vector<1x512xf32>
    %866 = arith.addf %838, %865 : vector<1x512xf32>
    %c0_356 = arith.constant 0 : index
    %c3_357 = arith.constant 3 : index
    %867 = memref.load %arg2[%c0_356, %c3_357] : memref<4x4xf32, #tpu.memory_space<smem>>
    %868 = vector.extract_strided_slice %783 {offsets = [0, 0], sizes = [1, 512], strides = [1, 1]} : vector<4x512xf32> to vector<1x512xf32>
    %869 = vector.broadcast %867 : f32 to vector<1x512xf32>
    %870 = arith.mulf %869, %868 : vector<1x512xf32>
    %c1_358 = arith.constant 1 : index
    %c3_359 = arith.constant 3 : index
    %871 = memref.load %arg2[%c1_358, %c3_359] : memref<4x4xf32, #tpu.memory_space<smem>>
    %872 = vector.extract_strided_slice %783 {offsets = [1, 0], sizes = [1, 512], strides = [1, 1]} : vector<4x512xf32> to vector<1x512xf32>
    %873 = vector.broadcast %871 : f32 to vector<1x512xf32>
    %874 = arith.mulf %873, %872 : vector<1x512xf32>
    %875 = arith.addf %870, %874 : vector<1x512xf32>
    %c2_360 = arith.constant 2 : index
    %c3_361 = arith.constant 3 : index
    %876 = memref.load %arg2[%c2_360, %c3_361] : memref<4x4xf32, #tpu.memory_space<smem>>
    %877 = vector.extract_strided_slice %783 {offsets = [2, 0], sizes = [1, 512], strides = [1, 1]} : vector<4x512xf32> to vector<1x512xf32>
    %878 = vector.broadcast %876 : f32 to vector<1x512xf32>
    %879 = arith.mulf %878, %877 : vector<1x512xf32>
    %880 = arith.addf %875, %879 : vector<1x512xf32>
    %c3_362 = arith.constant 3 : index
    %c3_363 = arith.constant 3 : index
    %881 = memref.load %arg2[%c3_362, %c3_363] : memref<4x4xf32, #tpu.memory_space<smem>>
    %882 = vector.extract_strided_slice %783 {offsets = [3, 0], sizes = [1, 512], strides = [1, 1]} : vector<4x512xf32> to vector<1x512xf32>
    %883 = vector.broadcast %881 : f32 to vector<1x512xf32>
    %884 = arith.mulf %883, %882 : vector<1x512xf32>
    %885 = arith.addf %880, %884 : vector<1x512xf32>
    %c3_364 = arith.constant 3 : index
    %886 = memref.load %arg3[%c3_364] : memref<4xf32, #tpu.memory_space<smem>>
    %c6_365 = arith.constant 6 : index
    %c3_366 = arith.constant 3 : index
    %887 = memref.load %arg4[%c6_365, %c3_366] : memref<8x4xf32, #tpu.memory_space<smem>>
    %888 = arith.addf %886, %887 : f32
    %889 = vector.broadcast %888 : f32 to vector<1x512xf32>
    %890 = arith.addf %885, %889 : vector<1x512xf32>
    %891 = vector.extract_strided_slice %778 {offsets = [3, 0], sizes = [1, 512], strides = [1, 1]} : vector<4x512xf32> to vector<1x512xf32>
    %892 = arith.subf %890, %891 : vector<1x512xf32>
    %893 = arith.mulf %892, %892 : vector<1x512xf32>
    %894 = arith.addf %866, %893 : vector<1x512xf32>
    %895 = vector.shape_cast %894 : vector<1x512xf32> to vector<1x1x512xf32>
    %cst_367 = arith.constant dense<0.000000e+00> : vector<1xf32>
    %896 = vector.multi_reduction <add>, %895, %cst_367 [1, 2] : vector<1x1x512xf32> to vector<1xf32>
    %897 = vector.shape_cast %896 : vector<1xf32> to vector<1x1x1xf32>
    %898 = vector.extract %897[0, 0, 0] : f32 from vector<1x1x1xf32>
    %cst_368 = arith.constant 4.8828125E-4 : f32
    %899 = arith.mulf %898, %cst_368 : f32
    %900 = vector.broadcast %899 : f32 to vector<8x128xf32>
    %c6_369 = arith.constant 6 : index
    %c0_370 = arith.constant 0 : index
    %c0_371 = arith.constant 0 : index
    %901 = vector.load %arg7[%c6_369, %c0_370, %c0_371] : memref<8x8x128xf32, #tpu.memory_space<vmem>>, vector<1x8x128xf32>
    %902 = vector.shape_cast %901 : vector<1x8x128xf32> to vector<8x128xf32>
    %903 = vector.shape_cast %900 : vector<8x128xf32> to vector<1x8x128xf32>
    tpu.vector_store %arg7[%c6_369, %c0_370, %c0_371], %903 {strides = array<i32>} : memref<8x8x128xf32, #tpu.memory_space<vmem>>, vector<1x8x128xf32>,
    %c7 = arith.constant 7 : index
    %904 = memref.load %arg0[%c7] : memref<8xf32, #tpu.memory_space<smem>>
    %c7_372 = arith.constant 7 : index
    %905 = memref.load %arg1[%c7_372] : memref<8xf32, #tpu.memory_space<smem>>
    %c7_373 = arith.constant 7 : index
    %c0_374 = arith.constant 0 : index
    %c0_375 = arith.constant 0 : index
    %906 = vector.load %arg6[%c7_373, %c0_374, %c0_375] : memref<8x4x512xf32, #tpu.memory_space<vmem>>, vector<1x4x512xf32>
    %907 = vector.shape_cast %906 : vector<1x4x512xf32> to vector<4x512xf32>
    %908 = vector.broadcast %904 : f32 to vector<4x512xf32>
    %909 = arith.mulf %908, %0 : vector<4x512xf32>
    %910 = vector.broadcast %905 : f32 to vector<4x512xf32>
    %911 = arith.mulf %910, %907 : vector<4x512xf32>
    %912 = arith.addf %909, %911 : vector<4x512xf32>
    %c0_376 = arith.constant 0 : index
    %c0_377 = arith.constant 0 : index
    %913 = memref.load %arg2[%c0_376, %c0_377] : memref<4x4xf32, #tpu.memory_space<smem>>
    %914 = vector.extract_strided_slice %912 {offsets = [0, 0], sizes = [1, 512], strides = [1, 1]} : vector<4x512xf32> to vector<1x512xf32>
    %915 = vector.broadcast %913 : f32 to vector<1x512xf32>
    %916 = arith.mulf %915, %914 : vector<1x512xf32>
    %c1_378 = arith.constant 1 : index
    %c0_379 = arith.constant 0 : index
    %917 = memref.load %arg2[%c1_378, %c0_379] : memref<4x4xf32, #tpu.memory_space<smem>>
    %918 = vector.extract_strided_slice %912 {offsets = [1, 0], sizes = [1, 512], strides = [1, 1]} : vector<4x512xf32> to vector<1x512xf32>
    %919 = vector.broadcast %917 : f32 to vector<1x512xf32>
    %920 = arith.mulf %919, %918 : vector<1x512xf32>
    %921 = arith.addf %916, %920 : vector<1x512xf32>
    %c2_380 = arith.constant 2 : index
    %c0_381 = arith.constant 0 : index
    %922 = memref.load %arg2[%c2_380, %c0_381] : memref<4x4xf32, #tpu.memory_space<smem>>
    %923 = vector.extract_strided_slice %912 {offsets = [2, 0], sizes = [1, 512], strides = [1, 1]} : vector<4x512xf32> to vector<1x512xf32>
    %924 = vector.broadcast %922 : f32 to vector<1x512xf32>
    %925 = arith.mulf %924, %923 : vector<1x512xf32>
    %926 = arith.addf %921, %925 : vector<1x512xf32>
    %c3_382 = arith.constant 3 : index
    %c0_383 = arith.constant 0 : index
    %927 = memref.load %arg2[%c3_382, %c0_383] : memref<4x4xf32, #tpu.memory_space<smem>>
    %928 = vector.extract_strided_slice %912 {offsets = [3, 0], sizes = [1, 512], strides = [1, 1]} : vector<4x512xf32> to vector<1x512xf32>
    %929 = vector.broadcast %927 : f32 to vector<1x512xf32>
    %930 = arith.mulf %929, %928 : vector<1x512xf32>
    %931 = arith.addf %926, %930 : vector<1x512xf32>
    %c0_384 = arith.constant 0 : index
    %932 = memref.load %arg3[%c0_384] : memref<4xf32, #tpu.memory_space<smem>>
    %c7_385 = arith.constant 7 : index
    %c0_386 = arith.constant 0 : index
    %933 = memref.load %arg4[%c7_385, %c0_386] : memref<8x4xf32, #tpu.memory_space<smem>>
    %934 = arith.addf %932, %933 : f32
    %935 = vector.broadcast %934 : f32 to vector<1x512xf32>
    %936 = arith.addf %931, %935 : vector<1x512xf32>
    %937 = vector.extract_strided_slice %907 {offsets = [0, 0], sizes = [1, 512], strides = [1, 1]} : vector<4x512xf32> to vector<1x512xf32>
    %938 = arith.subf %936, %937 : vector<1x512xf32>
    %939 = arith.mulf %938, %938 : vector<1x512xf32>
    %c0_387 = arith.constant 0 : index
    %c1_388 = arith.constant 1 : index
    %940 = memref.load %arg2[%c0_387, %c1_388] : memref<4x4xf32, #tpu.memory_space<smem>>
    %941 = vector.extract_strided_slice %912 {offsets = [0, 0], sizes = [1, 512], strides = [1, 1]} : vector<4x512xf32> to vector<1x512xf32>
    %942 = vector.broadcast %940 : f32 to vector<1x512xf32>
    %943 = arith.mulf %942, %941 : vector<1x512xf32>
    %c1_389 = arith.constant 1 : index
    %c1_390 = arith.constant 1 : index
    %944 = memref.load %arg2[%c1_389, %c1_390] : memref<4x4xf32, #tpu.memory_space<smem>>
    %945 = vector.extract_strided_slice %912 {offsets = [1, 0], sizes = [1, 512], strides = [1, 1]} : vector<4x512xf32> to vector<1x512xf32>
    %946 = vector.broadcast %944 : f32 to vector<1x512xf32>
    %947 = arith.mulf %946, %945 : vector<1x512xf32>
    %948 = arith.addf %943, %947 : vector<1x512xf32>
    %c2_391 = arith.constant 2 : index
    %c1_392 = arith.constant 1 : index
    %949 = memref.load %arg2[%c2_391, %c1_392] : memref<4x4xf32, #tpu.memory_space<smem>>
    %950 = vector.extract_strided_slice %912 {offsets = [2, 0], sizes = [1, 512], strides = [1, 1]} : vector<4x512xf32> to vector<1x512xf32>
    %951 = vector.broadcast %949 : f32 to vector<1x512xf32>
    %952 = arith.mulf %951, %950 : vector<1x512xf32>
    %953 = arith.addf %948, %952 : vector<1x512xf32>
    %c3_393 = arith.constant 3 : index
    %c1_394 = arith.constant 1 : index
    %954 = memref.load %arg2[%c3_393, %c1_394] : memref<4x4xf32, #tpu.memory_space<smem>>
    %955 = vector.extract_strided_slice %912 {offsets = [3, 0], sizes = [1, 512], strides = [1, 1]} : vector<4x512xf32> to vector<1x512xf32>
    %956 = vector.broadcast %954 : f32 to vector<1x512xf32>
    %957 = arith.mulf %956, %955 : vector<1x512xf32>
    %958 = arith.addf %953, %957 : vector<1x512xf32>
    %c1_395 = arith.constant 1 : index
    %959 = memref.load %arg3[%c1_395] : memref<4xf32, #tpu.memory_space<smem>>
    %c7_396 = arith.constant 7 : index
    %c1_397 = arith.constant 1 : index
    %960 = memref.load %arg4[%c7_396, %c1_397] : memref<8x4xf32, #tpu.memory_space<smem>>
    %961 = arith.addf %959, %960 : f32
    %962 = vector.broadcast %961 : f32 to vector<1x512xf32>
    %963 = arith.addf %958, %962 : vector<1x512xf32>
    %964 = vector.extract_strided_slice %907 {offsets = [1, 0], sizes = [1, 512], strides = [1, 1]} : vector<4x512xf32> to vector<1x512xf32>
    %965 = arith.subf %963, %964 : vector<1x512xf32>
    %966 = arith.mulf %965, %965 : vector<1x512xf32>
    %967 = arith.addf %939, %966 : vector<1x512xf32>
    %c0_398 = arith.constant 0 : index
    %c2_399 = arith.constant 2 : index
    %968 = memref.load %arg2[%c0_398, %c2_399] : memref<4x4xf32, #tpu.memory_space<smem>>
    %969 = vector.extract_strided_slice %912 {offsets = [0, 0], sizes = [1, 512], strides = [1, 1]} : vector<4x512xf32> to vector<1x512xf32>
    %970 = vector.broadcast %968 : f32 to vector<1x512xf32>
    %971 = arith.mulf %970, %969 : vector<1x512xf32>
    %c1_400 = arith.constant 1 : index
    %c2_401 = arith.constant 2 : index
    %972 = memref.load %arg2[%c1_400, %c2_401] : memref<4x4xf32, #tpu.memory_space<smem>>
    %973 = vector.extract_strided_slice %912 {offsets = [1, 0], sizes = [1, 512], strides = [1, 1]} : vector<4x512xf32> to vector<1x512xf32>
    %974 = vector.broadcast %972 : f32 to vector<1x512xf32>
    %975 = arith.mulf %974, %973 : vector<1x512xf32>
    %976 = arith.addf %971, %975 : vector<1x512xf32>
    %c2_402 = arith.constant 2 : index
    %c2_403 = arith.constant 2 : index
    %977 = memref.load %arg2[%c2_402, %c2_403] : memref<4x4xf32, #tpu.memory_space<smem>>
    %978 = vector.extract_strided_slice %912 {offsets = [2, 0], sizes = [1, 512], strides = [1, 1]} : vector<4x512xf32> to vector<1x512xf32>
    %979 = vector.broadcast %977 : f32 to vector<1x512xf32>
    %980 = arith.mulf %979, %978 : vector<1x512xf32>
    %981 = arith.addf %976, %980 : vector<1x512xf32>
    %c3_404 = arith.constant 3 : index
    %c2_405 = arith.constant 2 : index
    %982 = memref.load %arg2[%c3_404, %c2_405] : memref<4x4xf32, #tpu.memory_space<smem>>
    %983 = vector.extract_strided_slice %912 {offsets = [3, 0], sizes = [1, 512], strides = [1, 1]} : vector<4x512xf32> to vector<1x512xf32>
    %984 = vector.broadcast %982 : f32 to vector<1x512xf32>
    %985 = arith.mulf %984, %983 : vector<1x512xf32>
    %986 = arith.addf %981, %985 : vector<1x512xf32>
    %c2_406 = arith.constant 2 : index
    %987 = memref.load %arg3[%c2_406] : memref<4xf32, #tpu.memory_space<smem>>
    %c7_407 = arith.constant 7 : index
    %c2_408 = arith.constant 2 : index
    %988 = memref.load %arg4[%c7_407, %c2_408] : memref<8x4xf32, #tpu.memory_space<smem>>
    %989 = arith.addf %987, %988 : f32
    %990 = vector.broadcast %989 : f32 to vector<1x512xf32>
    %991 = arith.addf %986, %990 : vector<1x512xf32>
    %992 = vector.extract_strided_slice %907 {offsets = [2, 0], sizes = [1, 512], strides = [1, 1]} : vector<4x512xf32> to vector<1x512xf32>
    %993 = arith.subf %991, %992 : vector<1x512xf32>
    %994 = arith.mulf %993, %993 : vector<1x512xf32>
    %995 = arith.addf %967, %994 : vector<1x512xf32>
    %c0_409 = arith.constant 0 : index
    %c3_410 = arith.constant 3 : index
    %996 = memref.load %arg2[%c0_409, %c3_410] : memref<4x4xf32, #tpu.memory_space<smem>>
    %997 = vector.extract_strided_slice %912 {offsets = [0, 0], sizes = [1, 512], strides = [1, 1]} : vector<4x512xf32> to vector<1x512xf32>
    %998 = vector.broadcast %996 : f32 to vector<1x512xf32>
    %999 = arith.mulf %998, %997 : vector<1x512xf32>
    %c1_411 = arith.constant 1 : index
    %c3_412 = arith.constant 3 : index
    %1000 = memref.load %arg2[%c1_411, %c3_412] : memref<4x4xf32, #tpu.memory_space<smem>>
    %1001 = vector.extract_strided_slice %912 {offsets = [1, 0], sizes = [1, 512], strides = [1, 1]} : vector<4x512xf32> to vector<1x512xf32>
    %1002 = vector.broadcast %1000 : f32 to vector<1x512xf32>
    %1003 = arith.mulf %1002, %1001 : vector<1x512xf32>
    %1004 = arith.addf %999, %1003 : vector<1x512xf32>
    %c2_413 = arith.constant 2 : index
    %c3_414 = arith.constant 3 : index
    %1005 = memref.load %arg2[%c2_413, %c3_414] : memref<4x4xf32, #tpu.memory_space<smem>>
    %1006 = vector.extract_strided_slice %912 {offsets = [2, 0], sizes = [1, 512], strides = [1, 1]} : vector<4x512xf32> to vector<1x512xf32>
    %1007 = vector.broadcast %1005 : f32 to vector<1x512xf32>
    %1008 = arith.mulf %1007, %1006 : vector<1x512xf32>
    %1009 = arith.addf %1004, %1008 : vector<1x512xf32>
    %c3_415 = arith.constant 3 : index
    %c3_416 = arith.constant 3 : index
    %1010 = memref.load %arg2[%c3_415, %c3_416] : memref<4x4xf32, #tpu.memory_space<smem>>
    %1011 = vector.extract_strided_slice %912 {offsets = [3, 0], sizes = [1, 512], strides = [1, 1]} : vector<4x512xf32> to vector<1x512xf32>
    %1012 = vector.broadcast %1010 : f32 to vector<1x512xf32>
    %1013 = arith.mulf %1012, %1011 : vector<1x512xf32>
    %1014 = arith.addf %1009, %1013 : vector<1x512xf32>
    %c3_417 = arith.constant 3 : index
    %1015 = memref.load %arg3[%c3_417] : memref<4xf32, #tpu.memory_space<smem>>
    %c7_418 = arith.constant 7 : index
    %c3_419 = arith.constant 3 : index
    %1016 = memref.load %arg4[%c7_418, %c3_419] : memref<8x4xf32, #tpu.memory_space<smem>>
    %1017 = arith.addf %1015, %1016 : f32
    %1018 = vector.broadcast %1017 : f32 to vector<1x512xf32>
    %1019 = arith.addf %1014, %1018 : vector<1x512xf32>
    %1020 = vector.extract_strided_slice %907 {offsets = [3, 0], sizes = [1, 512], strides = [1, 1]} : vector<4x512xf32> to vector<1x512xf32>
    %1021 = arith.subf %1019, %1020 : vector<1x512xf32>
    %1022 = arith.mulf %1021, %1021 : vector<1x512xf32>
    %1023 = arith.addf %995, %1022 : vector<1x512xf32>
    %1024 = vector.shape_cast %1023 : vector<1x512xf32> to vector<1x1x512xf32>
    %cst_420 = arith.constant dense<0.000000e+00> : vector<1xf32>
    %1025 = vector.multi_reduction <add>, %1024, %cst_420 [1, 2] : vector<1x1x512xf32> to vector<1xf32>
    %1026 = vector.shape_cast %1025 : vector<1xf32> to vector<1x1x1xf32>
    %1027 = vector.extract %1026[0, 0, 0] : f32 from vector<1x1x1xf32>
    %cst_421 = arith.constant 4.8828125E-4 : f32
    %1028 = arith.mulf %1027, %cst_421 : f32
    %1029 = vector.broadcast %1028 : f32 to vector<8x128xf32>
    %c7_422 = arith.constant 7 : index
    %c0_423 = arith.constant 0 : index
    %c0_424 = arith.constant 0 : index
    %1030 = vector.load %arg7[%c7_422, %c0_423, %c0_424] : memref<8x8x128xf32, #tpu.memory_space<vmem>>, vector<1x8x128xf32>
    %1031 = vector.shape_cast %1030 : vector<1x8x128xf32> to vector<8x128xf32>
    %1032 = vector.shape_cast %1029 : vector<8x128xf32> to vector<1x8x128xf32>
    tpu.vector_store %arg7[%c7_422, %c0_423, %c0_424], %1032 {strides = array<i32>} : memref<8x8x128xf32, #tpu.memory_space<vmem>>, vector<1x8x128xf32>,
    return
  }
}

</mosaic_0001>

<llo_original>
// kernel: tpu_custom_call.1
$region0: #{tpu_custom_call.1}
  #allocation0 [shape = 'u32[]', space=smem, size = 0x4, offset = 0x4, fixed_abs, tag = 'smem constant byte address 0x4 - core index']
  #allocation1 [shape = 'u32[72,128]{1,0:T(1,128)}', space=vmem, size = 0x9000, scoped, tag = 'internal scratch']
  %s0 = inlined_call_operand.hbm [shape: f32[8], index: 0, kind: input, shape index: {}]
  %s1 = inlined_call_operand.hbm [shape: f32[8], index: 1, kind: input, shape index: {}]
  %s2 = inlined_call_operand.hbm [shape: f32[4,4], index: 2, kind: input, shape index: {}]
  %s3 = inlined_call_operand.hbm [shape: f32[4], index: 3, kind: input, shape index: {}]
  %s4 = inlined_call_operand.vmem [shape: f32[8,4], index: 4, kind: input, shape index: {}]
  %s5 = inlined_call_operand.vmem [shape: f32[4,512], index: 5, kind: input, shape index: {}]
  %s6 = inlined_call_operand.hbm [shape: f32[8,4,512], index: 6, kind: input, shape index: {}]
  %s7 = inlined_call_operand.hbm [shape: f32[8,8,128], index: 7, kind: output, shape index: {}]
  %s8 = sld [smem:[#allocation0]]
  $region62: #{tpu_custom_call.1} parent=0
    _
  %s10 = ssub.s32 1, %s8
  %s11 = scalar_select 0, %s10, %s8
  $region1: #{tpu_custom_call.1} parent=0
    #allocation2 [shape = 'u8[512]{0}', space=smem, size = 0x200, scoped, tag = 'input window, operand 0, single buffered']
    #allocation3 [shape = 's32[1]{0}', space=sflag, size = 0x4, scoped, tag = 'scoped memory for tpu_custom_call.1']
    #allocation4 [shape = 's32[1]{0}', space=sflag, size = 0x4, scoped, tag = 'scoped memory for tpu_custom_call.1']
    #allocation5 [shape = 's32[1]{0}', space=sflag, size = 0x4, scoped, tag = 'scoped memory for tpu_custom_call.1']
    #allocation6 [shape = 's32[1]{0}', space=sflag, size = 0x4, scoped, tag = 'scoped memory for tpu_custom_call.1']
    #allocation7 [shape = 'u8[512]{0}', space=smem, size = 0x200, scoped, tag = 'input window, operand 1, single buffered']
    #allocation8 [shape = 's32[1]{0}', space=sflag, size = 0x4, scoped, tag = 'scoped memory for tpu_custom_call.1']
    #allocation9 [shape = 'u8[2048]{0}', space=smem, size = 0x800, scoped, tag = 'input window, operand 2, single buffered']
    #allocation10 [shape = 'u8[512]{0}', space=smem, size = 0x200, scoped, tag = 'input window, operand 3, single buffered']
    #allocation11 [shape = 's32[1]{0}', space=sflag, size = 0x4, scoped, tag = 'scoped memory for tpu_custom_call.1']
    #allocation12 [shape = 'u8[4096]{0}', space=smem, size = 0x1000, scoped, tag = 'input window, operand 4, single buffered']
    #allocation13 [shape = 'u8[65536]{0}', space=vmem, size = 0x10000, scoped, tag = 'input window, operand 6, single buffered']
    #allocation14 [shape = 'u8[32768]{0}', space=vmem, size = 0x8000, scoped, tag = 'output window, operand 0, single buffered']
    %12 = vsyncpa [#allocation5], 0
    %13 = vsyncpa [#allocation8], 0
    %14 = vsyncpa [#allocation11], 0
    %15 = vsyncpa [#allocation6], 0
    %16 = vsyncpa [#allocation3], 0
    %17 = vsyncpa [#allocation4], 0
    // Predicated region
    $region2: #{tpu_custom_call.1} parent=1 // pred_check
      _
    $region3: #{tpu_custom_call.1} parent=1 // pred_check_branch
      %19 = sbr.rel (0) target = $region5
    $region4: #{tpu_custom_call.1} parent=1 // pred_region
      %21 = vsyncadd [#allocation5], 0
      %s23 = sshll.u32 %s0, 4
      %s24 = int_to_ptr.hbm [resolvable:$true] %s23
      %26 = dma.hbm_to_smem %s24, 16, [#allocation2], [#allocation5]
    $region5: #{tpu_custom_call.1} parent=1 // pred_fallthru
      _
    // Predicated region
    $region6: #{tpu_custom_call.1} parent=1 // pred_check
      _
    $region7: #{tpu_custom_call.1} parent=1 // pred_check_branch
      %28 = sbr.rel (0) target = $region9
    $region8: #{tpu_custom_call.1} parent=1 // pred_region
      %30 = vsyncadd [#allocation8], 0
      %s32 = sshll.u32 %s1, 4
      %s33 = int_to_ptr.hbm [resolvable:$true] %s32
      %35 = dma.hbm_to_smem %s33, 16, [#allocation7], [#allocation8]
    $region9: #{tpu_custom_call.1} parent=1 // pred_fallthru
      _
    // Predicated region
    $region10: #{tpu_custom_call.1} parent=1 // pred_check
      _
    $region11: #{tpu_custom_call.1} parent=1 // pred_check_branch
      %37 = sbr.rel (0) target = $region13
    $region12: #{tpu_custom_call.1} parent=1 // pred_region
      %39 = vsyncadd [#allocation8], 0
      %s41 = sshll.u32 %s2, 4
      %s42 = int_to_ptr.hbm [resolvable:$true] %s41
      %44 = dma.hbm_to_smem %s42, 64, [#allocation9], [#allocation8]
    $region13: #{tpu_custom_call.1} parent=1 // pred_fallthru
      _
    // Predicated region
    $region14: #{tpu_custom_call.1} parent=1 // pred_check
      _
    $region15: #{tpu_custom_call.1} parent=1 // pred_check_branch
      %46 = sbr.rel (0) target = $region17
    $region16: #{tpu_custom_call.1} parent=1 // pred_region
      %48 = vsyncadd [#allocation11], 0
      %s50 = sshll.u32 %s3, 4
      %s51 = int_to_ptr.hbm [resolvable:$true] %s50
      %53 = dma.hbm_to_smem %s51, 16, [#allocation10], [#allocation11]
    $region17: #{tpu_custom_call.1} parent=1 // pred_fallthru
      _
    // Predicated region
    $region18: #{tpu_custom_call.1} parent=1 // pred_check
      _
    $region19: #{tpu_custom_call.1} parent=1 // pred_check_branch
      %55 = sbr.rel (0) target = $region21
    $region20: #{tpu_custom_call.1} parent=1 // pred_region
      %57 = vsyncadd [#allocation6], 0
      %s59 = sshll.u32 %s4, 4
      %s60 = int_to_ptr.vmem [resolvable:$true] %s59
      %62 = dma.vmem_to_smem %s60, 128, [#allocation12], [#allocation6]
    $region21: #{tpu_custom_call.1} parent=1 // pred_fallthru
      _
    // Predicated region
    $region22: #{tpu_custom_call.1} parent=1 // pred_check
      _
    $region23: #{tpu_custom_call.1} parent=1 // pred_check_branch
      %64 = sbr.rel (0) target = $region25
    $region24: #{tpu_custom_call.1} parent=1 // pred_region
      _
    $region25: #{tpu_custom_call.1} parent=1 // pred_fallthru
      _
    // Predicated region
    $region26: #{tpu_custom_call.1} parent=1 // pred_check
      _
    $region27: #{tpu_custom_call.1} parent=1 // pred_check_branch
      %66 = sbr.rel (0) target = $region29
    $region28: #{tpu_custom_call.1} parent=1 // pred_region
      %68 = vsyncadd [#allocation3], 0
      %s69 = sshll.u32 %s6, 4
      %s70 = int_to_ptr.hbm [resolvable:$true] %s69
      %s71 = sshll.u32 [#allocation13], 4
      %s72 = int_to_ptr.vmem [resolvable:$true] %s71
      %77 = dma.hbm_to_vmem [thread:$0]  %s70, 2048, %s72, [#allocation3], 256, 256, 16
    $region29: #{tpu_custom_call.1} parent=1 // pred_fallthru
      _
    // Predicated region
    $region30: #{tpu_custom_call.1} parent=1 // pred_check
      _
    $region31: #{tpu_custom_call.1} parent=1 // pred_check_branch
      %79 = sbr.rel (0) target = $region33
    $region32: #{tpu_custom_call.1} parent=1 // pred_region
      %81 = dma.done [#allocation5], 16
    $region33: #{tpu_custom_call.1} parent=1 // pred_fallthru
      _
    // Predicated region
    $region34: #{tpu_custom_call.1} parent=1 // pred_check
      _
    $region35: #{tpu_custom_call.1} parent=1 // pred_check_branch
      %83 = sbr.rel (0) target = $region37
    $region36: #{tpu_custom_call.1} parent=1 // pred_region
      %85 = dma.done [#allocation8], 16
    $region37: #{tpu_custom_call.1} parent=1 // pred_fallthru
      _
    // Predicated region
    $region38: #{tpu_custom_call.1} parent=1 // pred_check
      _
    $region39: #{tpu_custom_call.1} parent=1 // pred_check_branch
      %87 = sbr.rel (0) target = $region41
    $region40: #{tpu_custom_call.1} parent=1 // pred_region
      %89 = dma.done [#allocation8], 64
    $region41: #{tpu_custom_call.1} parent=1 // pred_fallthru
      _
    // Predicated region
    $region42: #{tpu_custom_call.1} parent=1 // pred_check
      _
    $region43: #{tpu_custom_call.1} parent=1 // pred_check_branch
      %91 = sbr.rel (0) target = $region45
    $region44: #{tpu_custom_call.1} parent=1 // pred_region
      %93 = dma.done [#allocation11], 16
    $region45: #{tpu_custom_call.1} parent=1 // pred_fallthru
      _
    // Predicated region
    $region46: #{tpu_custom_call.1} parent=1 // pred_check
      _
    $region47: #{tpu_custom_call.1} parent=1 // pred_check_branch
      %95 = sbr.rel (0) target = $region49
    $region48: #{tpu_custom_call.1} parent=1 // pred_region
      %97 = dma.done [#allocation6], 128
    $region49: #{tpu_custom_call.1} parent=1 // pred_fallthru
      _
    // Predicated region
    $region50: #{tpu_custom_call.1} parent=1 // pred_check
      _
    $region51: #{tpu_custom_call.1} parent=1 // pred_check_branch
      %99 = sbr.rel (0) target = $region53
    $region52: #{tpu_custom_call.1} parent=1 // pred_region
      %101 = dma.done [#allocation3], 2048
    $region53: #{tpu_custom_call.1} parent=1 // pred_fallthru
      _
    %102 = sfence
    %v103 = vld [vmem:[%s5] sm:$0xff]
    %v104 = vld [vmem:[%s5 + $0x8] sm:$0xff]
    %s105 = sld [smem:[#allocation2]]
    %s106 = sld [smem:[#allocation7]]
    %v107 = vld [vmem:[#allocation13] sm:$0xff]
    %v108 = vld [vmem:[#allocation13 + $0x8] sm:$0xff]
    %v109 = vstv %s105
    %v110 = vmul.f32 %v109, %v103
    %v111 = vmul.f32 %v109, %v104
    %v112 = vstv %s106
    %v113 = vmul.f32 %v112, %v107
    %v114 = vmul.f32 %v112, %v108
    %v115 = vadd.f32 %v110, %v113
    %v116 = vadd.f32 %v111, %v114
    %s117 = sld [smem:[#allocation9]]
    %v118 = vstv %s117
    %v119 = vmul.f32 %v118, %v115
    %v120 = vmul.f32 %v118, %v116
    %s121 = sld [smem:[#allocation9 + $0x80]]
    %v122 = vstv %s121
    %v123 = vmul.f32 %v122, %v115
    %v124 = vmul.f32 %v122, %v116
    %v127 = vrot.slane %v123, 5
    %v128 = vrot.slane %v127, 4
    %v129 = vrot.slane %v124, 5
    %v130 = vrot.slane %v129, 4
    %v133 = vadd.f32 %v119, %v128
    %v134 = vadd.f32 %v120, %v130
    %s135 = sld [smem:[#allocation9 + $0x100]]
    %v136 = vstv %s135
    %v137 = vmul.f32 %v136, %v115
    %v138 = vmul.f32 %v136, %v116
    %v141 = vrot.slane %v137, 6
    %v142 = vrot.slane %v141, 4
    %v143 = vrot.slane %v138, 6
    %v144 = vrot.slane %v143, 4
    %v147 = vadd.f32 %v133, %v142
    %v148 = vadd.f32 %v134, %v144
    %s149 = sld [smem:[#allocation9 + $0x180]]
    %v150 = vstv %s149
    %v151 = vmul.f32 %v150, %v115
    %v152 = vmul.f32 %v150, %v116
    %v155 = vrot.slane %v151, 7
    %v156 = vrot.slane %v155, 4
    %v157 = vrot.slane %v152, 7
    %v158 = vrot.slane %v157, 4
    %v161 = vadd.f32 %v147, %v156
    %v162 = vadd.f32 %v148, %v158
    %s163 = sld [smem:[#allocation10]]
    %s164 = sld [smem:[#allocation12]]
    %s165 = sadd.f32 %s163, %s164
    %v166 = vstv %s165
    %v167 = vadd.f32 %v161, %v166
    %v168 = vadd.f32 %v162, %v166
    %v169 = vsub.f32 %v167, %v107
    %v170 = vsub.f32 %v168, %v108
    %v171 = vmul.f32 %v169, %v169
    %v172 = vmul.f32 %v170, %v170
    %s173 = sld [smem:[#allocation9 + $0x1]]
    %v174 = vstv %s173
    %v175 = vmul.f32 %v174, %v115
    %v176 = vmul.f32 %v174, %v116
    %s177 = sld [smem:[#allocation9 + $0x81]]
    %v178 = vstv %s177
    %v179 = vmul.f32 %v178, %v115
    %v180 = vmul.f32 %v178, %v116
    %v183 = vrot.slane %v179, 5
    %v184 = vrot.slane %v183, 4
    %v185 = vrot.slane %v180, 5
    %v186 = vrot.slane %v185, 4
    %v189 = vadd.f32 %v175, %v184
    %v190 = vadd.f32 %v176, %v186
    %s191 = sld [smem:[#allocation9 + $0x101]]
    %v192 = vstv %s191
    %v193 = vmul.f32 %v192, %v115
    %v194 = vmul.f32 %v192, %v116
    %v197 = vrot.slane %v193, 6
    %v198 = vrot.slane %v197, 4
    %v199 = vrot.slane %v194, 6
    %v200 = vrot.slane %v199, 4
    %v203 = vadd.f32 %v189, %v198
    %v204 = vadd.f32 %v190, %v200
    %s205 = sld [smem:[#allocation9 + $0x181]]
    %v206 = vstv %s205
    %v207 = vmul.f32 %v206, %v115
    %v208 = vmul.f32 %v206, %v116
    %v211 = vrot.slane %v207, 7
    %v212 = vrot.slane %v211, 4
    %v213 = vrot.slane %v208, 7
    %v214 = vrot.slane %v213, 4
    %v217 = vadd.f32 %v203, %v212
    %v218 = vadd.f32 %v204, %v214
    %s219 = sld [smem:[#allocation10 + $0x1]]
    %s220 = sld [smem:[#allocation12 + $0x1]]
    %s221 = sadd.f32 %s219, %s220
    %v222 = vstv %s221
    %v223 = vadd.f32 %v217, %v222
    %v224 = vadd.f32 %v218, %v222
    %v227 = vrot.slane %v107, 5
    %v228 = vrot.slane %v227, 4
    %v229 = vrot.slane %v108, 5
    %v230 = vrot.slane %v229, 4
    %v233 = vsub.f32 %v223, %v228
    %v234 = vsub.f32 %v224, %v230
    %v235 = vmul.f32 %v233, %v233
    %v236 = vmul.f32 %v234, %v234
    %v237 = vadd.f32 %v171, %v235
    %v238 = vadd.f32 %v172, %v236
    %s239 = sld [smem:[#allocation9 + $0x2]]
    %v240 = vstv %s239
    %v241 = vmul.f32 %v240, %v115
    %v242 = vmul.f32 %v240, %v116
    %s243 = sld [smem:[#allocation9 + $0x82]]
    %v244 = vstv %s243
    %v245 = vmul.f32 %v244, %v115
    %v246 = vmul.f32 %v244, %v116
    %v249 = vrot.slane %v245, 5
    %v250 = vrot.slane %v249, 4
    %v251 = vrot.slane %v246, 5
    %v252 = vrot.slane %v251, 4
    %v255 = vadd.f32 %v241, %v250
    %v256 = vadd.f32 %v242, %v252
    %s257 = sld [smem:[#allocation9 + $0x102]]
    %v258 = vstv %s257
    %v259 = vmul.f32 %v258, %v115
    %v260 = vmul.f32 %v258, %v116
    %v263 = vrot.slane %v259, 6
    %v264 = vrot.slane %v263, 4
    %v265 = vrot.slane %v260, 6
    %v266 = vrot.slane %v265, 4
    %v269 = vadd.f32 %v255, %v264
    %v270 = vadd.f32 %v256, %v266
    %s271 = sld [smem:[#allocation9 + $0x182]]
    %v272 = vstv %s271
    %v273 = vmul.f32 %v272, %v115
    %v274 = vmul.f32 %v272, %v116
    %v277 = vrot.slane %v273, 7
    %v278 = vrot.slane %v277, 4
    %v279 = vrot.slane %v274, 7
    %v280 = vrot.slane %v279, 4
    %v283 = vadd.f32 %v269, %v278
    %v284 = vadd.f32 %v270, %v280
    %s285 = sld [smem:[#allocation10 + $0x2]]
    %s286 = sld [smem:[#allocation12 + $0x2]]
    %s287 = sadd.f32 %s285, %s286
    %v288 = vstv %s287
    %v289 = vadd.f32 %v283, %v288
    %v290 = vadd.f32 %v284, %v288
    %v291 = vrot.slane %v107, 6
    %v292 = vrot.slane %v291, 4
    %v293 = vrot.slane %v108, 6
    %v294 = vrot.slane %v293, 4
    %v297 = vsub.f32 %v289, %v292
    %v298 = vsub.f32 %v290, %v294
    %v299 = vmul.f32 %v297, %v297
    %v300 = vmul.f32 %v298, %v298
    %v301 = vadd.f32 %v237, %v299
    %v302 = vadd.f32 %v238, %v300
    %s303 = sld [smem:[#allocation9 + $0x3]]
    %v304 = vstv %s303
    %v305 = vmul.f32 %v304, %v115
    %v306 = vmul.f32 %v304, %v116
    %s307 = sld [smem:[#allocation9 + $0x83]]
    %v308 = vstv %s307
    %v309 = vmul.f32 %v308, %v115
    %v310 = vmul.f32 %v308, %v116
    %v313 = vrot.slane %v309, 5
    %v314 = vrot.slane %v313, 4
    %v315 = vrot.slane %v310, 5
    %v316 = vrot.slane %v315, 4
    %v319 = vadd.f32 %v305, %v314
    %v320 = vadd.f32 %v306, %v316
    %s321 = sld [smem:[#allocation9 + $0x103]]
    %v322 = vstv %s321
    %v323 = vmul.f32 %v322, %v115
    %v324 = vmul.f32 %v322, %v116
    %v327 = vrot.slane %v323, 6
    %v328 = vrot.slane %v327, 4
    %v329 = vrot.slane %v324, 6
    %v330 = vrot.slane %v329, 4
    %v333 = vadd.f32 %v319, %v328
    %v334 = vadd.f32 %v320, %v330
    %s335 = sld [smem:[#allocation9 + $0x183]]
    %v336 = vstv %s335
    %v337 = vmul.f32 %v336, %v115
    %v338 = vmul.f32 %v336, %v116
    %v341 = vrot.slane %v337, 7
    %v342 = vrot.slane %v341, 4
    %v343 = vrot.slane %v338, 7
    %v344 = vrot.slane %v343, 4
    %v347 = vadd.f32 %v333, %v342
    %v348 = vadd.f32 %v334, %v344
    %s349 = sld [smem:[#allocation10 + $0x3]]
    %s350 = sld [smem:[#allocation12 + $0x3]]
    %s351 = sadd.f32 %s349, %s350
    %v352 = vstv %s351
    %v353 = vadd.f32 %v347, %v352
    %v354 = vadd.f32 %v348, %v352
    %v355 = vrot.slane %v107, 7
    %v356 = vrot.slane %v355, 4
    %v357 = vrot.slane %v108, 7
    %v358 = vrot.slane %v357, 4
    %v361 = vsub.f32 %v353, %v356
    %v362 = vsub.f32 %v354, %v358
    %v363 = vmul.f32 %v361, %v361
    %v364 = vmul.f32 %v362, %v362
    %v365 = vadd.f32 %v301, %v363
    %v366 = vadd.f32 %v302, %v364
    %v369 = vperm.slane %v365, 0
    %v370 = vperm.slane %v365, 4
    %v371 = vperm.slane %v366, 0
    %v372 = vperm.slane %v366, 4
    %vm377 = vcmask 1040384
    %v378 = vsel %vm377, %v369, 0.0
    %v379 = vsel %vm377, %v370, 0.0
    %v380 = vadd.f32 %v378, %v379
    %v381 = vsel %vm377, %v371, 0.0
    %v382 = vadd.f32 %v380, %v381
    %v383 = vsel %vm377, %v372, 0.0
    %v384 = vadd.f32 %v382, %v383
    %385 = vadd.xlane.f32.xlu0 %v384
    %v386 = vpop.xlane.xlu0 %385
    %v387 = vrot.slane %v386, 4
    %v388 = vadd.f32 %v386, %v387
    %v389 = vrot.slane %v388, 2
    %v390 = vadd.f32 %v388, %v389
    %v391 = vrot.slane %v390, 1
    %v392 = vadd.f32 %v390, %v391
    %s393 = vtos %v392
    %s394 = smul.f32 %s393, 0.00048828125
    %v395 = vstv %s394
    %396 = vst [vmem:[#allocation14] sm:$0xff] %v395
    %s397 = sld [smem:[#allocation2 + $0x1]]
    %s398 = sld [smem:[#allocation7 + $0x1]]
    %s399 = scalar_lea.vmem [#allocation13], 16
    %v400 = vld [vmem:[%s399] sm:$0xff]
    %v401 = vld [vmem:[%s399 + $0x8] sm:$0xff]
    %v402 = vstv %s397
    %v403 = vmul.f32 %v402, %v103
    %v404 = vmul.f32 %v402, %v104
    %v405 = vstv %s398
    %v406 = vmul.f32 %v405, %v400
    %v407 = vmul.f32 %v405, %v401
    %v408 = vadd.f32 %v403, %v406
    %v409 = vadd.f32 %v404, %v407
    %s410 = sld [smem:[#allocation9]]
    %v411 = vstv %s410
    %v412 = vmul.f32 %v411, %v408
    %v413 = vmul.f32 %v411, %v409
    %s414 = sld [smem:[#allocation9 + $0x80]]
    %v415 = vstv %s414
    %v416 = vmul.f32 %v415, %v408
    %v417 = vmul.f32 %v415, %v409
    %v420 = vrot.slane %v416, 5
    %v421 = vrot.slane %v420, 4
    %v422 = vrot.slane %v417, 5
    %v423 = vrot.slane %v422, 4
    %v426 = vadd.f32 %v412, %v421
    %v427 = vadd.f32 %v413, %v423
    %s428 = sld [smem:[#allocation9 + $0x100]]
    %v429 = vstv %s428
    %v430 = vmul.f32 %v429, %v408
    %v431 = vmul.f32 %v429, %v409
    %v434 = vrot.slane %v430, 6
    %v435 = vrot.slane %v434, 4
    %v436 = vrot.slane %v431, 6
    %v437 = vrot.slane %v436, 4
    %v440 = vadd.f32 %v426, %v435
    %v441 = vadd.f32 %v427, %v437
    %s442 = sld [smem:[#allocation9 + $0x180]]
    %v443 = vstv %s442
    %v444 = vmul.f32 %v443, %v408
    %v445 = vmul.f32 %v443, %v409
    %v448 = vrot.slane %v444, 7
    %v449 = vrot.slane %v448, 4
    %v450 = vrot.slane %v445, 7
    %v451 = vrot.slane %v450, 4
    %v454 = vadd.f32 %v440, %v449
    %v455 = vadd.f32 %v441, %v451
    %s456 = sld [smem:[#allocation10]]
    %s457 = sld [smem:[#allocation12 + $0x80]]
    %s458 = sadd.f32 %s456, %s457
    %v459 = vstv %s458
    %v460 = vadd.f32 %v454, %v459
    %v461 = vadd.f32 %v455, %v459
    %v462 = vsub.f32 %v460, %v400
    %v463 = vsub.f32 %v461, %v401
    %v464 = vmul.f32 %v462, %v462
    %v465 = vmul.f32 %v463, %v463
    %s466 = sld [smem:[#allocation9 + $0x1]]
    %v467 = vstv %s466
    %v468 = vmul.f32 %v467, %v408
    %v469 = vmul.f32 %v467, %v409
    %s470 = sld [smem:[#allocation9 + $0x81]]
    %v471 = vstv %s470
    %v472 = vmul.f32 %v471, %v408
    %v473 = vmul.f32 %v471, %v409
    %v476 = vrot.slane %v472, 5
    %v477 = vrot.slane %v476, 4
    %v478 = vrot.slane %v473, 5
    %v479 = vrot.slane %v478, 4
    %v482 = vadd.f32 %v468, %v477
    %v483 = vadd.f32 %v469, %v479
    %s484 = sld [smem:[#allocation9 + $0x101]]
    %v485 = vstv %s484
    %v486 = vmul.f32 %v485, %v408
    %v487 = vmul.f32 %v485, %v409
    %v490 = vrot.slane %v486, 6
    %v491 = vrot.slane %v490, 4
    %v492 = vrot.slane %v487, 6
    %v493 = vrot.slane %v492, 4
    %v496 = vadd.f32 %v482, %v491
    %v497 = vadd.f32 %v483, %v493
    %s498 = sld [smem:[#allocation9 + $0x181]]
    %v499 = vstv %s498
    %v500 = vmul.f32 %v499, %v408
    %v501 = vmul.f32 %v499, %v409
    %v504 = vrot.slane %v500, 7
    %v505 = vrot.slane %v504, 4
    %v506 = vrot.slane %v501, 7
    %v507 = vrot.slane %v506, 4
    %v510 = vadd.f32 %v496, %v505
    %v511 = vadd.f32 %v497, %v507
    %s512 = sld [smem:[#allocation10 + $0x1]]
    %s513 = sld [smem:[#allocation12 + $0x81]]
    %s514 = sadd.f32 %s512, %s513
    %v515 = vstv %s514
    %v516 = vadd.f32 %v510, %v515
    %v517 = vadd.f32 %v511, %v515
    %v520 = vrot.slane %v400, 5
    %v521 = vrot.slane %v520, 4
    %v522 = vrot.slane %v401, 5
    %v523 = vrot.slane %v522, 4
    %v526 = vsub.f32 %v516, %v521
    %v527 = vsub.f32 %v517, %v523
    %v528 = vmul.f32 %v526, %v526
    %v529 = vmul.f32 %v527, %v527
    %v530 = vadd.f32 %v464, %v528
    %v531 = vadd.f32 %v465, %v529
    %s532 = sld [smem:[#allocation9 + $0x2]]
    %v533 = vstv %s532
    %v534 = vmul.f32 %v533, %v408
    %v535 = vmul.f32 %v533, %v409
    %s536 = sld [smem:[#allocation9 + $0x82]]
    %v537 = vstv %s536
    %v538 = vmul.f32 %v537, %v408
    %v539 = vmul.f32 %v537, %v409
    %v542 = vrot.slane %v538, 5
    %v543 = vrot.slane %v542, 4
    %v544 = vrot.slane %v539, 5
    %v545 = vrot.slane %v544, 4
    %v548 = vadd.f32 %v534, %v543
    %v549 = vadd.f32 %v535, %v545
    %s550 = sld [smem:[#allocation9 + $0x102]]
    %v551 = vstv %s550
    %v552 = vmul.f32 %v551, %v408
    %v553 = vmul.f32 %v551, %v409
    %v556 = vrot.slane %v552, 6
    %v557 = vrot.slane %v556, 4
    %v558 = vrot.slane %v553, 6
    %v559 = vrot.slane %v558, 4
    %v562 = vadd.f32 %v548, %v557
    %v563 = vadd.f32 %v549, %v559
    %s564 = sld [smem:[#allocation9 + $0x182]]
    %v565 = vstv %s564
    %v566 = vmul.f32 %v565, %v408
    %v567 = vmul.f32 %v565, %v409
    %v570 = vrot.slane %v566, 7
    %v571 = vrot.slane %v570, 4
    %v572 = vrot.slane %v567, 7
    %v573 = vrot.slane %v572, 4
    %v576 = vadd.f32 %v562, %v571
    %v577 = vadd.f32 %v563, %v573
    %s578 = sld [smem:[#allocation10 + $0x2]]
    %s579 = sld [smem:[#allocation12 + $0x82]]
    %s580 = sadd.f32 %s578, %s579
    %v581 = vstv %s580
    %v582 = vadd.f32 %v576, %v581
    %v583 = vadd.f32 %v577, %v581
    %v584 = vrot.slane %v400, 6
    %v585 = vrot.slane %v584, 4
    %v586 = vrot.slane %v401, 6
    %v587 = vrot.slane %v586, 4
    %v590 = vsub.f32 %v582, %v585
    %v591 = vsub.f32 %v583, %v587
    %v592 = vmul.f32 %v590, %v590
    %v593 = vmul.f32 %v591, %v591
    %v594 = vadd.f32 %v530, %v592
    %v595 = vadd.f32 %v531, %v593
    %s596 = sld [smem:[#allocation9 + $0x3]]
    %v597 = vstv %s596
    %v598 = vmul.f32 %v597, %v408
    %v599 = vmul.f32 %v597, %v409
    %s600 = sld [smem:[#allocation9 + $0x83]]
    %v601 = vstv %s600
    %v602 = vmul.f32 %v601, %v408
    %v603 = vmul.f32 %v601, %v409
    %v606 = vrot.slane %v602, 5
    %v607 = vrot.slane %v606, 4
    %v608 = vrot.slane %v603, 5
    %v609 = vrot.slane %v608, 4
    %v612 = vadd.f32 %v598, %v607
    %v613 = vadd.f32 %v599, %v609
    %s614 = sld [smem:[#allocation9 + $0x103]]
    %v615 = vstv %s614
    %v616 = vmul.f32 %v615, %v408
    %v617 = vmul.f32 %v615, %v409
    %v620 = vrot.slane %v616, 6
    %v621 = vrot.slane %v620, 4
    %v622 = vrot.slane %v617, 6
    %v623 = vrot.slane %v622, 4
    %v626 = vadd.f32 %v612, %v621
    %v627 = vadd.f32 %v613, %v623
    %s628 = sld [smem:[#allocation9 + $0x183]]
    %v629 = vstv %s628
    %v630 = vmul.f32 %v629, %v408
    %v631 = vmul.f32 %v629, %v409
    %v634 = vrot.slane %v630, 7
    %v635 = vrot.slane %v634, 4
    %v636 = vrot.slane %v631, 7
    %v637 = vrot.slane %v636, 4
    %v640 = vadd.f32 %v626, %v635
    %v641 = vadd.f32 %v627, %v637
    %s642 = sld [smem:[#allocation10 + $0x3]]
    %s643 = sld [smem:[#allocation12 + $0x83]]
    %s644 = sadd.f32 %s642, %s643
    %v645 = vstv %s644
    %v646 = vadd.f32 %v640, %v645
    %v647 = vadd.f32 %v641, %v645
    %v648 = vrot.slane %v400, 7
    %v649 = vrot.slane %v648, 4
    %v650 = vrot.slane %v401, 7
    %v651 = vrot.slane %v650, 4
    %v654 = vsub.f32 %v646, %v649
    %v655 = vsub.f32 %v647, %v651
    %v656 = vmul.f32 %v654, %v654
    %v657 = vmul.f32 %v655, %v655
    %v658 = vadd.f32 %v594, %v656
    %v659 = vadd.f32 %v595, %v657
    %v662 = vperm.slane %v658, 0
    %v663 = vperm.slane %v658, 4
    %v664 = vperm.slane %v659, 0
    %v665 = vperm.slane %v659, 4
    %v670 = vsel %vm377, %v662, 0.0
    %v671 = vsel %vm377, %v663, 0.0
    %v672 = vadd.f32 %v670, %v671
    %v673 = vsel %vm377, %v664, 0.0
    %v674 = vadd.f32 %v672, %v673
    %v675 = vsel %vm377, %v665, 0.0
    %v676 = vadd.f32 %v674, %v675
    %677 = vadd.xlane.f32.xlu0 %v676
    %v678 = vpop.xlane.xlu0 %677
    %v679 = vrot.slane %v678, 4
    %v680 = vadd.f32 %v678, %v679
    %v681 = vrot.slane %v680, 2
    %v682 = vadd.f32 %v680, %v681
    %v683 = vrot.slane %v682, 1
    %v684 = vadd.f32 %v682, %v683
    %s685 = vtos %v684
    %s686 = smul.f32 %s685, 0.00048828125
    %v687 = vstv %s686
    %s688 = scalar_lea.vmem [#allocation14], 8
    %689 = vst [vmem:[%s688] sm:$0xff] %v687
    %s690 = sld [smem:[#allocation2 + $0x2]]
    %s691 = sld [smem:[#allocation7 + $0x2]]
    %s692 = scalar_lea.vmem [#allocation13], 32
    %v693 = vld [vmem:[%s692] sm:$0xff]
    %v694 = vld [vmem:[%s692 + $0x8] sm:$0xff]
    %v695 = vstv %s690
    %v696 = vmul.f32 %v695, %v103
    %v697 = vmul.f32 %v695, %v104
    %v698 = vstv %s691
    %v699 = vmul.f32 %v698, %v693
    %v700 = vmul.f32 %v698, %v694
    %v701 = vadd.f32 %v696, %v699
    %v702 = vadd.f32 %v697, %v700
    %s703 = sld [smem:[#allocation9]]
    %v704 = vstv %s703
    %v705 = vmul.f32 %v704, %v701
    %v706 = vmul.f32 %v704, %v702
    %s707 = sld [smem:[#allocation9 + $0x80]]
    %v708 = vstv %s707
    %v709 = vmul.f32 %v708, %v701
    %v710 = vmul.f32 %v708, %v702
    %v713 = vrot.slane %v709, 5
    %v714 = vrot.slane %v713, 4
    %v715 = vrot.slane %v710, 5
    %v716 = vrot.slane %v715, 4
    %v719 = vadd.f32 %v705, %v714
    %v720 = vadd.f32 %v706, %v716
    %s721 = sld [smem:[#allocation9 + $0x100]]
    %v722 = vstv %s721
    %v723 = vmul.f32 %v722, %v701
    %v724 = vmul.f32 %v722, %v702
    %v727 = vrot.slane %v723, 6
    %v728 = vrot.slane %v727, 4
    %v729 = vrot.slane %v724, 6
    %v730 = vrot.slane %v729, 4
    %v733 = vadd.f32 %v719, %v728
    %v734 = vadd.f32 %v720, %v730
    %s735 = sld [smem:[#allocation9 + $0x180]]
    %v736 = vstv %s735
    %v737 = vmul.f32 %v736, %v701
    %v738 = vmul.f32 %v736, %v702
    %v741 = vrot.slane %v737, 7
    %v742 = vrot.slane %v741, 4
    %v743 = vrot.slane %v738, 7
    %v744 = vrot.slane %v743, 4
    %v747 = vadd.f32 %v733, %v742
    %v748 = vadd.f32 %v734, %v744
    %s749 = sld [smem:[#allocation10]]
    %s750 = sld [smem:[#allocation12 + $0x100]]
    %s751 = sadd.f32 %s749, %s750
    %v752 = vstv %s751
    %v753 = vadd.f32 %v747, %v752
    %v754 = vadd.f32 %v748, %v752
    %v755 = vsub.f32 %v753, %v693
    %v756 = vsub.f32 %v754, %v694
    %v757 = vmul.f32 %v755, %v755
    %v758 = vmul.f32 %v756, %v756
    %s759 = sld [smem:[#allocation9 + $0x1]]
    %v760 = vstv %s759
    %v761 = vmul.f32 %v760, %v701
    %v762 = vmul.f32 %v760, %v702
    %s763 = sld [smem:[#allocation9 + $0x81]]
    %v764 = vstv %s763
    %v765 = vmul.f32 %v764, %v701
    %v766 = vmul.f32 %v764, %v702
    %v769 = vrot.slane %v765, 5
    %v770 = vrot.slane %v769, 4
    %v771 = vrot.slane %v766, 5
    %v772 = vrot.slane %v771, 4
    %v775 = vadd.f32 %v761, %v770
    %v776 = vadd.f32 %v762, %v772
    %s777 = sld [smem:[#allocation9 + $0x101]]
    %v778 = vstv %s777
    %v779 = vmul.f32 %v778, %v701
    %v780 = vmul.f32 %v778, %v702
    %v783 = vrot.slane %v779, 6
    %v784 = vrot.slane %v783, 4
    %v785 = vrot.slane %v780, 6
    %v786 = vrot.slane %v785, 4
    %v789 = vadd.f32 %v775, %v784
    %v790 = vadd.f32 %v776, %v786
    %s791 = sld [smem:[#allocation9 + $0x181]]
    %v792 = vstv %s791
    %v793 = vmul.f32 %v792, %v701
    %v794 = vmul.f32 %v792, %v702
    %v797 = vrot.slane %v793, 7
    %v798 = vrot.slane %v797, 4
    %v799 = vrot.slane %v794, 7
    %v800 = vrot.slane %v799, 4
    %v803 = vadd.f32 %v789, %v798
    %v804 = vadd.f32 %v790, %v800
    %s805 = sld [smem:[#allocation10 + $0x1]]
    %s806 = sld [smem:[#allocation12 + $0x101]]
    %s807 = sadd.f32 %s805, %s806
    %v808 = vstv %s807
    %v809 = vadd.f32 %v803, %v808
    %v810 = vadd.f32 %v804, %v808
    %v813 = vrot.slane %v693, 5
    %v814 = vrot.slane %v813, 4
    %v815 = vrot.slane %v694, 5
    %v816 = vrot.slane %v815, 4
    %v819 = vsub.f32 %v809, %v814
    %v820 = vsub.f32 %v810, %v816
    %v821 = vmul.f32 %v819, %v819
    %v822 = vmul.f32 %v820, %v820
    %v823 = vadd.f32 %v757, %v821
    %v824 = vadd.f32 %v758, %v822
    %s825 = sld [smem:[#allocation9 + $0x2]]
    %v826 = vstv %s825
    %v827 = vmul.f32 %v826, %v701
    %v828 = vmul.f32 %v826, %v702
    %s829 = sld [smem:[#allocation9 + $0x82]]
    %v830 = vstv %s829
    %v831 = vmul.f32 %v830, %v701
    %v832 = vmul.f32 %v830, %v702
    %v835 = vrot.slane %v831, 5
    %v836 = vrot.slane %v835, 4
    %v837 = vrot.slane %v832, 5
    %v838 = vrot.slane %v837, 4
    %v841 = vadd.f32 %v827, %v836
    %v842 = vadd.f32 %v828, %v838
    %s843 = sld [smem:[#allocation9 + $0x102]]
    %v844 = vstv %s843
    %v845 = vmul.f32 %v844, %v701
    %v846 = vmul.f32 %v844, %v702
    %v849 = vrot.slane %v845, 6
    %v850 = vrot.slane %v849, 4
    %v851 = vrot.slane %v846, 6
    %v852 = vrot.slane %v851, 4
    %v855 = vadd.f32 %v841, %v850
    %v856 = vadd.f32 %v842, %v852
    %s857 = sld [smem:[#allocation9 + $0x182]]
    %v858 = vstv %s857
    %v859 = vmul.f32 %v858, %v701
    %v860 = vmul.f32 %v858, %v702
    %v863 = vrot.slane %v859, 7
    %v864 = vrot.slane %v863, 4
    %v865 = vrot.slane %v860, 7
    %v866 = vrot.slane %v865, 4
    %v869 = vadd.f32 %v855, %v864
    %v870 = vadd.f32 %v856, %v866
    %s871 = sld [smem:[#allocation10 + $0x2]]
    %s872 = sld [smem:[#allocation12 + $0x102]]
    %s873 = sadd.f32 %s871, %s872
    %v874 = vstv %s873
    %v875 = vadd.f32 %v869, %v874
    %v876 = vadd.f32 %v870, %v874
    %v877 = vrot.slane %v693, 6
    %v878 = vrot.slane %v877, 4
    %v879 = vrot.slane %v694, 6
    %v880 = vrot.slane %v879, 4
    %v883 = vsub.f32 %v875, %v878
    %v884 = vsub.f32 %v876, %v880
    %v885 = vmul.f32 %v883, %v883
    %v886 = vmul.f32 %v884, %v884
    %v887 = vadd.f32 %v823, %v885
    %v888 = vadd.f32 %v824, %v886
    %s889 = sld [smem:[#allocation9 + $0x3]]
    %v890 = vstv %s889
    %v891 = vmul.f32 %v890, %v701
    %v892 = vmul.f32 %v890, %v702
    %s893 = sld [smem:[#allocation9 + $0x83]]
    %v894 = vstv %s893
    %v895 = vmul.f32 %v894, %v701
    %v896 = vmul.f32 %v894, %v702
    %v899 = vrot.slane %v895, 5
    %v900 = vrot.slane %v899, 4
    %v901 = vrot.slane %v896, 5
    %v902 = vrot.slane %v901, 4
    %v905 = vadd.f32 %v891, %v900
    %v906 = vadd.f32 %v892, %v902
    %s907 = sld [smem:[#allocation9 + $0x103]]
    %v908 = vstv %s907
    %v909 = vmul.f32 %v908, %v701
    %v910 = vmul.f32 %v908, %v702
    %v913 = vrot.slane %v909, 6
    %v914 = vrot.slane %v913, 4
    %v915 = vrot.slane %v910, 6
    %v916 = vrot.slane %v915, 4
    %v919 = vadd.f32 %v905, %v914
    %v920 = vadd.f32 %v906, %v916
    %s921 = sld [smem:[#allocation9 + $0x183]]
    %v922 = vstv %s921
    %v923 = vmul.f32 %v922, %v701
    %v924 = vmul.f32 %v922, %v702
    %v927 = vrot.slane %v923, 7
    %v928 = vrot.slane %v927, 4
    %v929 = vrot.slane %v924, 7
    %v930 = vrot.slane %v929, 4
    %v933 = vadd.f32 %v919, %v928
    %v934 = vadd.f32 %v920, %v930
    %s935 = sld [smem:[#allocation10 + $0x3]]
    %s936 = sld [smem:[#allocation12 + $0x103]]
    %s937 = sadd.f32 %s935, %s936
    %v938 = vstv %s937
    %v939 = vadd.f32 %v933, %v938
    %v940 = vadd.f32 %v934, %v938
    %v941 = vrot.slane %v693, 7
    %v942 = vrot.slane %v941, 4
    %v943 = vrot.slane %v694, 7
    %v944 = vrot.slane %v943, 4
    %v947 = vsub.f32 %v939, %v942
    %v948 = vsub.f32 %v940, %v944
    %v949 = vmul.f32 %v947, %v947
    %v950 = vmul.f32 %v948, %v948
    %v951 = vadd.f32 %v887, %v949
    %v952 = vadd.f32 %v888, %v950
    %v955 = vperm.slane %v951, 0
    %v956 = vperm.slane %v951, 4
    %v957 = vperm.slane %v952, 0
    %v958 = vperm.slane %v952, 4
    %v963 = vsel %vm377, %v955, 0.0
    %v964 = vsel %vm377, %v956, 0.0
    %v965 = vadd.f32 %v963, %v964
    %v966 = vsel %vm377, %v957, 0.0
    %v967 = vadd.f32 %v965, %v966
    %v968 = vsel %vm377, %v958, 0.0
    %v969 = vadd.f32 %v967, %v968
    %970 = vadd.xlane.f32.xlu0 %v969
    %v971 = vpop.xlane.xlu0 %970
    %v972 = vrot.slane %v971, 4
    %v973 = vadd.f32 %v971, %v972
    %v974 = vrot.slane %v973, 2
    %v975 = vadd.f32 %v973, %v974
    %v976 = vrot.slane %v975, 1
    %v977 = vadd.f32 %v975, %v976
    %s978 = vtos %v977
    %s979 = smul.f32 %s978, 0.00048828125
    %v980 = vstv %s979
    %s981 = scalar_lea.vmem [#allocation14], 16
    %982 = vst [vmem:[%s981] sm:$0xff] %v980
    %s983 = sld [smem:[#allocation2 + $0x3]]
    %s984 = sld [smem:[#allocation7 + $0x3]]
    %s985 = scalar_lea.vmem [#allocation13], 48
    %v986 = vld [vmem:[%s985] sm:$0xff]
    %v987 = vld [vmem:[%s985 + $0x8] sm:$0xff]
    %v988 = vstv %s983
    %v989 = vmul.f32 %v988, %v103
    %v990 = vmul.f32 %v988, %v104
    %v991 = vstv %s984
    %v992 = vmul.f32 %v991, %v986
    %v993 = vmul.f32 %v991, %v987
    %v994 = vadd.f32 %v989, %v992
    %v995 = vadd.f32 %v990, %v993
    %s996 = sld [smem:[#allocation9]]
    %v997 = vstv %s996
    %v998 = vmul.f32 %v997, %v994
    %v999 = vmul.f32 %v997, %v995
    %s1000 = sld [smem:[#allocation9 + $0x80]]
    %v1001 = vstv %s1000
    %v1002 = vmul.f32 %v1001, %v994
    %v1003 = vmul.f32 %v1001, %v995
    %v1006 = vrot.slane %v1002, 5
    %v1007 = vrot.slane %v1006, 4
    %v1008 = vrot.slane %v1003, 5
    %v1009 = vrot.slane %v1008, 4
    %v1012 = vadd.f32 %v998, %v1007
    %v1013 = vadd.f32 %v999, %v1009
    %s1014 = sld [smem:[#allocation9 + $0x100]]
    %v1015 = vstv %s1014
    %v1016 = vmul.f32 %v1015, %v994
    %v1017 = vmul.f32 %v1015, %v995
    %v1020 = vrot.slane %v1016, 6
    %v1021 = vrot.slane %v1020, 4
    %v1022 = vrot.slane %v1017, 6
    %v1023 = vrot.slane %v1022, 4
    %v1026 = vadd.f32 %v1012, %v1021
    %v1027 = vadd.f32 %v1013, %v1023
    %s1028 = sld [smem:[#allocation9 + $0x180]]
    %v1029 = vstv %s1028
    %v1030 = vmul.f32 %v1029, %v994
    %v1031 = vmul.f32 %v1029, %v995
    %v1034 = vrot.slane %v1030, 7
    %v1035 = vrot.slane %v1034, 4
    %v1036 = vrot.slane %v1031, 7
    %v1037 = vrot.slane %v1036, 4
    %v1040 = vadd.f32 %v1026, %v1035
    %v1041 = vadd.f32 %v1027, %v1037
    %s1042 = sld [smem:[#allocation10]]
    %s1043 = sld [smem:[#allocation12 + $0x180]]
    %s1044 = sadd.f32 %s1042, %s1043
    %v1045 = vstv %s1044
    %v1046 = vadd.f32 %v1040, %v1045
    %v1047 = vadd.f32 %v1041, %v1045
    %v1048 = vsub.f32 %v1046, %v986
    %v1049 = vsub.f32 %v1047, %v987
    %v1050 = vmul.f32 %v1048, %v1048
    %v1051 = vmul.f32 %v1049, %v1049
    %s1052 = sld [smem:[#allocation9 + $0x1]]
    %v1053 = vstv %s1052
    %v1054 = vmul.f32 %v1053, %v994
    %v1055 = vmul.f32 %v1053, %v995
    %s1056 = sld [smem:[#allocation9 + $0x81]]
    %v1057 = vstv %s1056
    %v1058 = vmul.f32 %v1057, %v994
    %v1059 = vmul.f32 %v1057, %v995
    %v1062 = vrot.slane %v1058, 5
    %v1063 = vrot.slane %v1062, 4
    %v1064 = vrot.slane %v1059, 5
    %v1065 = vrot.slane %v1064, 4
    %v1068 = vadd.f32 %v1054, %v1063
    %v1069 = vadd.f32 %v1055, %v1065
    %s1070 = sld [smem:[#allocation9 + $0x101]]
    %v1071 = vstv %s1070
    %v1072 = vmul.f32 %v1071, %v994
    %v1073 = vmul.f32 %v1071, %v995
    %v1076 = vrot.slane %v1072, 6
    %v1077 = vrot.slane %v1076, 4
    %v1078 = vrot.slane %v1073, 6
    %v1079 = vrot.slane %v1078, 4
    %v1082 = vadd.f32 %v1068, %v1077
    %v1083 = vadd.f32 %v1069, %v1079
    %s1084 = sld [smem:[#allocation9 + $0x181]]
    %v1085 = vstv %s1084
    %v1086 = vmul.f32 %v1085, %v994
    %v1087 = vmul.f32 %v1085, %v995
    %v1090 = vrot.slane %v1086, 7
    %v1091 = vrot.slane %v1090, 4
    %v1092 = vrot.slane %v1087, 7
    %v1093 = vrot.slane %v1092, 4
    %v1096 = vadd.f32 %v1082, %v1091
    %v1097 = vadd.f32 %v1083, %v1093
    %s1098 = sld [smem:[#allocation10 + $0x1]]
    %s1099 = sld [smem:[#allocation12 + $0x181]]
    %s1100 = sadd.f32 %s1098, %s1099
    %v1101 = vstv %s1100
    %v1102 = vadd.f32 %v1096, %v1101
    %v1103 = vadd.f32 %v1097, %v1101
    %v1106 = vrot.slane %v986, 5
    %v1107 = vrot.slane %v1106, 4
    %v1108 = vrot.slane %v987, 5
    %v1109 = vrot.slane %v1108, 4
    %v1112 = vsub.f32 %v1102, %v1107
    %v1113 = vsub.f32 %v1103, %v1109
    %v1114 = vmul.f32 %v1112, %v1112
    %v1115 = vmul.f32 %v1113, %v1113
    %v1116 = vadd.f32 %v1050, %v1114
    %v1117 = vadd.f32 %v1051, %v1115
    %s1118 = sld [smem:[#allocation9 + $0x2]]
    %v1119 = vstv %s1118
    %v1120 = vmul.f32 %v1119, %v994
    %v1121 = vmul.f32 %v1119, %v995
    %s1122 = sld [smem:[#allocation9 + $0x82]]
    %v1123 = vstv %s1122
    %v1124 = vmul.f32 %v1123, %v994
    %v1125 = vmul.f32 %v1123, %v995
    %v1128 = vrot.slane %v1124, 5
    %v1129 = vrot.slane %v1128, 4
    %v1130 = vrot.slane %v1125, 5
    %v1131 = vrot.slane %v1130, 4
    %v1134 = vadd.f32 %v1120, %v1129
    %v1135 = vadd.f32 %v1121, %v1131
    %s1136 = sld [smem:[#allocation9 + $0x102]]
    %v1137 = vstv %s1136
    %v1138 = vmul.f32 %v1137, %v994
    %v1139 = vmul.f32 %v1137, %v995
    %v1142 = vrot.slane %v1138, 6
    %v1143 = vrot.slane %v1142, 4
    %v1144 = vrot.slane %v1139, 6
    %v1145 = vrot.slane %v1144, 4
    %v1148 = vadd.f32 %v1134, %v1143
    %v1149 = vadd.f32 %v1135, %v1145
    %s1150 = sld [smem:[#allocation9 + $0x182]]
    %v1151 = vstv %s1150
    %v1152 = vmul.f32 %v1151, %v994
    %v1153 = vmul.f32 %v1151, %v995
    %v1156 = vrot.slane %v1152, 7
    %v1157 = vrot.slane %v1156, 4
    %v1158 = vrot.slane %v1153, 7
    %v1159 = vrot.slane %v1158, 4
    %v1162 = vadd.f32 %v1148, %v1157
    %v1163 = vadd.f32 %v1149, %v1159
    %s1164 = sld [smem:[#allocation10 + $0x2]]
    %s1165 = sld [smem:[#allocation12 + $0x182]]
    %s1166 = sadd.f32 %s1164, %s1165
    %v1167 = vstv %s1166
    %v1168 = vadd.f32 %v1162, %v1167
    %v1169 = vadd.f32 %v1163, %v1167
    %v1170 = vrot.slane %v986, 6
    %v1171 = vrot.slane %v1170, 4
    %v1172 = vrot.slane %v987, 6
    %v1173 = vrot.slane %v1172, 4
    %v1176 = vsub.f32 %v1168, %v1171
    %v1177 = vsub.f32 %v1169, %v1173
    %v1178 = vmul.f32 %v1176, %v1176
    %v1179 = vmul.f32 %v1177, %v1177
    %v1180 = vadd.f32 %v1116, %v1178
    %v1181 = vadd.f32 %v1117, %v1179
    %s1182 = sld [smem:[#allocation9 + $0x3]]
    %v1183 = vstv %s1182
    %v1184 = vmul.f32 %v1183, %v994
    %v1185 = vmul.f32 %v1183, %v995
    %s1186 = sld [smem:[#allocation9 + $0x83]]
    %v1187 = vstv %s1186
    %v1188 = vmul.f32 %v1187, %v994
    %v1189 = vmul.f32 %v1187, %v995
    %v1192 = vrot.slane %v1188, 5
    %v1193 = vrot.slane %v1192, 4
    %v1194 = vrot.slane %v1189, 5
    %v1195 = vrot.slane %v1194, 4
    %v1198 = vadd.f32 %v1184, %v1193
    %v1199 = vadd.f32 %v1185, %v1195
    %s1200 = sld [smem:[#allocation9 + $0x103]]
    %v1201 = vstv %s1200
    %v1202 = vmul.f32 %v1201, %v994
    %v1203 = vmul.f32 %v1201, %v995
    %v1206 = vrot.slane %v1202, 6
    %v1207 = vrot.slane %v1206, 4
    %v1208 = vrot.slane %v1203, 6
    %v1209 = vrot.slane %v1208, 4
    %v1212 = vadd.f32 %v1198, %v1207
    %v1213 = vadd.f32 %v1199, %v1209
    %s1214 = sld [smem:[#allocation9 + $0x183]]
    %v1215 = vstv %s1214
    %v1216 = vmul.f32 %v1215, %v994
    %v1217 = vmul.f32 %v1215, %v995
    %v1220 = vrot.slane %v1216, 7
    %v1221 = vrot.slane %v1220, 4
    %v1222 = vrot.slane %v1217, 7
    %v1223 = vrot.slane %v1222, 4
    %v1226 = vadd.f32 %v1212, %v1221
    %v1227 = vadd.f32 %v1213, %v1223
    %s1228 = sld [smem:[#allocation10 + $0x3]]
    %s1229 = sld [smem:[#allocation12 + $0x183]]
    %s1230 = sadd.f32 %s1228, %s1229
    %v1231 = vstv %s1230
    %v1232 = vadd.f32 %v1226, %v1231
    %v1233 = vadd.f32 %v1227, %v1231
    %v1234 = vrot.slane %v986, 7
    %v1235 = vrot.slane %v1234, 4
    %v1236 = vrot.slane %v987, 7
    %v1237 = vrot.slane %v1236, 4
    %v1240 = vsub.f32 %v1232, %v1235
    %v1241 = vsub.f32 %v1233, %v1237
    %v1242 = vmul.f32 %v1240, %v1240
    %v1243 = vmul.f32 %v1241, %v1241
    %v1244 = vadd.f32 %v1180, %v1242
    %v1245 = vadd.f32 %v1181, %v1243
    %v1248 = vperm.slane %v1244, 0
    %v1249 = vperm.slane %v1244, 4
    %v1250 = vperm.slane %v1245, 0
    %v1251 = vperm.slane %v1245, 4
    %v1256 = vsel %vm377, %v1248, 0.0
    %v1257 = vsel %vm377, %v1249, 0.0
    %v1258 = vadd.f32 %v1256, %v1257
    %v1259 = vsel %vm377, %v1250, 0.0
    %v1260 = vadd.f32 %v1258, %v1259
    %v1261 = vsel %vm377, %v1251, 0.0
    %v1262 = vadd.f32 %v1260, %v1261
    %1263 = vadd.xlane.f32.xlu0 %v1262
    %v1264 = vpop.xlane.xlu0 %1263
    %v1265 = vrot.slane %v1264, 4
    %v1266 = vadd.f32 %v1264, %v1265
    %v1267 = vrot.slane %v1266, 2
    %v1268 = vadd.f32 %v1266, %v1267
    %v1269 = vrot.slane %v1268, 1
    %v1270 = vadd.f32 %v1268, %v1269
    %s1271 = vtos %v1270
    %s1272 = smul.f32 %s1271, 0.00048828125
    %v1273 = vstv %s1272
    %s1274 = scalar_lea.vmem [#allocation14], 24
    %1275 = vst [vmem:[%s1274] sm:$0xff] %v1273
    %s1276 = sld [smem:[#allocation2 + $0x4]]
    %s1277 = sld [smem:[#allocation7 + $0x4]]
    %s1278 = scalar_lea.vmem [#allocation13], 64
    %v1279 = vld [vmem:[%s1278] sm:$0xff]
    %v1280 = vld [vmem:[%s1278 + $0x8] sm:$0xff]
    %v1281 = vstv %s1276
    %v1282 = vmul.f32 %v1281, %v103
    %v1283 = vmul.f32 %v1281, %v104
    %v1284 = vstv %s1277
    %v1285 = vmul.f32 %v1284, %v1279
    %v1286 = vmul.f32 %v1284, %v1280
    %v1287 = vadd.f32 %v1282, %v1285
    %v1288 = vadd.f32 %v1283, %v1286
    %s1289 = sld [smem:[#allocation9]]
    %v1290 = vstv %s1289
    %v1291 = vmul.f32 %v1290, %v1287
    %v1292 = vmul.f32 %v1290, %v1288
    %s1293 = sld [smem:[#allocation9 + $0x80]]
    %v1294 = vstv %s1293
    %v1295 = vmul.f32 %v1294, %v1287
    %v1296 = vmul.f32 %v1294, %v1288
    %v1299 = vrot.slane %v1295, 5
    %v1300 = vrot.slane %v1299, 4
    %v1301 = vrot.slane %v1296, 5
    %v1302 = vrot.slane %v1301, 4
    %v1305 = vadd.f32 %v1291, %v1300
    %v1306 = vadd.f32 %v1292, %v1302
    %s1307 = sld [smem:[#allocation9 + $0x100]]
    %v1308 = vstv %s1307
    %v1309 = vmul.f32 %v1308, %v1287
    %v1310 = vmul.f32 %v1308, %v1288
    %v1313 = vrot.slane %v1309, 6
    %v1314 = vrot.slane %v1313, 4
    %v1315 = vrot.slane %v1310, 6
    %v1316 = vrot.slane %v1315, 4
    %v1319 = vadd.f32 %v1305, %v1314
    %v1320 = vadd.f32 %v1306, %v1316
    %s1321 = sld [smem:[#allocation9 + $0x180]]
    %v1322 = vstv %s1321
    %v1323 = vmul.f32 %v1322, %v1287
    %v1324 = vmul.f32 %v1322, %v1288
    %v1327 = vrot.slane %v1323, 7
    %v1328 = vrot.slane %v1327, 4
    %v1329 = vrot.slane %v1324, 7
    %v1330 = vrot.slane %v1329, 4
    %v1333 = vadd.f32 %v1319, %v1328
    %v1334 = vadd.f32 %v1320, %v1330
    %s1335 = sld [smem:[#allocation10]]
    %s1336 = sld [smem:[#allocation12 + $0x200]]
    %s1337 = sadd.f32 %s1335, %s1336
    %v1338 = vstv %s1337
    %v1339 = vadd.f32 %v1333, %v1338
    %v1340 = vadd.f32 %v1334, %v1338
    %v1341 = vsub.f32 %v1339, %v1279
    %v1342 = vsub.f32 %v1340, %v1280
    %v1343 = vmul.f32 %v1341, %v1341
    %v1344 = vmul.f32 %v1342, %v1342
    %s1345 = sld [smem:[#allocation9 + $0x1]]
    %v1346 = vstv %s1345
    %v1347 = vmul.f32 %v1346, %v1287
    %v1348 = vmul.f32 %v1346, %v1288
    %s1349 = sld [smem:[#allocation9 + $0x81]]
    %v1350 = vstv %s1349
    %v1351 = vmul.f32 %v1350, %v1287
    %v1352 = vmul.f32 %v1350, %v1288
    %v1355 = vrot.slane %v1351, 5
    %v1356 = vrot.slane %v1355, 4
    %v1357 = vrot.slane %v1352, 5
    %v1358 = vrot.slane %v1357, 4
    %v1361 = vadd.f32 %v1347, %v1356
    %v1362 = vadd.f32 %v1348, %v1358
    %s1363 = sld [smem:[#allocation9 + $0x101]]
    %v1364 = vstv %s1363
    %v1365 = vmul.f32 %v1364, %v1287
    %v1366 = vmul.f32 %v1364, %v1288
    %v1369 = vrot.slane %v1365, 6
    %v1370 = vrot.slane %v1369, 4
    %v1371 = vrot.slane %v1366, 6
    %v1372 = vrot.slane %v1371, 4
    %v1375 = vadd.f32 %v1361, %v1370
    %v1376 = vadd.f32 %v1362, %v1372
    %s1377 = sld [smem:[#allocation9 + $0x181]]
    %v1378 = vstv %s1377
    %v1379 = vmul.f32 %v1378, %v1287
    %v1380 = vmul.f32 %v1378, %v1288
    %v1383 = vrot.slane %v1379, 7
    %v1384 = vrot.slane %v1383, 4
    %v1385 = vrot.slane %v1380, 7
    %v1386 = vrot.slane %v1385, 4
    %v1389 = vadd.f32 %v1375, %v1384
    %v1390 = vadd.f32 %v1376, %v1386
    %s1391 = sld [smem:[#allocation10 + $0x1]]
    %s1392 = sld [smem:[#allocation12 + $0x201]]
    %s1393 = sadd.f32 %s1391, %s1392
    %v1394 = vstv %s1393
    %v1395 = vadd.f32 %v1389, %v1394
    %v1396 = vadd.f32 %v1390, %v1394
    %v1399 = vrot.slane %v1279, 5
    %v1400 = vrot.slane %v1399, 4
    %v1401 = vrot.slane %v1280, 5
    %v1402 = vrot.slane %v1401, 4
    %v1405 = vsub.f32 %v1395, %v1400
    %v1406 = vsub.f32 %v1396, %v1402
    %v1407 = vmul.f32 %v1405, %v1405
    %v1408 = vmul.f32 %v1406, %v1406
    %v1409 = vadd.f32 %v1343, %v1407
    %v1410 = vadd.f32 %v1344, %v1408
    %s1411 = sld [smem:[#allocation9 + $0x2]]
    %v1412 = vstv %s1411
    %v1413 = vmul.f32 %v1412, %v1287
    %v1414 = vmul.f32 %v1412, %v1288
    %s1415 = sld [smem:[#allocation9 + $0x82]]
    %v1416 = vstv %s1415
    %v1417 = vmul.f32 %v1416, %v1287
    %v1418 = vmul.f32 %v1416, %v1288
    %v1421 = vrot.slane %v1417, 5
    %v1422 = vrot.slane %v1421, 4
    %v1423 = vrot.slane %v1418, 5
    %v1424 = vrot.slane %v1423, 4
    %v1427 = vadd.f32 %v1413, %v1422
    %v1428 = vadd.f32 %v1414, %v1424
    %s1429 = sld [smem:[#allocation9 + $0x102]]
    %v1430 = vstv %s1429
    %v1431 = vmul.f32 %v1430, %v1287
    %v1432 = vmul.f32 %v1430, %v1288
    %v1435 = vrot.slane %v1431, 6
    %v1436 = vrot.slane %v1435, 4
    %v1437 = vrot.slane %v1432, 6
    %v1438 = vrot.slane %v1437, 4
    %v1441 = vadd.f32 %v1427, %v1436
    %v1442 = vadd.f32 %v1428, %v1438
    %s1443 = sld [smem:[#allocation9 + $0x182]]
    %v1444 = vstv %s1443
    %v1445 = vmul.f32 %v1444, %v1287
    %v1446 = vmul.f32 %v1444, %v1288
    %v1449 = vrot.slane %v1445, 7
    %v1450 = vrot.slane %v1449, 4
    %v1451 = vrot.slane %v1446, 7
    %v1452 = vrot.slane %v1451, 4
    %v1455 = vadd.f32 %v1441, %v1450
    %v1456 = vadd.f32 %v1442, %v1452
    %s1457 = sld [smem:[#allocation10 + $0x2]]
    %s1458 = sld [smem:[#allocation12 + $0x202]]
    %s1459 = sadd.f32 %s1457, %s1458
    %v1460 = vstv %s1459
    %v1461 = vadd.f32 %v1455, %v1460
    %v1462 = vadd.f32 %v1456, %v1460
    %v1463 = vrot.slane %v1279, 6
    %v1464 = vrot.slane %v1463, 4
    %v1465 = vrot.slane %v1280, 6
    %v1466 = vrot.slane %v1465, 4
    %v1469 = vsub.f32 %v1461, %v1464
    %v1470 = vsub.f32 %v1462, %v1466
    %v1471 = vmul.f32 %v1469, %v1469
    %v1472 = vmul.f32 %v1470, %v1470
    %v1473 = vadd.f32 %v1409, %v1471
    %v1474 = vadd.f32 %v1410, %v1472
    %s1475 = sld [smem:[#allocation9 + $0x3]]
    %v1476 = vstv %s1475
    %v1477 = vmul.f32 %v1476, %v1287
    %v1478 = vmul.f32 %v1476, %v1288
    %s1479 = sld [smem:[#allocation9 + $0x83]]
    %v1480 = vstv %s1479
    %v1481 = vmul.f32 %v1480, %v1287
    %v1482 = vmul.f32 %v1480, %v1288
    %v1485 = vrot.slane %v1481, 5
    %v1486 = vrot.slane %v1485, 4
    %v1487 = vrot.slane %v1482, 5
    %v1488 = vrot.slane %v1487, 4
    %v1491 = vadd.f32 %v1477, %v1486
    %v1492 = vadd.f32 %v1478, %v1488
    %s1493 = sld [smem:[#allocation9 + $0x103]]
    %v1494 = vstv %s1493
    %v1495 = vmul.f32 %v1494, %v1287
    %v1496 = vmul.f32 %v1494, %v1288
    %v1499 = vrot.slane %v1495, 6
    %v1500 = vrot.slane %v1499, 4
    %v1501 = vrot.slane %v1496, 6
    %v1502 = vrot.slane %v1501, 4
    %v1505 = vadd.f32 %v1491, %v1500
    %v1506 = vadd.f32 %v1492, %v1502
    %s1507 = sld [smem:[#allocation9 + $0x183]]
    %v1508 = vstv %s1507
    %v1509 = vmul.f32 %v1508, %v1287
    %v1510 = vmul.f32 %v1508, %v1288
    %v1513 = vrot.slane %v1509, 7
    %v1514 = vrot.slane %v1513, 4
    %v1515 = vrot.slane %v1510, 7
    %v1516 = vrot.slane %v1515, 4
    %v1519 = vadd.f32 %v1505, %v1514
    %v1520 = vadd.f32 %v1506, %v1516
    %s1521 = sld [smem:[#allocation10 + $0x3]]
    %s1522 = sld [smem:[#allocation12 + $0x203]]
    %s1523 = sadd.f32 %s1521, %s1522
    %v1524 = vstv %s1523
    %v1525 = vadd.f32 %v1519, %v1524
    %v1526 = vadd.f32 %v1520, %v1524
    %v1527 = vrot.slane %v1279, 7
    %v1528 = vrot.slane %v1527, 4
    %v1529 = vrot.slane %v1280, 7
    %v1530 = vrot.slane %v1529, 4
    %v1533 = vsub.f32 %v1525, %v1528
    %v1534 = vsub.f32 %v1526, %v1530
    %v1535 = vmul.f32 %v1533, %v1533
    %v1536 = vmul.f32 %v1534, %v1534
    %v1537 = vadd.f32 %v1473, %v1535
    %v1538 = vadd.f32 %v1474, %v1536
    %v1541 = vperm.slane %v1537, 0
    %v1542 = vperm.slane %v1537, 4
    %v1543 = vperm.slane %v1538, 0
    %v1544 = vperm.slane %v1538, 4
    %v1549 = vsel %vm377, %v1541, 0.0
    %v1550 = vsel %vm377, %v1542, 0.0
    %v1551 = vadd.f32 %v1549, %v1550
    %v1552 = vsel %vm377, %v1543, 0.0
    %v1553 = vadd.f32 %v1551, %v1552
    %v1554 = vsel %vm377, %v1544, 0.0
    %v1555 = vadd.f32 %v1553, %v1554
    %1556 = vadd.xlane.f32.xlu0 %v1555
    %v1557 = vpop.xlane.xlu0 %1556
    %v1558 = vrot.slane %v1557, 4
    %v1559 = vadd.f32 %v1557, %v1558
    %v1560 = vrot.slane %v1559, 2
    %v1561 = vadd.f32 %v1559, %v1560
    %v1562 = vrot.slane %v1561, 1
    %v1563 = vadd.f32 %v1561, %v1562
    %s1564 = vtos %v1563
    %s1565 = smul.f32 %s1564, 0.00048828125
    %v1566 = vstv %s1565
    %s1567 = scalar_lea.vmem [#allocation14], 32
    %1568 = vst [vmem:[%s1567] sm:$0xff] %v1566
    %s1569 = sld [smem:[#allocation2 + $0x5]]
    %s1570 = sld [smem:[#allocation7 + $0x5]]
    %s1571 = scalar_lea.vmem [#allocation13], 80
    %v1572 = vld [vmem:[%s1571] sm:$0xff]
    %v1573 = vld [vmem:[%s1571 + $0x8] sm:$0xff]
    %v1574 = vstv %s1569
    %v1575 = vmul.f32 %v1574, %v103
    %v1576 = vmul.f32 %v1574, %v104
    %v1577 = vstv %s1570
    %v1578 = vmul.f32 %v1577, %v1572
    %v1579 = vmul.f32 %v1577, %v1573
    %v1580 = vadd.f32 %v1575, %v1578
    %v1581 = vadd.f32 %v1576, %v1579
    %s1582 = sld [smem:[#allocation9]]
    %v1583 = vstv %s1582
    %v1584 = vmul.f32 %v1583, %v1580
    %v1585 = vmul.f32 %v1583, %v1581
    %s1586 = sld [smem:[#allocation9 + $0x80]]
    %v1587 = vstv %s1586
    %v1588 = vmul.f32 %v1587, %v1580
    %v1589 = vmul.f32 %v1587, %v1581
    %v1592 = vrot.slane %v1588, 5
    %v1593 = vrot.slane %v1592, 4
    %v1594 = vrot.slane %v1589, 5
    %v1595 = vrot.slane %v1594, 4
    %v1598 = vadd.f32 %v1584, %v1593
    %v1599 = vadd.f32 %v1585, %v1595
    %s1600 = sld [smem:[#allocation9 + $0x100]]
    %v1601 = vstv %s1600
    %v1602 = vmul.f32 %v1601, %v1580
    %v1603 = vmul.f32 %v1601, %v1581
    %v1606 = vrot.slane %v1602, 6
    %v1607 = vrot.slane %v1606, 4
    %v1608 = vrot.slane %v1603, 6
    %v1609 = vrot.slane %v1608, 4
    %v1612 = vadd.f32 %v1598, %v1607
    %v1613 = vadd.f32 %v1599, %v1609
    %s1614 = sld [smem:[#allocation9 + $0x180]]
    %v1615 = vstv %s1614
    %v1616 = vmul.f32 %v1615, %v1580
    %v1617 = vmul.f32 %v1615, %v1581
    %v1620 = vrot.slane %v1616, 7
    %v1621 = vrot.slane %v1620, 4
    %v1622 = vrot.slane %v1617, 7
    %v1623 = vrot.slane %v1622, 4
    %v1626 = vadd.f32 %v1612, %v1621
    %v1627 = vadd.f32 %v1613, %v1623
    %s1628 = sld [smem:[#allocation10]]
    %s1629 = sld [smem:[#allocation12 + $0x280]]
    %s1630 = sadd.f32 %s1628, %s1629
    %v1631 = vstv %s1630
    %v1632 = vadd.f32 %v1626, %v1631
    %v1633 = vadd.f32 %v1627, %v1631
    %v1634 = vsub.f32 %v1632, %v1572
    %v1635 = vsub.f32 %v1633, %v1573
    %v1636 = vmul.f32 %v1634, %v1634
    %v1637 = vmul.f32 %v1635, %v1635
    %s1638 = sld [smem:[#allocation9 + $0x1]]
    %v1639 = vstv %s1638
    %v1640 = vmul.f32 %v1639, %v1580
    %v1641 = vmul.f32 %v1639, %v1581
    %s1642 = sld [smem:[#allocation9 + $0x81]]
    %v1643 = vstv %s1642
    %v1644 = vmul.f32 %v1643, %v1580
    %v1645 = vmul.f32 %v1643, %v1581
    %v1648 = vrot.slane %v1644, 5
    %v1649 = vrot.slane %v1648, 4
    %v1650 = vrot.slane %v1645, 5
    %v1651 = vrot.slane %v1650, 4
    %v1654 = vadd.f32 %v1640, %v1649
    %v1655 = vadd.f32 %v1641, %v1651
    %s1656 = sld [smem:[#allocation9 + $0x101]]
    %v1657 = vstv %s1656
    %v1658 = vmul.f32 %v1657, %v1580
    %v1659 = vmul.f32 %v1657, %v1581
    %v1662 = vrot.slane %v1658, 6
    %v1663 = vrot.slane %v1662, 4
    %v1664 = vrot.slane %v1659, 6
    %v1665 = vrot.slane %v1664, 4
    %v1668 = vadd.f32 %v1654, %v1663
    %v1669 = vadd.f32 %v1655, %v1665
    %s1670 = sld [smem:[#allocation9 + $0x181]]
    %v1671 = vstv %s1670
    %v1672 = vmul.f32 %v1671, %v1580
    %v1673 = vmul.f32 %v1671, %v1581
    %v1676 = vrot.slane %v1672, 7
    %v1677 = vrot.slane %v1676, 4
    %v1678 = vrot.slane %v1673, 7
    %v1679 = vrot.slane %v1678, 4
    %v1682 = vadd.f32 %v1668, %v1677
    %v1683 = vadd.f32 %v1669, %v1679
    %s1684 = sld [smem:[#allocation10 + $0x1]]
    %s1685 = sld [smem:[#allocation12 + $0x281]]
    %s1686 = sadd.f32 %s1684, %s1685
    %v1687 = vstv %s1686
    %v1688 = vadd.f32 %v1682, %v1687
    %v1689 = vadd.f32 %v1683, %v1687
    %v1692 = vrot.slane %v1572, 5
    %v1693 = vrot.slane %v1692, 4
    %v1694 = vrot.slane %v1573, 5
    %v1695 = vrot.slane %v1694, 4
    %v1698 = vsub.f32 %v1688, %v1693
    %v1699 = vsub.f32 %v1689, %v1695
    %v1700 = vmul.f32 %v1698, %v1698
    %v1701 = vmul.f32 %v1699, %v1699
    %v1702 = vadd.f32 %v1636, %v1700
    %v1703 = vadd.f32 %v1637, %v1701
    %s1704 = sld [smem:[#allocation9 + $0x2]]
    %v1705 = vstv %s1704
    %v1706 = vmul.f32 %v1705, %v1580
    %v1707 = vmul.f32 %v1705, %v1581
    %s1708 = sld [smem:[#allocation9 + $0x82]]
    %v1709 = vstv %s1708
    %v1710 = vmul.f32 %v1709, %v1580
    %v1711 = vmul.f32 %v1709, %v1581
    %v1714 = vrot.slane %v1710, 5
    %v1715 = vrot.slane %v1714, 4
    %v1716 = vrot.slane %v1711, 5
    %v1717 = vrot.slane %v1716, 4
    %v1720 = vadd.f32 %v1706, %v1715
    %v1721 = vadd.f32 %v1707, %v1717
    %s1722 = sld [smem:[#allocation9 + $0x102]]
    %v1723 = vstv %s1722
    %v1724 = vmul.f32 %v1723, %v1580
    %v1725 = vmul.f32 %v1723, %v1581
    %v1728 = vrot.slane %v1724, 6
    %v1729 = vrot.slane %v1728, 4
    %v1730 = vrot.slane %v1725, 6
    %v1731 = vrot.slane %v1730, 4
    %v1734 = vadd.f32 %v1720, %v1729
    %v1735 = vadd.f32 %v1721, %v1731
    %s1736 = sld [smem:[#allocation9 + $0x182]]
    %v1737 = vstv %s1736
    %v1738 = vmul.f32 %v1737, %v1580
    %v1739 = vmul.f32 %v1737, %v1581
    %v1742 = vrot.slane %v1738, 7
    %v1743 = vrot.slane %v1742, 4
    %v1744 = vrot.slane %v1739, 7
    %v1745 = vrot.slane %v1744, 4
    %v1748 = vadd.f32 %v1734, %v1743
    %v1749 = vadd.f32 %v1735, %v1745
    %s1750 = sld [smem:[#allocation10 + $0x2]]
    %s1751 = sld [smem:[#allocation12 + $0x282]]
    %s1752 = sadd.f32 %s1750, %s1751
    %v1753 = vstv %s1752
    %v1754 = vadd.f32 %v1748, %v1753
    %v1755 = vadd.f32 %v1749, %v1753
    %v1756 = vrot.slane %v1572, 6
    %v1757 = vrot.slane %v1756, 4
    %v1758 = vrot.slane %v1573, 6
    %v1759 = vrot.slane %v1758, 4
    %v1762 = vsub.f32 %v1754, %v1757
    %v1763 = vsub.f32 %v1755, %v1759
    %v1764 = vmul.f32 %v1762, %v1762
    %v1765 = vmul.f32 %v1763, %v1763
    %v1766 = vadd.f32 %v1702, %v1764
    %v1767 = vadd.f32 %v1703, %v1765
    %s1768 = sld [smem:[#allocation9 + $0x3]]
    %v1769 = vstv %s1768
    %v1770 = vmul.f32 %v1769, %v1580
    %v1771 = vmul.f32 %v1769, %v1581
    %s1772 = sld [smem:[#allocation9 + $0x83]]
    %v1773 = vstv %s1772
    %v1774 = vmul.f32 %v1773, %v1580
    %v1775 = vmul.f32 %v1773, %v1581
    %v1778 = vrot.slane %v1774, 5
    %v1779 = vrot.slane %v1778, 4
    %v1780 = vrot.slane %v1775, 5
    %v1781 = vrot.slane %v1780, 4
    %v1784 = vadd.f32 %v1770, %v1779
    %v1785 = vadd.f32 %v1771, %v1781
    %s1786 = sld [smem:[#allocation9 + $0x103]]
    %v1787 = vstv %s1786
    %v1788 = vmul.f32 %v1787, %v1580
    %v1789 = vmul.f32 %v1787, %v1581
    %v1792 = vrot.slane %v1788, 6
    %v1793 = vrot.slane %v1792, 4
    %v1794 = vrot.slane %v1789, 6
    %v1795 = vrot.slane %v1794, 4
    %v1798 = vadd.f32 %v1784, %v1793
    %v1799 = vadd.f32 %v1785, %v1795
    %s1800 = sld [smem:[#allocation9 + $0x183]]
    %v1801 = vstv %s1800
    %v1802 = vmul.f32 %v1801, %v1580
    %v1803 = vmul.f32 %v1801, %v1581
    %v1806 = vrot.slane %v1802, 7
    %v1807 = vrot.slane %v1806, 4
    %v1808 = vrot.slane %v1803, 7
    %v1809 = vrot.slane %v1808, 4
    %v1812 = vadd.f32 %v1798, %v1807
    %v1813 = vadd.f32 %v1799, %v1809
    %s1814 = sld [smem:[#allocation10 + $0x3]]
    %s1815 = sld [smem:[#allocation12 + $0x283]]
    %s1816 = sadd.f32 %s1814, %s1815
    %v1817 = vstv %s1816
    %v1818 = vadd.f32 %v1812, %v1817
    %v1819 = vadd.f32 %v1813, %v1817
    %v1820 = vrot.slane %v1572, 7
    %v1821 = vrot.slane %v1820, 4
    %v1822 = vrot.slane %v1573, 7
    %v1823 = vrot.slane %v1822, 4
    %v1826 = vsub.f32 %v1818, %v1821
    %v1827 = vsub.f32 %v1819, %v1823
    %v1828 = vmul.f32 %v1826, %v1826
    %v1829 = vmul.f32 %v1827, %v1827
    %v1830 = vadd.f32 %v1766, %v1828
    %v1831 = vadd.f32 %v1767, %v1829
    %v1834 = vperm.slane %v1830, 0
    %v1835 = vperm.slane %v1830, 4
    %v1836 = vperm.slane %v1831, 0
    %v1837 = vperm.slane %v1831, 4
    %v1842 = vsel %vm377, %v1834, 0.0
    %v1843 = vsel %vm377, %v1835, 0.0
    %v1844 = vadd.f32 %v1842, %v1843
    %v1845 = vsel %vm377, %v1836, 0.0
    %v1846 = vadd.f32 %v1844, %v1845
    %v1847 = vsel %vm377, %v1837, 0.0
    %v1848 = vadd.f32 %v1846, %v1847
    %1849 = vadd.xlane.f32.xlu0 %v1848
    %v1850 = vpop.xlane.xlu0 %1849
    %v1851 = vrot.slane %v1850, 4
    %v1852 = vadd.f32 %v1850, %v1851
    %v1853 = vrot.slane %v1852, 2
    %v1854 = vadd.f32 %v1852, %v1853
    %v1855 = vrot.slane %v1854, 1
    %v1856 = vadd.f32 %v1854, %v1855
    %s1857 = vtos %v1856
    %s1858 = smul.f32 %s1857, 0.00048828125
    %v1859 = vstv %s1858
    %s1860 = scalar_lea.vmem [#allocation14], 40
    %1861 = vst [vmem:[%s1860] sm:$0xff] %v1859
    %s1862 = sld [smem:[#allocation2 + $0x6]]
    %s1863 = sld [smem:[#allocation7 + $0x6]]
    %s1864 = scalar_lea.vmem [#allocation13], 96
    %v1865 = vld [vmem:[%s1864] sm:$0xff]
    %v1866 = vld [vmem:[%s1864 + $0x8] sm:$0xff]
    %v1867 = vstv %s1862
    %v1868 = vmul.f32 %v1867, %v103
    %v1869 = vmul.f32 %v1867, %v104
    %v1870 = vstv %s1863
    %v1871 = vmul.f32 %v1870, %v1865
    %v1872 = vmul.f32 %v1870, %v1866
    %v1873 = vadd.f32 %v1868, %v1871
    %v1874 = vadd.f32 %v1869, %v1872
    %s1875 = sld [smem:[#allocation9]]
    %v1876 = vstv %s1875
    %v1877 = vmul.f32 %v1876, %v1873
    %v1878 = vmul.f32 %v1876, %v1874
    %s1879 = sld [smem:[#allocation9 + $0x80]]
    %v1880 = vstv %s1879
    %v1881 = vmul.f32 %v1880, %v1873
    %v1882 = vmul.f32 %v1880, %v1874
    %v1885 = vrot.slane %v1881, 5
    %v1886 = vrot.slane %v1885, 4
    %v1887 = vrot.slane %v1882, 5
    %v1888 = vrot.slane %v1887, 4
    %v1891 = vadd.f32 %v1877, %v1886
    %v1892 = vadd.f32 %v1878, %v1888
    %s1893 = sld [smem:[#allocation9 + $0x100]]
    %v1894 = vstv %s1893
    %v1895 = vmul.f32 %v1894, %v1873
    %v1896 = vmul.f32 %v1894, %v1874
    %v1899 = vrot.slane %v1895, 6
    %v1900 = vrot.slane %v1899, 4
    %v1901 = vrot.slane %v1896, 6
    %v1902 = vrot.slane %v1901, 4
    %v1905 = vadd.f32 %v1891, %v1900
    %v1906 = vadd.f32 %v1892, %v1902
    %s1907 = sld [smem:[#allocation9 + $0x180]]
    %v1908 = vstv %s1907
    %v1909 = vmul.f32 %v1908, %v1873
    %v1910 = vmul.f32 %v1908, %v1874
    %v1913 = vrot.slane %v1909, 7
    %v1914 = vrot.slane %v1913, 4
    %v1915 = vrot.slane %v1910, 7
    %v1916 = vrot.slane %v1915, 4
    %v1919 = vadd.f32 %v1905, %v1914
    %v1920 = vadd.f32 %v1906, %v1916
    %s1921 = sld [smem:[#allocation10]]
    %s1922 = sld [smem:[#allocation12 + $0x300]]
    %s1923 = sadd.f32 %s1921, %s1922
    %v1924 = vstv %s1923
    %v1925 = vadd.f32 %v1919, %v1924
    %v1926 = vadd.f32 %v1920, %v1924
    %v1927 = vsub.f32 %v1925, %v1865
    %v1928 = vsub.f32 %v1926, %v1866
    %v1929 = vmul.f32 %v1927, %v1927
    %v1930 = vmul.f32 %v1928, %v1928
    %s1931 = sld [smem:[#allocation9 + $0x1]]
    %v1932 = vstv %s1931
    %v1933 = vmul.f32 %v1932, %v1873
    %v1934 = vmul.f32 %v1932, %v1874
    %s1935 = sld [smem:[#allocation9 + $0x81]]
    %v1936 = vstv %s1935
    %v1937 = vmul.f32 %v1936, %v1873
    %v1938 = vmul.f32 %v1936, %v1874
    %v1941 = vrot.slane %v1937, 5
    %v1942 = vrot.slane %v1941, 4
    %v1943 = vrot.slane %v1938, 5
    %v1944 = vrot.slane %v1943, 4
    %v1947 = vadd.f32 %v1933, %v1942
    %v1948 = vadd.f32 %v1934, %v1944
    %s1949 = sld [smem:[#allocation9 + $0x101]]
    %v1950 = vstv %s1949
    %v1951 = vmul.f32 %v1950, %v1873
    %v1952 = vmul.f32 %v1950, %v1874
    %v1955 = vrot.slane %v1951, 6
    %v1956 = vrot.slane %v1955, 4
    %v1957 = vrot.slane %v1952, 6
    %v1958 = vrot.slane %v1957, 4
    %v1961 = vadd.f32 %v1947, %v1956
    %v1962 = vadd.f32 %v1948, %v1958
    %s1963 = sld [smem:[#allocation9 + $0x181]]
    %v1964 = vstv %s1963
    %v1965 = vmul.f32 %v1964, %v1873
    %v1966 = vmul.f32 %v1964, %v1874
    %v1969 = vrot.slane %v1965, 7
    %v1970 = vrot.slane %v1969, 4
    %v1971 = vrot.slane %v1966, 7
    %v1972 = vrot.slane %v1971, 4
    %v1975 = vadd.f32 %v1961, %v1970
    %v1976 = vadd.f32 %v1962, %v1972
    %s1977 = sld [smem:[#allocation10 + $0x1]]
    %s1978 = sld [smem:[#allocation12 + $0x301]]
    %s1979 = sadd.f32 %s1977, %s1978
    %v1980 = vstv %s1979
    %v1981 = vadd.f32 %v1975, %v1980
    %v1982 = vadd.f32 %v1976, %v1980
    %v1985 = vrot.slane %v1865, 5
    %v1986 = vrot.slane %v1985, 4
    %v1987 = vrot.slane %v1866, 5
    %v1988 = vrot.slane %v1987, 4
    %v1991 = vsub.f32 %v1981, %v1986
    %v1992 = vsub.f32 %v1982, %v1988
    %v1993 = vmul.f32 %v1991, %v1991
    %v1994 = vmul.f32 %v1992, %v1992
    %v1995 = vadd.f32 %v1929, %v1993
    %v1996 = vadd.f32 %v1930, %v1994
    %s1997 = sld [smem:[#allocation9 + $0x2]]
    %v1998 = vstv %s1997
    %v1999 = vmul.f32 %v1998, %v1873
    %v2000 = vmul.f32 %v1998, %v1874
    %s2001 = sld [smem:[#allocation9 + $0x82]]
    %v2002 = vstv %s2001
    %v2003 = vmul.f32 %v2002, %v1873
    %v2004 = vmul.f32 %v2002, %v1874
    %v2007 = vrot.slane %v2003, 5
    %v2008 = vrot.slane %v2007, 4
    %v2009 = vrot.slane %v2004, 5
    %v2010 = vrot.slane %v2009, 4
    %v2013 = vadd.f32 %v1999, %v2008
    %v2014 = vadd.f32 %v2000, %v2010
    %s2015 = sld [smem:[#allocation9 + $0x102]]
    %v2016 = vstv %s2015
    %v2017 = vmul.f32 %v2016, %v1873
    %v2018 = vmul.f32 %v2016, %v1874
    %v2021 = vrot.slane %v2017, 6
    %v2022 = vrot.slane %v2021, 4
    %v2023 = vrot.slane %v2018, 6
    %v2024 = vrot.slane %v2023, 4
    %v2027 = vadd.f32 %v2013, %v2022
    %v2028 = vadd.f32 %v2014, %v2024
    %s2029 = sld [smem:[#allocation9 + $0x182]]
    %v2030 = vstv %s2029
    %v2031 = vmul.f32 %v2030, %v1873
    %v2032 = vmul.f32 %v2030, %v1874
    %v2035 = vrot.slane %v2031, 7
    %v2036 = vrot.slane %v2035, 4
    %v2037 = vrot.slane %v2032, 7
    %v2038 = vrot.slane %v2037, 4
    %v2041 = vadd.f32 %v2027, %v2036
    %v2042 = vadd.f32 %v2028, %v2038
    %s2043 = sld [smem:[#allocation10 + $0x2]]
    %s2044 = sld [smem:[#allocation12 + $0x302]]
    %s2045 = sadd.f32 %s2043, %s2044
    %v2046 = vstv %s2045
    %v2047 = vadd.f32 %v2041, %v2046
    %v2048 = vadd.f32 %v2042, %v2046
    %v2049 = vrot.slane %v1865, 6
    %v2050 = vrot.slane %v2049, 4
    %v2051 = vrot.slane %v1866, 6
    %v2052 = vrot.slane %v2051, 4
    %v2055 = vsub.f32 %v2047, %v2050
    %v2056 = vsub.f32 %v2048, %v2052
    %v2057 = vmul.f32 %v2055, %v2055
    %v2058 = vmul.f32 %v2056, %v2056
    %v2059 = vadd.f32 %v1995, %v2057
    %v2060 = vadd.f32 %v1996, %v2058
    %s2061 = sld [smem:[#allocation9 + $0x3]]
    %v2062 = vstv %s2061
    %v2063 = vmul.f32 %v2062, %v1873
    %v2064 = vmul.f32 %v2062, %v1874
    %s2065 = sld [smem:[#allocation9 + $0x83]]
    %v2066 = vstv %s2065
    %v2067 = vmul.f32 %v2066, %v1873
    %v2068 = vmul.f32 %v2066, %v1874
    %v2071 = vrot.slane %v2067, 5
    %v2072 = vrot.slane %v2071, 4
    %v2073 = vrot.slane %v2068, 5
    %v2074 = vrot.slane %v2073, 4
    %v2077 = vadd.f32 %v2063, %v2072
    %v2078 = vadd.f32 %v2064, %v2074
    %s2079 = sld [smem:[#allocation9 + $0x103]]
    %v2080 = vstv %s2079
    %v2081 = vmul.f32 %v2080, %v1873
    %v2082 = vmul.f32 %v2080, %v1874
    %v2085 = vrot.slane %v2081, 6
    %v2086 = vrot.slane %v2085, 4
    %v2087 = vrot.slane %v2082, 6
    %v2088 = vrot.slane %v2087, 4
    %v2091 = vadd.f32 %v2077, %v2086
    %v2092 = vadd.f32 %v2078, %v2088
    %s2093 = sld [smem:[#allocation9 + $0x183]]
    %v2094 = vstv %s2093
    %v2095 = vmul.f32 %v2094, %v1873
    %v2096 = vmul.f32 %v2094, %v1874
    %v2099 = vrot.slane %v2095, 7
    %v2100 = vrot.slane %v2099, 4
    %v2101 = vrot.slane %v2096, 7
    %v2102 = vrot.slane %v2101, 4
    %v2105 = vadd.f32 %v2091, %v2100
    %v2106 = vadd.f32 %v2092, %v2102
    %s2107 = sld [smem:[#allocation10 + $0x3]]
    %s2108 = sld [smem:[#allocation12 + $0x303]]
    %s2109 = sadd.f32 %s2107, %s2108
    %v2110 = vstv %s2109
    %v2111 = vadd.f32 %v2105, %v2110
    %v2112 = vadd.f32 %v2106, %v2110
    %v2113 = vrot.slane %v1865, 7
    %v2114 = vrot.slane %v2113, 4
    %v2115 = vrot.slane %v1866, 7
    %v2116 = vrot.slane %v2115, 4
    %v2119 = vsub.f32 %v2111, %v2114
    %v2120 = vsub.f32 %v2112, %v2116
    %v2121 = vmul.f32 %v2119, %v2119
    %v2122 = vmul.f32 %v2120, %v2120
    %v2123 = vadd.f32 %v2059, %v2121
    %v2124 = vadd.f32 %v2060, %v2122
    %v2127 = vperm.slane %v2123, 0
    %v2128 = vperm.slane %v2123, 4
    %v2129 = vperm.slane %v2124, 0
    %v2130 = vperm.slane %v2124, 4
    %v2135 = vsel %vm377, %v2127, 0.0
    %v2136 = vsel %vm377, %v2128, 0.0
    %v2137 = vadd.f32 %v2135, %v2136
    %v2138 = vsel %vm377, %v2129, 0.0
    %v2139 = vadd.f32 %v2137, %v2138
    %v2140 = vsel %vm377, %v2130, 0.0
    %v2141 = vadd.f32 %v2139, %v2140
    %2142 = vadd.xlane.f32.xlu0 %v2141
    %v2143 = vpop.xlane.xlu0 %2142
    %v2144 = vrot.slane %v2143, 4
    %v2145 = vadd.f32 %v2143, %v2144
    %v2146 = vrot.slane %v2145, 2
    %v2147 = vadd.f32 %v2145, %v2146
    %v2148 = vrot.slane %v2147, 1
    %v2149 = vadd.f32 %v2147, %v2148
    %s2150 = vtos %v2149
    %s2151 = smul.f32 %s2150, 0.00048828125
    %v2152 = vstv %s2151
    %s2153 = scalar_lea.vmem [#allocation14], 48
    %2154 = vst [vmem:[%s2153] sm:$0xff] %v2152
    %s2155 = sld [smem:[#allocation2 + $0x7]]
    %s2156 = sld [smem:[#allocation7 + $0x7]]
    %s2157 = scalar_lea.vmem [#allocation13], 112
    %v2158 = vld [vmem:[%s2157] sm:$0xff]
    %v2159 = vld [vmem:[%s2157 + $0x8] sm:$0xff]
    %v2160 = vstv %s2155
    %v2161 = vmul.f32 %v2160, %v103
    %v2162 = vmul.f32 %v2160, %v104
    %v2163 = vstv %s2156
    %v2164 = vmul.f32 %v2163, %v2158
    %v2165 = vmul.f32 %v2163, %v2159
    %v2166 = vadd.f32 %v2161, %v2164
    %v2167 = vadd.f32 %v2162, %v2165
    %s2168 = sld [smem:[#allocation9]]
    %v2169 = vstv %s2168
    %v2170 = vmul.f32 %v2169, %v2166
    %v2171 = vmul.f32 %v2169, %v2167
    %s2172 = sld [smem:[#allocation9 + $0x80]]
    %v2173 = vstv %s2172
    %v2174 = vmul.f32 %v2173, %v2166
    %v2175 = vmul.f32 %v2173, %v2167
    %v2178 = vrot.slane %v2174, 5
    %v2179 = vrot.slane %v2178, 4
    %v2180 = vrot.slane %v2175, 5
    %v2181 = vrot.slane %v2180, 4
    %v2184 = vadd.f32 %v2170, %v2179
    %v2185 = vadd.f32 %v2171, %v2181
    %s2186 = sld [smem:[#allocation9 + $0x100]]
    %v2187 = vstv %s2186
    %v2188 = vmul.f32 %v2187, %v2166
    %v2189 = vmul.f32 %v2187, %v2167
    %v2192 = vrot.slane %v2188, 6
    %v2193 = vrot.slane %v2192, 4
    %v2194 = vrot.slane %v2189, 6
    %v2195 = vrot.slane %v2194, 4
    %v2198 = vadd.f32 %v2184, %v2193
    %v2199 = vadd.f32 %v2185, %v2195
    %s2200 = sld [smem:[#allocation9 + $0x180]]
    %v2201 = vstv %s2200
    %v2202 = vmul.f32 %v2201, %v2166
    %v2203 = vmul.f32 %v2201, %v2167
    %v2206 = vrot.slane %v2202, 7
    %v2207 = vrot.slane %v2206, 4
    %v2208 = vrot.slane %v2203, 7
    %v2209 = vrot.slane %v2208, 4
    %v2212 = vadd.f32 %v2198, %v2207
    %v2213 = vadd.f32 %v2199, %v2209
    %s2214 = sld [smem:[#allocation10]]
    %s2215 = sld [smem:[#allocation12 + $0x380]]
    %s2216 = sadd.f32 %s2214, %s2215
    %v2217 = vstv %s2216
    %v2218 = vadd.f32 %v2212, %v2217
    %v2219 = vadd.f32 %v2213, %v2217
    %v2220 = vsub.f32 %v2218, %v2158
    %v2221 = vsub.f32 %v2219, %v2159
    %v2222 = vmul.f32 %v2220, %v2220
    %v2223 = vmul.f32 %v2221, %v2221
    %s2224 = sld [smem:[#allocation9 + $0x1]]
    %v2225 = vstv %s2224
    %v2226 = vmul.f32 %v2225, %v2166
    %v2227 = vmul.f32 %v2225, %v2167
    %s2228 = sld [smem:[#allocation9 + $0x81]]
    %v2229 = vstv %s2228
    %v2230 = vmul.f32 %v2229, %v2166
    %v2231 = vmul.f32 %v2229, %v2167
    %v2234 = vrot.slane %v2230, 5
    %v2235 = vrot.slane %v2234, 4
    %v2236 = vrot.slane %v2231, 5
    %v2237 = vrot.slane %v2236, 4
    %v2240 = vadd.f32 %v2226, %v2235
    %v2241 = vadd.f32 %v2227, %v2237
    %s2242 = sld [smem:[#allocation9 + $0x101]]
    %v2243 = vstv %s2242
    %v2244 = vmul.f32 %v2243, %v2166
    %v2245 = vmul.f32 %v2243, %v2167
    %v2248 = vrot.slane %v2244, 6
    %v2249 = vrot.slane %v2248, 4
    %v2250 = vrot.slane %v2245, 6
    %v2251 = vrot.slane %v2250, 4
    %v2254 = vadd.f32 %v2240, %v2249
    %v2255 = vadd.f32 %v2241, %v2251
    %s2256 = sld [smem:[#allocation9 + $0x181]]
    %v2257 = vstv %s2256
    %v2258 = vmul.f32 %v2257, %v2166
    %v2259 = vmul.f32 %v2257, %v2167
    %v2262 = vrot.slane %v2258, 7
    %v2263 = vrot.slane %v2262, 4
    %v2264 = vrot.slane %v2259, 7
    %v2265 = vrot.slane %v2264, 4
    %v2268 = vadd.f32 %v2254, %v2263
    %v2269 = vadd.f32 %v2255, %v2265
    %s2270 = sld [smem:[#allocation10 + $0x1]]
    %s2271 = sld [smem:[#allocation12 + $0x381]]
    %s2272 = sadd.f32 %s2270, %s2271
    %v2273 = vstv %s2272
    %v2274 = vadd.f32 %v2268, %v2273
    %v2275 = vadd.f32 %v2269, %v2273
    %v2278 = vrot.slane %v2158, 5
    %v2279 = vrot.slane %v2278, 4
    %v2280 = vrot.slane %v2159, 5
    %v2281 = vrot.slane %v2280, 4
    %v2284 = vsub.f32 %v2274, %v2279
    %v2285 = vsub.f32 %v2275, %v2281
    %v2286 = vmul.f32 %v2284, %v2284
    %v2287 = vmul.f32 %v2285, %v2285
    %v2288 = vadd.f32 %v2222, %v2286
    %v2289 = vadd.f32 %v2223, %v2287
    %s2290 = sld [smem:[#allocation9 + $0x2]]
    %v2291 = vstv %s2290
    %v2292 = vmul.f32 %v2291, %v2166
    %v2293 = vmul.f32 %v2291, %v2167
    %s2294 = sld [smem:[#allocation9 + $0x82]]
    %v2295 = vstv %s2294
    %v2296 = vmul.f32 %v2295, %v2166
    %v2297 = vmul.f32 %v2295, %v2167
    %v2300 = vrot.slane %v2296, 5
    %v2301 = vrot.slane %v2300, 4
    %v2302 = vrot.slane %v2297, 5
    %v2303 = vrot.slane %v2302, 4
    %v2306 = vadd.f32 %v2292, %v2301
    %v2307 = vadd.f32 %v2293, %v2303
    %s2308 = sld [smem:[#allocation9 + $0x102]]
    %v2309 = vstv %s2308
    %v2310 = vmul.f32 %v2309, %v2166
    %v2311 = vmul.f32 %v2309, %v2167
    %v2314 = vrot.slane %v2310, 6
    %v2315 = vrot.slane %v2314, 4
    %v2316 = vrot.slane %v2311, 6
    %v2317 = vrot.slane %v2316, 4
    %v2320 = vadd.f32 %v2306, %v2315
    %v2321 = vadd.f32 %v2307, %v2317
    %s2322 = sld [smem:[#allocation9 + $0x182]]
    %v2323 = vstv %s2322
    %v2324 = vmul.f32 %v2323, %v2166
    %v2325 = vmul.f32 %v2323, %v2167
    %v2328 = vrot.slane %v2324, 7
    %v2329 = vrot.slane %v2328, 4
    %v2330 = vrot.slane %v2325, 7
    %v2331 = vrot.slane %v2330, 4
    %v2334 = vadd.f32 %v2320, %v2329
    %v2335 = vadd.f32 %v2321, %v2331
    %s2336 = sld [smem:[#allocation10 + $0x2]]
    %s2337 = sld [smem:[#allocation12 + $0x382]]
    %s2338 = sadd.f32 %s2336, %s2337
    %v2339 = vstv %s2338
    %v2340 = vadd.f32 %v2334, %v2339
    %v2341 = vadd.f32 %v2335, %v2339
    %v2342 = vrot.slane %v2158, 6
    %v2343 = vrot.slane %v2342, 4
    %v2344 = vrot.slane %v2159, 6
    %v2345 = vrot.slane %v2344, 4
    %v2348 = vsub.f32 %v2340, %v2343
    %v2349 = vsub.f32 %v2341, %v2345
    %v2350 = vmul.f32 %v2348, %v2348
    %v2351 = vmul.f32 %v2349, %v2349
    %v2352 = vadd.f32 %v2288, %v2350
    %v2353 = vadd.f32 %v2289, %v2351
    %s2354 = sld [smem:[#allocation9 + $0x3]]
    %v2355 = vstv %s2354
    %v2356 = vmul.f32 %v2355, %v2166
    %v2357 = vmul.f32 %v2355, %v2167
    %s2358 = sld [smem:[#allocation9 + $0x83]]
    %v2359 = vstv %s2358
    %v2360 = vmul.f32 %v2359, %v2166
    %v2361 = vmul.f32 %v2359, %v2167
    %v2364 = vrot.slane %v2360, 5
    %v2365 = vrot.slane %v2364, 4
    %v2366 = vrot.slane %v2361, 5
    %v2367 = vrot.slane %v2366, 4
    %v2370 = vadd.f32 %v2356, %v2365
    %v2371 = vadd.f32 %v2357, %v2367
    %s2372 = sld [smem:[#allocation9 + $0x103]]
    %v2373 = vstv %s2372
    %v2374 = vmul.f32 %v2373, %v2166
    %v2375 = vmul.f32 %v2373, %v2167
    %v2378 = vrot.slane %v2374, 6
    %v2379 = vrot.slane %v2378, 4
    %v2380 = vrot.slane %v2375, 6
    %v2381 = vrot.slane %v2380, 4
    %v2384 = vadd.f32 %v2370, %v2379
    %v2385 = vadd.f32 %v2371, %v2381
    %s2386 = sld [smem:[#allocation9 + $0x183]]
    %v2387 = vstv %s2386
    %v2388 = vmul.f32 %v2387, %v2166
    %v2389 = vmul.f32 %v2387, %v2167
    %v2392 = vrot.slane %v2388, 7
    %v2393 = vrot.slane %v2392, 4
    %v2394 = vrot.slane %v2389, 7
    %v2395 = vrot.slane %v2394, 4
    %v2398 = vadd.f32 %v2384, %v2393
    %v2399 = vadd.f32 %v2385, %v2395
    %s2400 = sld [smem:[#allocation10 + $0x3]]
    %s2401 = sld [smem:[#allocation12 + $0x383]]
    %s2402 = sadd.f32 %s2400, %s2401
    %v2403 = vstv %s2402
    %v2404 = vadd.f32 %v2398, %v2403
    %v2405 = vadd.f32 %v2399, %v2403
    %v2406 = vrot.slane %v2158, 7
    %v2407 = vrot.slane %v2406, 4
    %v2408 = vrot.slane %v2159, 7
    %v2409 = vrot.slane %v2408, 4
    %v2412 = vsub.f32 %v2404, %v2407
    %v2413 = vsub.f32 %v2405, %v2409
    %v2414 = vmul.f32 %v2412, %v2412
    %v2415 = vmul.f32 %v2413, %v2413
    %v2416 = vadd.f32 %v2352, %v2414
    %v2417 = vadd.f32 %v2353, %v2415
    %v2420 = vperm.slane %v2416, 0
    %v2421 = vperm.slane %v2416, 4
    %v2422 = vperm.slane %v2417, 0
    %v2423 = vperm.slane %v2417, 4
    %v2428 = vsel %vm377, %v2420, 0.0
    %v2429 = vsel %vm377, %v2421, 0.0
    %v2430 = vadd.f32 %v2428, %v2429
    %v2431 = vsel %vm377, %v2422, 0.0
    %v2432 = vadd.f32 %v2430, %v2431
    %v2433 = vsel %vm377, %v2423, 0.0
    %v2434 = vadd.f32 %v2432, %v2433
    %2435 = vadd.xlane.f32.xlu0 %v2434
    %v2436 = vpop.xlane.xlu0 %2435
    %v2437 = vrot.slane %v2436, 4
    %v2438 = vadd.f32 %v2436, %v2437
    %v2439 = vrot.slane %v2438, 2
    %v2440 = vadd.f32 %v2438, %v2439
    %v2441 = vrot.slane %v2440, 1
    %v2442 = vadd.f32 %v2440, %v2441
    %s2443 = vtos %v2442
    %s2444 = smul.f32 %s2443, 0.00048828125
    %v2445 = vstv %s2444
    %s2446 = scalar_lea.vmem [#allocation14], 56
    %2447 = vst [vmem:[%s2446] sm:$0xff] %v2445
    // Predicated region
    $region54: #{tpu_custom_call.1} parent=1 // pred_check
      _
    $region55: #{tpu_custom_call.1} parent=1 // pred_check_branch
      %2449 = sbr.rel (0) target = $region57
    $region56: #{tpu_custom_call.1} parent=1 // pred_region
      %2451 = vsyncadd [#allocation4], 0
      %s2452 = sshll.u32 [#allocation14], 4
      %s2453 = int_to_ptr.vmem [resolvable:$true] %s2452
      %s2454 = sshll.u32 %s7, 4
      %s2455 = int_to_ptr.hbm [resolvable:$true] %s2454
      %2460 = dma.vmem_to_hbm [thread:$0]  %s2453, 1024, %s2455, [#allocation4], 128, 128, 8
    $region57: #{tpu_custom_call.1} parent=1 // pred_fallthru
      _
    // Predicated region
    $region58: #{tpu_custom_call.1} parent=1 // pred_check
      _
    $region59: #{tpu_custom_call.1} parent=1 // pred_check_branch
      %2462 = sbr.rel (0) target = $region61
    $region60: #{tpu_custom_call.1} parent=1 // pred_region
      %2464 = dma.done [#allocation4], 1024
    $region61: #{tpu_custom_call.1} parent=1 // pred_fallthru
      _
    %2465 = vsyncpa [#allocation3], 1
    %2466 = vsyncpa [#allocation4], 1
    %2467 = vsyncpa [#allocation5], 1
    %2468 = vsyncpa [#allocation8], 1
    %2469 = vsyncpa [#allocation11], 1
    %2470 = vsyncpa [#allocation6], 1

</llo_original>
